<compile_context>
chip_gen: v7x
topology: tpu7x:2x2x1
jax: 0.10.0
libtpu: 0.0.40
codegen_flags: <defaults>
</compile_context>

<pallas_src>
import functools

import jax
import jax.numpy as jnp
from jax.experimental import pallas as pl
from jax.experimental.pallas import tpu as pltpu

BN_EPS = 1e-5
K1, K2, K3 = 24, 16, 8  # Conv1d kernel sizes from Encoder.__init__


def _round_up(n, m):
    return (n + m - 1) // m * m


def _vmem_capacity_bytes():
    """Per-core VMEM capacity; conservative fallback if the query is unavailable."""
    try:
        cap = getattr(pltpu.get_tpu_info(), "vmem_capacity_bytes", None)
        if cap:
            return int(cap)
    except Exception:
        pass
    return 64 * 1024 * 1024  # v7x per-TensorCore VMEM (smallest current gen)


def _estimate_vmem_bytes(tb, L1p, L2p, L3p, KC1, C1, C2, ZD, NCP, csize):
    """Rough per-grid-step VMEM footprint (double-buffered I/O + resident weights
    + live im2col intermediates) used to size tb / vmem_limit_bytes."""
    f32 = 4
    stream = 2 * tb * L1p * KC1 * csize                       # x1col block (2 bufs)
    outblk = 2 * tb * NCP * f32                               # output block (2 bufs)
    weights = 2 * csize * (KC1 * C1 + K2 * C1 * C2 + K3 * C2 * ZD
                           + ZD * 256 + 256 * 128 + 128 * NCP)
    biases = 2 * f32 * (C1 + C2 + ZD + 256 + 128 + NCP)
    live = (tb * L1p * C1 * (f32 + csize)                     # h1 acc + cast copy
            + tb * L2p * K2 * C1 * csize                      # h1c
            + tb * L2p * C2 * (f32 + csize)                   # h2 acc + cast copy
            + tb * L3p * K3 * C2 * csize                      # h2c
            + tb * L3p * ZD * f32)                            # h3
    return stream + outblk + weights + biases + live


def _simclr_kernel(x1_ref,
                   w1_ref, b1_ref, w2_ref, b2_ref, w3_ref, b3_ref,
                   fc1w_ref, fc1s_ref, fc2w_ref, fc2s_ref, fc3w_ref, fc3b_ref,
                   out_ref,
                   *, Lout3, L2p, L3p, compute_dtype):
    TB, L1p, KC1 = x1_ref.shape
    C1 = w1_ref.shape[-1]
    C2 = w2_ref.shape[-1]
    ZD = w3_ref.shape[-1]

    # ---- conv1: wrapper-side im2col -> one (TB*L1p, K1*Cin) x (K1*Cin, C1) matmul
    x1 = x1_ref[...].reshape(TB * L1p, KC1).astype(compute_dtype)
    h1 = jnp.dot(x1, w1_ref[...], preferred_element_type=jnp.float32)
    h1 = jnp.maximum(h1 + b1_ref[...], 0.0)              # bias + ReLU (Dropout = id)
    h1 = h1.astype(compute_dtype).reshape(TB, L1p, C1)

    # ---- conv2: in-kernel im2col -> one (TB*L2p, K2*C1) x (K2*C1, C2) matmul ----
    # TODO(synk): the tap concats spend XLU/ld-st slots on sublane rotations; if a
    #             bundle dump shows them (not vmatmul) saturated, reuse the 8
    #             distinct (k mod 8) rotations or stage h1/h2 through a VMEM scratch
    #             and build the im2col with VMEM->VMEM copies instead.  If spills
    #             appear at large tb, chunk this over length with lax.fori_loop.
    h1c = jnp.concatenate([h1[:, k:k + L2p, :] for k in range(K2)], axis=-1)
    h1c = h1c.reshape(TB * L2p, K2 * C1)
    h2 = jnp.dot(h1c, w2_ref[...], preferred_element_type=jnp.float32)
    h2 = jnp.maximum(h2 + b2_ref[...], 0.0)
    h2 = h2.astype(compute_dtype).reshape(TB, L2p, C2)

    # ---- conv3: in-kernel im2col -> one (TB*L3p, K3*C2) x (K3*C2, ZD) matmul ----
    h2c = jnp.concatenate([h2[:, k:k + L3p, :] for k in range(K3)], axis=-1)
    h2c = h2c.reshape(TB * L3p, K3 * C2)
    h3 = jnp.dot(h2c, w3_ref[...], preferred_element_type=jnp.float32)
    h3 = jnp.maximum(h3 + b3_ref[...], 0.0).reshape(TB, L3p, ZD)

    # Zero padded length positions (>= Lout3) so the global max ignores them
    # (valid ReLU outputs are >= 0, so a 0 tail never changes the max).
    if L3p != Lout3:
        pos = jax.lax.broadcasted_iota(jnp.int32, (L3p, ZD), 0)
        h3 = jnp.where((pos < Lout3)[None, :, :], h3, 0.0)

    # AdaptiveMaxPool1d(1) + squeeze(-1): global max over the length axis.
    z = jnp.max(h3, axis=1)                               # (TB, ZD) f32

    # ---- ClassificationHead (mlp=True); BN + fc bias folded into weights/shift ----
    h = jnp.dot(z.astype(compute_dtype), fc1w_ref[...],
                preferred_element_type=jnp.float32)
    h = jnp.maximum(h + fc1s_ref[...], 0.0)
    h = jnp.dot(h.astype(compute_dtype), fc2w_ref[...],
                preferred_element_type=jnp.float32)
    h = jnp.maximum(h + fc2s_ref[...], 0.0)
    out = jnp.dot(h.astype(compute_dtype), fc3w_ref[...],
                  preferred_element_type=jnp.float32) + fc3b_ref[...]

    out_ref[...] = out                                     # lane-dense (TB, 128) store


def simclr_forward(x_ncl, p, *, compute_dtype=jnp.float32, tb=128,
                   allow_input_fusion=False):
    """x_ncl: (B, C_in, L) float32 (PyTorch NCL). Returns (B, num_cls) f32 logits.

    compute_dtype=jnp.bfloat16 enables bf16 MXU operands with f32 accumulation on
    ALL generations (v5e included: its MXU natively takes bf16; all elementwise
    math already runs on the f32 accumulators)."""
    B, Cin, L = x_ncl.shape
    C1 = p['conv1_w'].shape[0]
    C2 = p['conv2_w'].shape[0]
    ZD = p['conv3_w'].shape[0]
    num_cls = p['fc3_w'].shape[0]

    Lout1 = L - K1 + 1
    Lout2 = Lout1 - K2 + 1
    Lout3 = Lout2 - K3 + 1
    assert Lout3 >= 1, "input length too short for the three valid convolutions"

    # 8-aligned padded lengths, chosen bottom-up so every in-kernel tap slice is
    # in-bounds and padded garbage never reaches a valid (unmasked) output.
    L3p = _round_up(Lout3, 8)
    L2p = _round_up(max(Lout2, L3p + K3 - 1), 8)
    L1p = _round_up(max(Lout1, L2p + K2 - 1), 8)
    assert L1p >= L2p + K2 - 1 and L2p >= L3p + K3 - 1, \
        "length padding must keep all in-kernel tap slices in-bounds"
    assert L1p % 8 == 0 and L2p % 8 == 0 and L3p % 8 == 0

    KC1 = K1 * Cin                        # conv1 contraction; NOT padded to 128
    NCP = _round_up(num_cls, 128)         # lane-dense output block
    csize = jnp.dtype(compute_dtype).itemsize

    # ---- per-generation batch-tile / VMEM budgeting ----
    capacity = _vmem_capacity_bytes()
    budget = int(0.75 * capacity)         # ~48 MB on v7x, ~96 MB on v5e/v6e

    B8 = _round_up(B, 8)
    tb = max(8, min(_round_up(tb, 8), B8))
    if B8 >= 16:                          # prefer >= 2 grid steps (v7x has 2 TCs)
        tb = min(tb, _round_up(B8 // 2, 8))
    while tb > 8 and _estimate_vmem_bytes(tb, L1p, L2p, L3p, KC1, C1, C2, ZD,
                                          NCP, csize) > budget:
        tb = max(8, _round_up(tb // 2, 8))
    assert tb % 8 == 0
    # TODO(synk): if the footprint still exceeds budget at tb=8 (very long L),
    #             chunk conv2/conv3 over length inside the kernel.

    est = _estimate_vmem_bytes(tb, L1p, L2p, L3p, KC1, C1, C2, ZD, NCP, csize)
    vmem_limit = int(min(max(32 * 1024 * 1024, 2 * est), int(0.8 * capacity)))

    B_pad = _round_up(B, tb)
    num_steps = B_pad // tb

    # ---- wrapper-side glue: layout conversion + parameter repacking (no hoisting
    #      of input-dependent compute; only constant parameter algebra / im2col) ----
    x_blc = jnp.transpose(x_ncl, (0, 2, 1))                           # (B, L, Cin)
    taps = [x_blc[:, k:k + Lout1, :] for k in range(K1)]
    x1col = jnp.concatenate(taps, axis=-1)                            # (B, Lout1, K1*Cin)
    x1col = jnp.pad(x1col, ((0, B_pad - B), (0, L1p - Lout1), (0, 0)))
    x1col = x1col.astype(compute_dtype)
    # TODO(synk): for large B*L the wrapper-side im2col amplifies input HBM traffic
    #             ~K1x; move it in-kernel (stream the raw (tb, L, Cin) block) once
    #             the kernel is HBM-bound, or pass allow_input_fusion=True so XLA
    #             may fuse the concat/pad into this call's input.

    # Conv weights -> im2col layout (K*Cin, Cout); conv1 contraction left at KC1=96
    # so operand/weight stay consistently unpadded.
    w1col = jnp.transpose(p['conv1_w'], (2, 1, 0)).reshape(KC1, C1)
    w2col = jnp.transpose(p['conv2_w'], (2, 1, 0)).reshape(K2 * C1, C2)
    w3col = jnp.transpose(p['conv3_w'], (2, 1, 0)).reshape(K3 * C2, ZD)

    # Fold eval-mode BatchNorm1d (+ Linear bias) into the fc weights and a shift.
    bn1_scale = p['bn1_gamma'] * jax.lax.rsqrt(p['bn1_var'] + BN_EPS)
    bn1_shift = p['bn1_beta'] - p['bn1_mean'] * bn1_scale
    bn2_scale = p['bn2_gamma'] * jax.lax.rsqrt(p['bn2_var'] + BN_EPS)
    bn2_shift = p['bn2_beta'] - p['bn2_mean'] * bn2_scale

    fc1w = (p['fc1_w'].T * bn1_scale[None, :])                        # (ZD, 256)
    fc1s = (bn1_shift + p['fc1_b'] * bn1_scale)[None, :]              # (1, 256)
    fc2w = (p['fc2_w'].T * bn2_scale[None, :])                        # (256, 128)
    fc2s = (bn2_shift + p['fc2_b'] * bn2_scale)[None, :]              # (1, 128)
    fc3w = jnp.pad(p['fc3_w'].T, ((0, 0), (0, NCP - num_cls)))        # (128, NCP)
    fc3b = jnp.pad(p['fc3_b'], (0, NCP - num_cls))[None, :]           # (1, NCP)

    b1 = p['conv1_b'][None, :]
    b2 = p['conv2_b'][None, :]
    b3 = p['conv3_b'][None, :]

    def cast_w(w):
        return w.astype(compute_dtype)

    args = (x1col,
            cast_w(w1col), b1, cast_w(w2col), b2, cast_w(w3col), b3,
            cast_w(fc1w), fc1s, cast_w(fc2w), fc2s, cast_w(fc3w), fc3b)

    def resident_spec(a):
        nd = a.ndim
        return pl.BlockSpec(a.shape, lambda b, _nd=nd: (0,) * _nd)    # VMEM-resident

    x_idx = lambda b: (b, 0, 0)
    if num_steps >= 4:
        # Third buffer hides occasional exposed DMA on long grids; negligible VMEM.
        x_spec = pl.BlockSpec((tb, L1p, KC1), x_idx, pipeline_mode=pl.Buffered(3))
    else:
        x_spec = pl.BlockSpec((tb, L1p, KC1), x_idx)

    in_specs = [x_spec] + [resident_spec(a) for a in args[1:]]

    kernel = functools.partial(_simclr_kernel,
                               Lout3=Lout3, L2p=L2p, L3p=L3p,
                               compute_dtype=compute_dtype)

    cp_kwargs = dict(dimension_semantics=("parallel",),
                     vmem_limit_bytes=vmem_limit)
    if allow_input_fusion:
        cp_kwargs["allow_input_fusion"] = [True] + [False] * (len(args) - 1)

    out = pl.pallas_call(
        kernel,
        out_shape=jax.ShapeDtypeStruct((B_pad, NCP), jnp.float32),
        grid_spec=pltpu.PrefetchScalarGridSpec(
            num_scalar_prefetch=0,
            grid=(num_steps,),
            in_specs=in_specs,
            out_specs=pl.BlockSpec((tb, NCP), lambda b: (b, 0)),
        ),
        compiler_params=pltpu.CompilerParams(**cp_kwargs),
    )(*args)

    return out[:B, :num_cls]


# ---------------- deterministic parameter init (synthetic) ----------------
def init_params(key, input_channels, z_dim, num_cls):
    ks = jax.random.split(key, 12)

    def unif(k, shape, fan_in):
        bound = 1.0 / jnp.sqrt(jnp.float32(fan_in))
        return jax.random.uniform(k, shape, jnp.float32, -bound, bound)

    return {
        'conv1_w': unif(ks[0], (32, input_channels, K1), input_channels * K1),
        'conv1_b': unif(ks[1], (32,), input_channels * K1),
        'conv2_w': unif(ks[2], (64, 32, K2), 32 * K2),
        'conv2_b': unif(ks[3], (64,), 32 * K2),
        'conv3_w': unif(ks[4], (z_dim, 64, K3), 64 * K3),
        'conv3_b': unif(ks[5], (z_dim,), 64 * K3),
        'fc1_w': unif(ks[6], (256, z_dim), z_dim),
        'fc1_b': unif(ks[7], (256,), z_dim),
        'bn1_gamma': jnp.ones((256,), jnp.float32),
        'bn1_beta': jnp.zeros((256,), jnp.float32),
        'bn1_mean': jnp.zeros((256,), jnp.float32),
        'bn1_var': jnp.ones((256,), jnp.float32),
        'fc2_w': unif(ks[8], (128, 256), 256),
        'fc2_b': unif(ks[9], (128,), 256),
        'bn2_gamma': jnp.ones((128,), jnp.float32),
        'bn2_beta': jnp.zeros((128,), jnp.float32),
        'bn2_mean': jnp.zeros((128,), jnp.float32),
        'bn2_var': jnp.ones((128,), jnp.float32),
        'fc3_w': unif(ks[10], (num_cls, 128), 128),
        'fc3_b': unif(ks[11], (num_cls,), 128),
    }


# ---------------- pure-JAX reference (eval-mode semantics) ----------------
def ref_forward(x, p):
    def conv1d(x, w, b):
        y = jax.lax.conv_general_dilated(
            x, w, window_strides=(1,), padding='VALID',
            dimension_numbers=('NCH', 'OIH', 'NCH'))
        return y + b[None, :, None]

    def bn(x, g, b, m, v):
        return (x - m) / jnp.sqrt(v + BN_EPS) * g + b

    h = jax.nn.relu(conv1d(x, p['conv1_w'], p['conv1_b']))
    h = jax.nn.relu(conv1d(h, p['conv2_w'], p['conv2_b']))
    h = jax.nn.relu(conv1d(h, p['conv3_w'], p['conv3_b']))
    z = jnp.max(h, axis=-1)
    h = z @ p['fc1_w'].T + p['fc1_b']
    h = jax.nn.relu(bn(h, p['bn1_gamma'], p['bn1_beta'], p['bn1_mean'], p['bn1_var']))
    h = h @ p['fc2_w'].T + p['fc2_b']
    h = jax.nn.relu(bn(h, p['bn2_gamma'], p['bn2_beta'], p['bn2_mean'], p['bn2_var']))
    return h @ p['fc3_w'].T + p['fc3_b']


if __name__ == "__main__":
    B, C_IN, L = 2, 4, 64          # L must exceed 24+16+8-3 = 45 for valid convs
    Z_DIM, NUM_CLS = 32, 5

    key = jax.random.PRNGKey(0)
    k_x, k_p = jax.random.split(key)
    x = jax.random.normal(k_x, (B, C_IN, L), jnp.float32)
    params = init_params(k_p, C_IN, Z_DIM, NUM_CLS)

    ref = ref_forward(x, params)

    # f32 MXU operands: exact eval-mode semantics.
    out = jax.block_until_ready(jax.jit(simclr_forward)(x, params))
    assert out.shape == (B, NUM_CLS)
    assert jnp.allclose(out, ref, atol=1e-4, rtol=1e-4), (out, ref)

    # bf16 MXU operands with f32 accumulation (all generations); looser tolerance.
    # TODO(synk): compare against a bf16-operand reference for a tighter check.
    fwd_bf16 = jax.jit(functools.partial(simclr_forward, compute_dtype=jnp.bfloat16))
    out_bf16 = jax.block_until_ready(fwd_bf16(x, params))
    assert out_bf16.shape == (B, NUM_CLS)
    assert jnp.allclose(out_bf16, ref, atol=1e-1, rtol=1e-1), (out_bf16, ref)

    print("KERNEL_OK")
</pallas_src>

<mosaic_0001>
module attributes {stable_mosaic.version = 11 : i64} {
  func.func @_simclr_kernel(%arg0: i32, %arg1: memref<8x48x96xf32, #tpu.memory_space<vmem>>, %arg2: memref<96x32xf32, #tpu.memory_space<vmem>>, %arg3: memref<1x32xf32, #tpu.memory_space<vmem>>, %arg4: memref<512x64xf32, #tpu.memory_space<vmem>>, %arg5: memref<1x64xf32, #tpu.memory_space<vmem>>, %arg6: memref<512x32xf32, #tpu.memory_space<vmem>>, %arg7: memref<1x32xf32, #tpu.memory_space<vmem>>, %arg8: memref<32x256xf32, #tpu.memory_space<vmem>>, %arg9: memref<1x256xf32, #tpu.memory_space<vmem>>, %arg10: memref<256x128xf32, #tpu.memory_space<vmem>>, %arg11: memref<1x128xf32, #tpu.memory_space<vmem>>, %arg12: memref<128x128xf32, #tpu.memory_space<vmem>>, %arg13: memref<1x128xf32, #tpu.memory_space<vmem>>, %arg14: memref<8x128xf32, #tpu.memory_space<vmem>>) attributes {dimension_semantics = [#tpu.dimension_semantics<parallel>], iteration_bounds = array<i64: 1>, scalar_prefetch = 0 : i64, scratch_operands = 0 : i64, tpu.core_type = #tpu.core_type<tc>, window_params = [{transform_indices = @transform_0, window_bounds = array<i64: 8, 48, 96>}, {pipeline_mode = #tpu.pipeline_mode<synchronous>, transform_indices = @transform_1, window_bounds = array<i64: 96, 32>}, {pipeline_mode = #tpu.pipeline_mode<synchronous>, transform_indices = @transform_2, window_bounds = array<i64: 1, 32>}, {pipeline_mode = #tpu.pipeline_mode<synchronous>, transform_indices = @transform_3, window_bounds = array<i64: 512, 64>}, {pipeline_mode = #tpu.pipeline_mode<synchronous>, transform_indices = @transform_4, window_bounds = array<i64: 1, 64>}, {pipeline_mode = #tpu.pipeline_mode<synchronous>, transform_indices = @transform_5, window_bounds = array<i64: 512, 32>}, {pipeline_mode = #tpu.pipeline_mode<synchronous>, transform_indices = @transform_6, window_bounds = array<i64: 1, 32>}, {pipeline_mode = #tpu.pipeline_mode<synchronous>, transform_indices = @transform_7, window_bounds = array<i64: 32, 256>}, {pipeline_mode = #tpu.pipeline_mode<synchronous>, transform_indices = @transform_8, window_bounds = array<i64: 1, 256>}, {pipeline_mode = #tpu.pipeline_mode<synchronous>, transform_indices = @transform_9, window_bounds = array<i64: 256, 128>}, {pipeline_mode = #tpu.pipeline_mode<synchronous>, transform_indices = @transform_10, window_bounds = array<i64: 1, 128>}, {pipeline_mode = #tpu.pipeline_mode<synchronous>, transform_indices = @transform_11, window_bounds = array<i64: 128, 128>}, {pipeline_mode = #tpu.pipeline_mode<synchronous>, transform_indices = @transform_12, window_bounds = array<i64: 1, 128>}, {transform_indices = @transform_13, window_bounds = array<i64: 8, 128>}]} {
    %c0 = arith.constant 0 : index
    %c0_0 = arith.constant 0 : index
    %c0_1 = arith.constant 0 : index
    %0 = vector.load %arg1[%c0, %c0_0, %c0_1] : memref<8x48x96xf32, #tpu.memory_space<vmem>>, vector<8x48x96xf32>
    %1 = vector.shape_cast %0 : vector<8x48x96xf32> to vector<384x96xf32>
    %c0_2 = arith.constant 0 : index
    %c0_3 = arith.constant 0 : index
    %2 = vector.load %arg2[%c0_2, %c0_3] : memref<96x32xf32, #tpu.memory_space<vmem>>, vector<96x32xf32>
    %cst = arith.constant dense<0.000000e+00> : vector<384x32xf32>
    %3 = tpu.matmul %1, %2, %cst {dimension_numbers = #tpu.dot_dimension_numbers<[1], [0], [0], [1], [0, 0, 1, 1], [], []>} : vector<384x96xf32>, vector<96x32xf32>, vector<384x32xf32> -> vector<384x32xf32>
    %c0_4 = arith.constant 0 : index
    %c0_5 = arith.constant 0 : index
    %4 = vector.load %arg3[%c0_4, %c0_5] : memref<1x32xf32, #tpu.memory_space<vmem>>, vector<1x32xf32>
    %5 = vector.broadcast %4 : vector<1x32xf32> to vector<384x32xf32>
    %6 = arith.addf %3, %5 : vector<384x32xf32>
    %cst_6 = arith.constant 0.000000e+00 : f32
    %7 = vector.broadcast %cst_6 : f32 to vector<384x32xf32>
    %8 = arith.maximumf %6, %7 : vector<384x32xf32>
    %9 = vector.shape_cast %8 : vector<384x32xf32> to vector<8x48x32xf32>
    %10 = vector.extract_strided_slice %9 {offsets = [0, 0, 0], sizes = [8, 32, 32], strides = [1, 1, 1]} : vector<8x48x32xf32> to vector<8x32x32xf32>
    %11 = vector.extract_strided_slice %9 {offsets = [0, 1, 0], sizes = [8, 32, 32], strides = [1, 1, 1]} : vector<8x48x32xf32> to vector<8x32x32xf32>
    %12 = vector.extract_strided_slice %9 {offsets = [0, 2, 0], sizes = [8, 32, 32], strides = [1, 1, 1]} : vector<8x48x32xf32> to vector<8x32x32xf32>
    %13 = vector.extract_strided_slice %9 {offsets = [0, 3, 0], sizes = [8, 32, 32], strides = [1, 1, 1]} : vector<8x48x32xf32> to vector<8x32x32xf32>
    %14 = vector.extract_strided_slice %9 {offsets = [0, 4, 0], sizes = [8, 32, 32], strides = [1, 1, 1]} : vector<8x48x32xf32> to vector<8x32x32xf32>
    %15 = vector.extract_strided_slice %9 {offsets = [0, 5, 0], sizes = [8, 32, 32], strides = [1, 1, 1]} : vector<8x48x32xf32> to vector<8x32x32xf32>
    %16 = vector.extract_strided_slice %9 {offsets = [0, 6, 0], sizes = [8, 32, 32], strides = [1, 1, 1]} : vector<8x48x32xf32> to vector<8x32x32xf32>
    %17 = vector.extract_strided_slice %9 {offsets = [0, 7, 0], sizes = [8, 32, 32], strides = [1, 1, 1]} : vector<8x48x32xf32> to vector<8x32x32xf32>
    %18 = vector.extract_strided_slice %9 {offsets = [0, 8, 0], sizes = [8, 32, 32], strides = [1, 1, 1]} : vector<8x48x32xf32> to vector<8x32x32xf32>
    %19 = vector.extract_strided_slice %9 {offsets = [0, 9, 0], sizes = [8, 32, 32], strides = [1, 1, 1]} : vector<8x48x32xf32> to vector<8x32x32xf32>
    %20 = vector.extract_strided_slice %9 {offsets = [0, 10, 0], sizes = [8, 32, 32], strides = [1, 1, 1]} : vector<8x48x32xf32> to vector<8x32x32xf32>
    %21 = vector.extract_strided_slice %9 {offsets = [0, 11, 0], sizes = [8, 32, 32], strides = [1, 1, 1]} : vector<8x48x32xf32> to vector<8x32x32xf32>
    %22 = vector.extract_strided_slice %9 {offsets = [0, 12, 0], sizes = [8, 32, 32], strides = [1, 1, 1]} : vector<8x48x32xf32> to vector<8x32x32xf32>
    %23 = vector.extract_strided_slice %9 {offsets = [0, 13, 0], sizes = [8, 32, 32], strides = [1, 1, 1]} : vector<8x48x32xf32> to vector<8x32x32xf32>
    %24 = vector.extract_strided_slice %9 {offsets = [0, 14, 0], sizes = [8, 32, 32], strides = [1, 1, 1]} : vector<8x48x32xf32> to vector<8x32x32xf32>
    %25 = vector.extract_strided_slice %9 {offsets = [0, 15, 0], sizes = [8, 32, 32], strides = [1, 1, 1]} : vector<8x48x32xf32> to vector<8x32x32xf32>
    %26 = tpu.concatenate %10, %11, %12, %13, %14, %15, %16, %17, %18, %19, %20, %21, %22, %23, %24, %25 in 2 : vector<8x32x32xf32>, vector<8x32x32xf32>, vector<8x32x32xf32>, vector<8x32x32xf32>, vector<8x32x32xf32>, vector<8x32x32xf32>, vector<8x32x32xf32>, vector<8x32x32xf32>, vector<8x32x32xf32>, vector<8x32x32xf32>, vector<8x32x32xf32>, vector<8x32x32xf32>, vector<8x32x32xf32>, vector<8x32x32xf32>, vector<8x32x32xf32>, vector<8x32x32xf32> -> vector<8x32x512xf32>
    %27 = vector.shape_cast %26 : vector<8x32x512xf32> to vector<256x512xf32>
    %c0_7 = arith.constant 0 : index
    %c0_8 = arith.constant 0 : index
    %28 = vector.load %arg4[%c0_7, %c0_8] : memref<512x64xf32, #tpu.memory_space<vmem>>, vector<512x64xf32>
    %cst_9 = arith.constant dense<0.000000e+00> : vector<256x64xf32>
    %29 = tpu.matmul %27, %28, %cst_9 {dimension_numbers = #tpu.dot_dimension_numbers<[1], [0], [0], [1], [0, 0, 1, 1], [], []>} : vector<256x512xf32>, vector<512x64xf32>, vector<256x64xf32> -> vector<256x64xf32>
    %c0_10 = arith.constant 0 : index
    %c0_11 = arith.constant 0 : index
    %30 = vector.load %arg5[%c0_10, %c0_11] : memref<1x64xf32, #tpu.memory_space<vmem>>, vector<1x64xf32>
    %31 = vector.broadcast %30 : vector<1x64xf32> to vector<256x64xf32>
    %32 = arith.addf %29, %31 : vector<256x64xf32>
    %cst_12 = arith.constant 0.000000e+00 : f32
    %33 = vector.broadcast %cst_12 : f32 to vector<256x64xf32>
    %34 = arith.maximumf %32, %33 : vector<256x64xf32>
    %35 = vector.shape_cast %34 : vector<256x64xf32> to vector<8x32x64xf32>
    %36 = vector.extract_strided_slice %35 {offsets = [0, 0, 0], sizes = [8, 24, 64], strides = [1, 1, 1]} : vector<8x32x64xf32> to vector<8x24x64xf32>
    %37 = vector.extract_strided_slice %35 {offsets = [0, 1, 0], sizes = [8, 24, 64], strides = [1, 1, 1]} : vector<8x32x64xf32> to vector<8x24x64xf32>
    %38 = vector.extract_strided_slice %35 {offsets = [0, 2, 0], sizes = [8, 24, 64], strides = [1, 1, 1]} : vector<8x32x64xf32> to vector<8x24x64xf32>
    %39 = vector.extract_strided_slice %35 {offsets = [0, 3, 0], sizes = [8, 24, 64], strides = [1, 1, 1]} : vector<8x32x64xf32> to vector<8x24x64xf32>
    %40 = vector.extract_strided_slice %35 {offsets = [0, 4, 0], sizes = [8, 24, 64], strides = [1, 1, 1]} : vector<8x32x64xf32> to vector<8x24x64xf32>
    %41 = vector.extract_strided_slice %35 {offsets = [0, 5, 0], sizes = [8, 24, 64], strides = [1, 1, 1]} : vector<8x32x64xf32> to vector<8x24x64xf32>
    %42 = vector.extract_strided_slice %35 {offsets = [0, 6, 0], sizes = [8, 24, 64], strides = [1, 1, 1]} : vector<8x32x64xf32> to vector<8x24x64xf32>
    %43 = vector.extract_strided_slice %35 {offsets = [0, 7, 0], sizes = [8, 24, 64], strides = [1, 1, 1]} : vector<8x32x64xf32> to vector<8x24x64xf32>
    %44 = tpu.concatenate %36, %37, %38, %39, %40, %41, %42, %43 in 2 : vector<8x24x64xf32>, vector<8x24x64xf32>, vector<8x24x64xf32>, vector<8x24x64xf32>, vector<8x24x64xf32>, vector<8x24x64xf32>, vector<8x24x64xf32>, vector<8x24x64xf32> -> vector<8x24x512xf32>
    %45 = vector.shape_cast %44 : vector<8x24x512xf32> to vector<192x512xf32>
    %c0_13 = arith.constant 0 : index
    %c0_14 = arith.constant 0 : index
    %46 = vector.load %arg6[%c0_13, %c0_14] : memref<512x32xf32, #tpu.memory_space<vmem>>, vector<512x32xf32>
    %cst_15 = arith.constant dense<0.000000e+00> : vector<192x32xf32>
    %47 = tpu.matmul %45, %46, %cst_15 {dimension_numbers = #tpu.dot_dimension_numbers<[1], [0], [0], [1], [0, 0, 1, 1], [], []>} : vector<192x512xf32>, vector<512x32xf32>, vector<192x32xf32> -> vector<192x32xf32>
    %c0_16 = arith.constant 0 : index
    %c0_17 = arith.constant 0 : index
    %48 = vector.load %arg7[%c0_16, %c0_17] : memref<1x32xf32, #tpu.memory_space<vmem>>, vector<1x32xf32>
    %49 = vector.broadcast %48 : vector<1x32xf32> to vector<192x32xf32>
    %50 = arith.addf %47, %49 : vector<192x32xf32>
    %cst_18 = arith.constant 0.000000e+00 : f32
    %51 = vector.broadcast %cst_18 : f32 to vector<192x32xf32>
    %52 = arith.maximumf %50, %51 : vector<192x32xf32>
    %53 = vector.shape_cast %52 : vector<192x32xf32> to vector<8x24x32xf32>
    %54 = tpu.iota {dimensions = array<i32: 0>} : vector<24x32xi32>
    %c19_i32 = arith.constant 19 : i32
    %55 = vector.broadcast %c19_i32 : i32 to vector<24x32xi32>
    %56 = arith.cmpi slt, %54, %55 : vector<24x32xi32>
    %57 = vector.shape_cast %56 : vector<24x32xi1> to vector<1x24x32xi1>
    %cst_19 = arith.constant 0.000000e+00 : f32
    %58 = vector.shape_cast %57 : vector<1x24x32xi1> to vector<1x24x32xi1>
    %59 = vector.broadcast %58 : vector<1x24x32xi1> to vector<8x24x32xi1>
    %60 = vector.broadcast %cst_19 : f32 to vector<8x24x32xf32>
    %61 = arith.select %59, %53, %60 : vector<8x24x32xi1>, vector<8x24x32xf32>
    %cst_20 = arith.constant dense<0xFF800000> : vector<8x32xf32>
    %62 = vector.multi_reduction <maximumf>, %61, %cst_20 [1] : vector<8x24x32xf32> to vector<8x32xf32>
    %c0_21 = arith.constant 0 : index
    %c0_22 = arith.constant 0 : index
    %63 = vector.load %arg8[%c0_21, %c0_22] : memref<32x256xf32, #tpu.memory_space<vmem>>, vector<32x256xf32>
    %cst_23 = arith.constant dense<0.000000e+00> : vector<8x256xf32>
    %64 = tpu.matmul %62, %63, %cst_23 {dimension_numbers = #tpu.dot_dimension_numbers<[1], [0], [0], [1], [0, 0, 1, 1], [], []>} : vector<8x32xf32>, vector<32x256xf32>, vector<8x256xf32> -> vector<8x256xf32>
    %c0_24 = arith.constant 0 : index
    %c0_25 = arith.constant 0 : index
    %65 = vector.load %arg9[%c0_24, %c0_25] : memref<1x256xf32, #tpu.memory_space<vmem>>, vector<1x256xf32>
    %66 = vector.broadcast %65 : vector<1x256xf32> to vector<8x256xf32>
    %67 = arith.addf %64, %66 : vector<8x256xf32>
    %cst_26 = arith.constant 0.000000e+00 : f32
    %68 = vector.broadcast %cst_26 : f32 to vector<8x256xf32>
    %69 = arith.maximumf %67, %68 : vector<8x256xf32>
    %c0_27 = arith.constant 0 : index
    %c0_28 = arith.constant 0 : index
    %70 = vector.load %arg10[%c0_27, %c0_28] : memref<256x128xf32, #tpu.memory_space<vmem>>, vector<256x128xf32>
    %cst_29 = arith.constant dense<0.000000e+00> : vector<8x128xf32>
    %71 = tpu.matmul %69, %70, %cst_29 {dimension_numbers = #tpu.dot_dimension_numbers<[1], [0], [0], [1], [0, 0, 1, 1], [], []>} : vector<8x256xf32>, vector<256x128xf32>, vector<8x128xf32> -> vector<8x128xf32>
    %c0_30 = arith.constant 0 : index
    %c0_31 = arith.constant 0 : index
    %72 = vector.load %arg11[%c0_30, %c0_31] : memref<1x128xf32, #tpu.memory_space<vmem>>, vector<1x128xf32>
    %73 = vector.broadcast %72 : vector<1x128xf32> to vector<8x128xf32>
    %74 = arith.addf %71, %73 : vector<8x128xf32>
    %cst_32 = arith.constant 0.000000e+00 : f32
    %75 = vector.broadcast %cst_32 : f32 to vector<8x128xf32>
    %76 = arith.maximumf %74, %75 : vector<8x128xf32>
    %c0_33 = arith.constant 0 : index
    %c0_34 = arith.constant 0 : index
    %77 = vector.load %arg12[%c0_33, %c0_34] : memref<128x128xf32, #tpu.memory_space<vmem>>, vector<128x128xf32>
    %cst_35 = arith.constant dense<0.000000e+00> : vector<8x128xf32>
    %78 = tpu.matmul %76, %77, %cst_35 {dimension_numbers = #tpu.dot_dimension_numbers<[1], [0], [0], [1], [0, 0, 1, 1], [], []>} : vector<8x128xf32>, vector<128x128xf32>, vector<8x128xf32> -> vector<8x128xf32>
    %c0_36 = arith.constant 0 : index
    %c0_37 = arith.constant 0 : index
    %79 = vector.load %arg13[%c0_36, %c0_37] : memref<1x128xf32, #tpu.memory_space<vmem>>, vector<1x128xf32>
    %80 = vector.broadcast %79 : vector<1x128xf32> to vector<8x128xf32>
    %81 = arith.addf %78, %80 : vector<8x128xf32>
    %c0_38 = arith.constant 0 : index
    %c0_39 = arith.constant 0 : index
    %82 = vector.load %arg14[%c0_38, %c0_39] : memref<8x128xf32, #tpu.memory_space<vmem>>, vector<8x128xf32>
    tpu.vector_store %arg14[%c0_38, %c0_39], %81 {strides = array<i32>} : memref<8x128xf32, #tpu.memory_space<vmem>>, vector<8x128xf32>,
    return
  }
  func.func @transform_0(%arg0: i32) -> (i32, i32, i32) {
    %c0_i32 = arith.constant 0 : i32
    %c0_i32_0 = arith.constant 0 : i32
    %c0_i32_1 = arith.constant 0 : i32
    return %arg0, %c0_i32, %c0_i32_0 : i32, i32, i32
  }
  func.func @transform_1(%arg0: i32) -> (i32, i32) {
    %c0_i32 = arith.constant 0 : i32
    %c0_i32_0 = arith.constant 0 : i32
    %c0_i32_1 = arith.constant 0 : i32
    return %c0_i32, %c0_i32_0 : i32, i32
  }
  func.func @transform_2(%arg0: i32) -> (i32, i32) {
    %c0_i32 = arith.constant 0 : i32
    %c0_i32_0 = arith.constant 0 : i32
    %c0_i32_1 = arith.constant 0 : i32
    return %c0_i32, %c0_i32_0 : i32, i32
  }
  func.func @transform_3(%arg0: i32) -> (i32, i32) {
    %c0_i32 = arith.constant 0 : i32
    %c0_i32_0 = arith.constant 0 : i32
    %c0_i32_1 = arith.constant 0 : i32
    return %c0_i32, %c0_i32_0 : i32, i32
  }
  func.func @transform_4(%arg0: i32) -> (i32, i32) {
    %c0_i32 = arith.constant 0 : i32
    %c0_i32_0 = arith.constant 0 : i32
    %c0_i32_1 = arith.constant 0 : i32
    return %c0_i32, %c0_i32_0 : i32, i32
  }
  func.func @transform_5(%arg0: i32) -> (i32, i32) {
    %c0_i32 = arith.constant 0 : i32
    %c0_i32_0 = arith.constant 0 : i32
    %c0_i32_1 = arith.constant 0 : i32
    return %c0_i32, %c0_i32_0 : i32, i32
  }
  func.func @transform_6(%arg0: i32) -> (i32, i32) {
    %c0_i32 = arith.constant 0 : i32
    %c0_i32_0 = arith.constant 0 : i32
    %c0_i32_1 = arith.constant 0 : i32
    return %c0_i32, %c0_i32_0 : i32, i32
  }
  func.func @transform_7(%arg0: i32) -> (i32, i32) {
    %c0_i32 = arith.constant 0 : i32
    %c0_i32_0 = arith.constant 0 : i32
    %c0_i32_1 = arith.constant 0 : i32
    return %c0_i32, %c0_i32_0 : i32, i32
  }
  func.func @transform_8(%arg0: i32) -> (i32, i32) {
    %c0_i32 = arith.constant 0 : i32
    %c0_i32_0 = arith.constant 0 : i32
    %c0_i32_1 = arith.constant 0 : i32
    return %c0_i32, %c0_i32_0 : i32, i32
  }
  func.func @transform_9(%arg0: i32) -> (i32, i32) {
    %c0_i32 = arith.constant 0 : i32
    %c0_i32_0 = arith.constant 0 : i32
    %c0_i32_1 = arith.constant 0 : i32
    return %c0_i32, %c0_i32_0 : i32, i32
  }
  func.func @transform_10(%arg0: i32) -> (i32, i32) {
    %c0_i32 = arith.constant 0 : i32
    %c0_i32_0 = arith.constant 0 : i32
    %c0_i32_1 = arith.constant 0 : i32
    return %c0_i32, %c0_i32_0 : i32, i32
  }
  func.func @transform_11(%arg0: i32) -> (i32, i32) {
    %c0_i32 = arith.constant 0 : i32
    %c0_i32_0 = arith.constant 0 : i32
    %c0_i32_1 = arith.constant 0 : i32
    return %c0_i32, %c0_i32_0 : i32, i32
  }
  func.func @transform_12(%arg0: i32) -> (i32, i32) {
    %c0_i32 = arith.constant 0 : i32
    %c0_i32_0 = arith.constant 0 : i32
    %c0_i32_1 = arith.constant 0 : i32
    return %c0_i32, %c0_i32_0 : i32, i32
  }
  func.func @transform_13(%arg0: i32) -> (i32, i32) {
    %c0_i32 = arith.constant 0 : i32
    %c0_i32_0 = arith.constant 0 : i32
    return %arg0, %c0_i32 : i32, i32
  }
}

</mosaic_0001>

<llo_original>
// kernel: simclr_forward.1
$region0: #{simclr_forward.1}
  #allocation0 [shape = 'u32[]', space=smem, size = 0x4, offset = 0x4, fixed_abs, tag = 'smem constant byte address 0x4 - core index']
  #allocation1 [shape = 'u32[144,128]{1,0:T(1,128)}', space=vmem, size = 0x12000, scoped, tag = 'internal scratch']
  %s0 = inlined_call_operand.vmem [shape: f32[8,48,96], index: 0, kind: input, shape index: {}]
  %s1 = inlined_call_operand.vmem [shape: f32[96,32], index: 1, kind: input, shape index: {}]
  %s2 = inlined_call_operand.vmem [shape: f32[1,32], index: 2, kind: input, shape index: {}]
  %s3 = inlined_call_operand.vmem [shape: f32[512,64], index: 3, kind: input, shape index: {}]
  %s4 = inlined_call_operand.vmem [shape: f32[1,64], index: 4, kind: input, shape index: {}]
  %s5 = inlined_call_operand.vmem [shape: f32[512,32], index: 5, kind: input, shape index: {}]
  %s6 = inlined_call_operand.vmem [shape: f32[1,32], index: 6, kind: input, shape index: {}]
  %s7 = inlined_call_operand.vmem [shape: f32[32,256], index: 7, kind: input, shape index: {}]
  %s8 = inlined_call_operand.vmem [shape: f32[1,256], index: 8, kind: input, shape index: {}]
  %s9 = inlined_call_operand.vmem [shape: f32[256,128], index: 9, kind: input, shape index: {}]
  %s10 = inlined_call_operand.vmem [shape: f32[1,128], index: 10, kind: input, shape index: {}]
  %s11 = inlined_call_operand.vmem [shape: f32[128,128], index: 11, kind: input, shape index: {}]
  %s12 = inlined_call_operand.vmem [shape: f32[1,128], index: 12, kind: input, shape index: {}]
  %s13 = inlined_call_operand.vmem [shape: f32[8,128], index: 13, kind: output, shape index: {}]
  %s14 = sld [smem:[#allocation0]]
  $region62: #{simclr_forward.1} parent=0
    _
  %s16 = ssub.s32 1, %s14
  %s17 = scalar_select 0, %s16, %s14
  // Predicated region
  $region2: #{simclr_forward.1} parent=0 // pred_check
    _
  $region3: #{simclr_forward.1} parent=0 // pred_check_branch
    %19 = sbr.rel (0) target = $region5
  $region4: #{simclr_forward.1} parent=0 // pred_region
    _
  $region5: #{simclr_forward.1} parent=0 // pred_fallthru
    _
  // Predicated region
  $region6: #{simclr_forward.1} parent=0 // pred_check
    _
  $region7: #{simclr_forward.1} parent=0 // pred_check_branch
    %21 = sbr.rel (0) target = $region9
  $region8: #{simclr_forward.1} parent=0 // pred_region
    _
  $region9: #{simclr_forward.1} parent=0 // pred_fallthru
    _
  // Predicated region
  $region10: #{simclr_forward.1} parent=0 // pred_check
    _
  $region11: #{simclr_forward.1} parent=0 // pred_check_branch
    %23 = sbr.rel (0) target = $region13
  $region12: #{simclr_forward.1} parent=0 // pred_region
    _
  $region13: #{simclr_forward.1} parent=0 // pred_fallthru
    _
  // Predicated region
  $region14: #{simclr_forward.1} parent=0 // pred_check
    _
  $region15: #{simclr_forward.1} parent=0 // pred_check_branch
    %25 = sbr.rel (0) target = $region17
  $region16: #{simclr_forward.1} parent=0 // pred_region
    _
  $region17: #{simclr_forward.1} parent=0 // pred_fallthru
    _
  // Predicated region
  $region18: #{simclr_forward.1} parent=0 // pred_check
    _
  $region19: #{simclr_forward.1} parent=0 // pred_check_branch
    %27 = sbr.rel (0) target = $region21
  $region20: #{simclr_forward.1} parent=0 // pred_region
    _
  $region21: #{simclr_forward.1} parent=0 // pred_fallthru
    _
  // Predicated region
  $region22: #{simclr_forward.1} parent=0 // pred_check
    _
  $region23: #{simclr_forward.1} parent=0 // pred_check_branch
    %29 = sbr.rel (0) target = $region25
  $region24: #{simclr_forward.1} parent=0 // pred_region
    _
  $region25: #{simclr_forward.1} parent=0 // pred_fallthru
    _
  // Predicated region
  $region26: #{simclr_forward.1} parent=0 // pred_check
    _
  $region27: #{simclr_forward.1} parent=0 // pred_check_branch
    %31 = sbr.rel (0) target = $region29
  $region28: #{simclr_forward.1} parent=0 // pred_region
    _
  $region29: #{simclr_forward.1} parent=0 // pred_fallthru
    _
  // Predicated region
  $region30: #{simclr_forward.1} parent=0 // pred_check
    _
  $region31: #{simclr_forward.1} parent=0 // pred_check_branch
    %33 = sbr.rel (0) target = $region33
  $region32: #{simclr_forward.1} parent=0 // pred_region
    _
  $region33: #{simclr_forward.1} parent=0 // pred_fallthru
    _
  // Predicated region
  $region34: #{simclr_forward.1} parent=0 // pred_check
    _
  $region35: #{simclr_forward.1} parent=0 // pred_check_branch
    %35 = sbr.rel (0) target = $region37
  $region36: #{simclr_forward.1} parent=0 // pred_region
    _
  $region37: #{simclr_forward.1} parent=0 // pred_fallthru
    _
  // Predicated region
  $region38: #{simclr_forward.1} parent=0 // pred_check
    _
  $region39: #{simclr_forward.1} parent=0 // pred_check_branch
    %37 = sbr.rel (0) target = $region41
  $region40: #{simclr_forward.1} parent=0 // pred_region
    _
  $region41: #{simclr_forward.1} parent=0 // pred_fallthru
    _
  // Predicated region
  $region42: #{simclr_forward.1} parent=0 // pred_check
    _
  $region43: #{simclr_forward.1} parent=0 // pred_check_branch
    %39 = sbr.rel (0) target = $region45
  $region44: #{simclr_forward.1} parent=0 // pred_region
    _
  $region45: #{simclr_forward.1} parent=0 // pred_fallthru
    _
  // Predicated region
  $region46: #{simclr_forward.1} parent=0 // pred_check
    _
  $region47: #{simclr_forward.1} parent=0 // pred_check_branch
    %41 = sbr.rel (0) target = $region49
  $region48: #{simclr_forward.1} parent=0 // pred_region
    _
  $region49: #{simclr_forward.1} parent=0 // pred_fallthru
    _
  // Predicated region
  $region50: #{simclr_forward.1} parent=0 // pred_check
    _
  $region51: #{simclr_forward.1} parent=0 // pred_check_branch
    %43 = sbr.rel (0) target = $region53
  $region52: #{simclr_forward.1} parent=0 // pred_region
    _
  $region53: #{simclr_forward.1} parent=0 // pred_fallthru
    _
  %v44 = vld [vmem:[%s0] sm:$0xff]
  %v45 = vld [vmem:[%s0 + $0x8] sm:$0xff]
  %v46 = vld [vmem:[%s0 + $0x10] sm:$0xff]
  %v47 = vld [vmem:[%s0 + $0x18] sm:$0xff]
  %v48 = vld [vmem:[%s0 + $0x20] sm:$0xff]
  %v49 = vld [vmem:[%s0 + $0x28] sm:$0xff]
  %v50 = vld [vmem:[%s0 + $0x30] sm:$0xff]
  %v51 = vld [vmem:[%s0 + $0x38] sm:$0xff]
  %v52 = vld [vmem:[%s0 + $0x40] sm:$0xff]
  %v53 = vld [vmem:[%s0 + $0x48] sm:$0xff]
  %v54 = vld [vmem:[%s0 + $0x50] sm:$0xff]
  %v55 = vld [vmem:[%s0 + $0x58] sm:$0xff]
  %v56 = vld [vmem:[%s0 + $0x60] sm:$0xff]
  %v57 = vld [vmem:[%s0 + $0x68] sm:$0xff]
  %v58 = vld [vmem:[%s0 + $0x70] sm:$0xff]
  %v59 = vld [vmem:[%s0 + $0x78] sm:$0xff]
  %v60 = vld [vmem:[%s0 + $0x80] sm:$0xff]
  %v61 = vld [vmem:[%s0 + $0x88] sm:$0xff]
  %v62 = vld [vmem:[%s0 + $0x90] sm:$0xff]
  %v63 = vld [vmem:[%s0 + $0x98] sm:$0xff]
  %v64 = vld [vmem:[%s0 + $0xa0] sm:$0xff]
  %v65 = vld [vmem:[%s0 + $0xa8] sm:$0xff]
  %v66 = vld [vmem:[%s0 + $0xb0] sm:$0xff]
  %v67 = vld [vmem:[%s0 + $0xb8] sm:$0xff]
  %v68 = vld [vmem:[%s0 + $0xc0] sm:$0xff]
  %v69 = vld [vmem:[%s0 + $0xc8] sm:$0xff]
  %v70 = vld [vmem:[%s0 + $0xd0] sm:$0xff]
  %v71 = vld [vmem:[%s0 + $0xd8] sm:$0xff]
  %v72 = vld [vmem:[%s0 + $0xe0] sm:$0xff]
  %v73 = vld [vmem:[%s0 + $0xe8] sm:$0xff]
  %v74 = vld [vmem:[%s0 + $0xf0] sm:$0xff]
  %v75 = vld [vmem:[%s0 + $0xf8] sm:$0xff]
  %v76 = vld [vmem:[%s0 + $0x100] sm:$0xff]
  %v77 = vld [vmem:[%s0 + $0x108] sm:$0xff]
  %v78 = vld [vmem:[%s0 + $0x110] sm:$0xff]
  %v79 = vld [vmem:[%s0 + $0x118] sm:$0xff]
  %v80 = vld [vmem:[%s0 + $0x120] sm:$0xff]
  %v81 = vld [vmem:[%s0 + $0x128] sm:$0xff]
  %v82 = vld [vmem:[%s0 + $0x130] sm:$0xff]
  %v83 = vld [vmem:[%s0 + $0x138] sm:$0xff]
  %v84 = vld [vmem:[%s0 + $0x140] sm:$0xff]
  %v85 = vld [vmem:[%s0 + $0x148] sm:$0xff]
  %v86 = vld [vmem:[%s0 + $0x150] sm:$0xff]
  %v87 = vld [vmem:[%s0 + $0x158] sm:$0xff]
  %v88 = vld [vmem:[%s0 + $0x160] sm:$0xff]
  %v89 = vld [vmem:[%s0 + $0x168] sm:$0xff]
  %v90 = vld [vmem:[%s0 + $0x170] sm:$0xff]
  %v91 = vld [vmem:[%s0 + $0x178] sm:$0xff]
  %v92 = vld [vmem:[%s1] sm:$0xff]
  %v93 = vld [vmem:[%s1 + $0x8] sm:$0xff]
  %v94 = vld [vmem:[%s1 + $0x10] sm:$0xff]
  %v95 = vld [vmem:[%s1 + $0x18] sm:$0xff]
  %v96 = vld [vmem:[%s1 + $0x20] sm:$0xff]
  %v97 = vld [vmem:[%s1 + $0x28] sm:$0xff]
  %v98 = vld [vmem:[%s1 + $0x30] sm:$0xff]
  %v99 = vld [vmem:[%s1 + $0x38] sm:$0xff]
  %v100 = vld [vmem:[%s1 + $0x40] sm:$0xff]
  %v101 = vld [vmem:[%s1 + $0x48] sm:$0xff]
  %v102 = vld [vmem:[%s1 + $0x50] sm:$0xff]
  %v103 = vld [vmem:[%s1 + $0x58] sm:$0xff]
  %v104 = vld [vmem:[%s2] sm:$0x1]
  %v106 = vlaneseq
  %v107 = vshrl.u32 %v106, 7
  %v108 = vsub.s32 0, %v107
  %v109 = vrot.slane %v104, %v108
  %vm111 = vcmask 785408
  %v113 = vsel %vm111, %v44, 0
  %v116 = vsel %vm111, %v45, 0
  %v119 = vsel %vm111, %v46, 0
  %v122 = vsel %vm111, %v47, 0
  %v125 = vsel %vm111, %v48, 0
  %v128 = vsel %vm111, %v49, 0
  %v131 = vsel %vm111, %v50, 0
  %v134 = vsel %vm111, %v51, 0
  %v137 = vsel %vm111, %v52, 0
  %v140 = vsel %vm111, %v53, 0
  %v143 = vsel %vm111, %v54, 0
  %v146 = vsel %vm111, %v55, 0
  %v149 = vsel %vm111, %v56, 0
  %v152 = vsel %vm111, %v57, 0
  %v155 = vsel %vm111, %v58, 0
  %v158 = vsel %vm111, %v59, 0
  %v161 = vsel %vm111, %v60, 0
  %v164 = vsel %vm111, %v61, 0
  %v167 = vsel %vm111, %v62, 0
  %v170 = vsel %vm111, %v63, 0
  %v173 = vsel %vm111, %v64, 0
  %v176 = vsel %vm111, %v65, 0
  %v179 = vsel %vm111, %v66, 0
  %v182 = vsel %vm111, %v67, 0
  %v185 = vsel %vm111, %v68, 0
  %v188 = vsel %vm111, %v69, 0
  %v191 = vsel %vm111, %v70, 0
  %v194 = vsel %vm111, %v71, 0
  %v197 = vsel %vm111, %v72, 0
  %v200 = vsel %vm111, %v73, 0
  %v203 = vsel %vm111, %v74, 0
  %v206 = vsel %vm111, %v75, 0
  %v209 = vsel %vm111, %v76, 0
  %v212 = vsel %vm111, %v77, 0
  %v215 = vsel %vm111, %v78, 0
  %v218 = vsel %vm111, %v79, 0
  %v221 = vsel %vm111, %v80, 0
  %v224 = vsel %vm111, %v81, 0
  %v227 = vsel %vm111, %v82, 0
  %v230 = vsel %vm111, %v83, 0
  %v233 = vsel %vm111, %v84, 0
  %v236 = vsel %vm111, %v85, 0
  %v239 = vsel %vm111, %v86, 0
  %v242 = vsel %vm111, %v87, 0
  %v245 = vsel %vm111, %v88, 0
  %v248 = vsel %vm111, %v89, 0
  %v251 = vsel %vm111, %v90, 0
  %v254 = vsel %vm111, %v91, 0
  %256 = vmatprep.subr.mxu0 0.0
  %257 = vmatpush1.msra.mxu0 %v92
  %258 = vmatprep.subr.mxu0 0.0
  %259 = vmatpush1.msra.mxu0 %v93
  %260 = vmatprep.subr.mxu0 0.0
  %261 = vmatpush1.msra.mxu0 %v94
  %262 = vmatprep.subr.mxu0 0.0
  %263 = vmatpush1.msra.mxu0 %v95
  %264 = vmatprep.subr.mxu0 0.0
  %265 = vmatpush1.msra.mxu0 %v96
  %266 = vmatprep.subr.mxu0 0.0
  %267 = vmatpush1.msra.mxu0 %v97
  %268 = vmatprep.subr.mxu0 0.0
  %269 = vmatpush1.msra.mxu0 %v98
  %270 = vmatprep.subr.mxu0 0.0
  %271 = vmatpush1.msra.mxu0 %v99
  %272 = vmatprep.subr.mxu0 0.0
  %273 = vmatpush1.msra.mxu0 %v100
  %274 = vmatprep.subr.mxu0 0.0
  %275 = vmatpush1.msra.mxu0 %v101
  %276 = vmatprep.subr.mxu0 0.0
  %277 = vmatpush1.msra.mxu0 %v102
  %278 = vmatprep.subr.mxu0 0.0
  %279 = vmatpush1.msra.mxu0 %v103
  %280 = vmatprep.subr.mxu0 0.0
  %281 = vmatpush1.msra.mxu0 0.0
  %282 = vmatprep.subr.mxu0 0.0
  %283 = vmatpush1.msra.mxu0 0.0
  %284 = vmatprep.subr.mxu0 0.0
  %285 = vmatpush1.msra.mxu0 0.0
  %286 = vmatprep.subr.mxu0 0.0
  %287 = vmatpush1.msra.mxu0 0.0
  %288 = vmatprep.subr.mxu0 0.0
  %289 = vmatpush1.msra.mxu0 0.0
  %290 = vmatprep.subr.mxu0 0.0
  %291 = vmatpush1.msra.mxu0 0.0
  %292 = vmatprep.subr.mxu0 0.0
  %293 = vmatpush1.msra.mxu0 0.0
  %294 = vmatprep.subr.mxu0 0.0
  %295 = vmatpush1.msra.mxu0 0.0
  %296 = vmatprep.subr.mxu0 0.0
  %297 = vmatpush1.msra.mxu0 0.0
  %298 = vmatprep.subr.mxu0 0.0
  %299 = vmatpush1.msra.mxu0 0.0
  %300 = vmatprep.subr.mxu0 0.0
  %301 = vmatpush1.msra.mxu0 0.0
  %302 = vmatprep.subr.mxu0 0.0
  %303 = vmatpush1.msra.mxu0 0.0
  %304 = vmatprep.subr.mxu0 0.0
  %305 = vmatpush1.msra.mxu0 0.0
  %306 = vmatprep.subr.mxu0 0.0
  %307 = vmatpush1.msra.mxu0 0.0
  %308 = vmatprep.subr.mxu0 0.0
  %309 = vmatpush1.msra.mxu0 0.0
  %310 = vmatprep.subr.mxu0 0.0
  %311 = vmatpush1.msra.mxu0 0.0
  %312 = vmatprep.subr.mxu0 0.0
  %313 = vmatpush1.msra.mxu0 0.0
  %314 = vmatprep.subr.mxu0 0.0
  %315 = vmatpush1.msra.mxu0 0.0
  %316 = vmatprep.subr.mxu0 0.0
  %317 = vmatpush1.msra.mxu0 0.0
  %318 = vmatprep.subr.mxu0 0.0
  %319 = vmatpush1.msra.mxu0 0.0
  %320 = vmatprep.mubr.f32.mxu0 0.0
  %321 = vmatmul.mubr.f32.gmra.mrb[0].mxu0 %v113
  %v322 = vpop.f32.mrb[0].mxu0
  %v323 = vadd.f32 %v109, %v322
  %v324 = vpop.f32.mrb[0].mxu0
  %325 = vmatprep.mubr.f32.mxu0 0.0
  %326 = vmatmul.mubr.f32.gmra.mrb[0].mxu0 %v116
  %v327 = vpop.f32.mrb[0].mxu0
  %v328 = vadd.f32 %v109, %v327
  %v329 = vpop.f32.mrb[0].mxu0
  %330 = vmatprep.mubr.f32.mxu0 0.0
  %331 = vmatmul.mubr.f32.gmra.mrb[0].mxu0 %v119
  %v332 = vpop.f32.mrb[0].mxu0
  %v333 = vadd.f32 %v109, %v332
  %v334 = vpop.f32.mrb[0].mxu0
  %335 = vmatprep.mubr.f32.mxu0 0.0
  %336 = vmatmul.mubr.f32.gmra.mrb[0].mxu0 %v122
  %v337 = vpop.f32.mrb[0].mxu0
  %v338 = vadd.f32 %v109, %v337
  %v339 = vpop.f32.mrb[0].mxu0
  %340 = vmatprep.mubr.f32.mxu0 0.0
  %341 = vmatmul.mubr.f32.gmra.mrb[0].mxu0 %v125
  %v342 = vpop.f32.mrb[0].mxu0
  %v343 = vadd.f32 %v109, %v342
  %v344 = vpop.f32.mrb[0].mxu0
  %345 = vmatprep.mubr.f32.mxu0 0.0
  %346 = vmatmul.mubr.f32.gmra.mrb[0].mxu0 %v128
  %v347 = vpop.f32.mrb[0].mxu0
  %v348 = vadd.f32 %v109, %v347
  %v349 = vpop.f32.mrb[0].mxu0
  %350 = vmatprep.mubr.f32.mxu0 0.0
  %351 = vmatmul.mubr.f32.gmra.mrb[0].mxu0 %v131
  %v352 = vpop.f32.mrb[0].mxu0
  %v353 = vadd.f32 %v109, %v352
  %v354 = vpop.f32.mrb[0].mxu0
  %355 = vmatprep.mubr.f32.mxu0 0.0
  %356 = vmatmul.mubr.f32.gmra.mrb[0].mxu0 %v134
  %v357 = vpop.f32.mrb[0].mxu0
  %v358 = vadd.f32 %v109, %v357
  %v359 = vpop.f32.mrb[0].mxu0
  %360 = vmatprep.mubr.f32.mxu0 0.0
  %361 = vmatmul.mubr.f32.gmra.mrb[0].mxu0 %v137
  %v362 = vpop.f32.mrb[0].mxu0
  %v363 = vadd.f32 %v109, %v362
  %v364 = vpop.f32.mrb[0].mxu0
  %365 = vmatprep.mubr.f32.mxu0 0.0
  %366 = vmatmul.mubr.f32.gmra.mrb[0].mxu0 %v140
  %v367 = vpop.f32.mrb[0].mxu0
  %v368 = vadd.f32 %v109, %v367
  %v369 = vpop.f32.mrb[0].mxu0
  %370 = vmatprep.mubr.f32.mxu0 0.0
  %371 = vmatmul.mubr.f32.gmra.mrb[0].mxu0 %v143
  %v372 = vpop.f32.mrb[0].mxu0
  %v373 = vadd.f32 %v109, %v372
  %v374 = vpop.f32.mrb[0].mxu0
  %375 = vmatprep.mubr.f32.mxu0 0.0
  %376 = vmatmul.mubr.f32.gmra.mrb[0].mxu0 %v146
  %v377 = vpop.f32.mrb[0].mxu0
  %v378 = vadd.f32 %v109, %v377
  %v379 = vpop.f32.mrb[0].mxu0
  %380 = vmatprep.mubr.f32.mxu0 0.0
  %381 = vmatmul.mubr.f32.gmra.mrb[0].mxu0 %v149
  %v382 = vpop.f32.mrb[0].mxu0
  %v383 = vadd.f32 %v109, %v382
  %v384 = vpop.f32.mrb[0].mxu0
  %385 = vmatprep.mubr.f32.mxu0 0.0
  %386 = vmatmul.mubr.f32.gmra.mrb[0].mxu0 %v152
  %v387 = vpop.f32.mrb[0].mxu0
  %v388 = vadd.f32 %v109, %v387
  %v389 = vpop.f32.mrb[0].mxu0
  %390 = vmatprep.mubr.f32.mxu0 0.0
  %391 = vmatmul.mubr.f32.gmra.mrb[0].mxu0 %v155
  %v392 = vpop.f32.mrb[0].mxu0
  %v393 = vadd.f32 %v109, %v392
  %v394 = vpop.f32.mrb[0].mxu0
  %395 = vmatprep.mubr.f32.mxu0 0.0
  %396 = vmatmul.mubr.f32.gmra.mrb[0].mxu0 %v158
  %v397 = vpop.f32.mrb[0].mxu0
  %v398 = vadd.f32 %v109, %v397
  %v399 = vpop.f32.mrb[0].mxu0
  %400 = vmatprep.mubr.f32.mxu0 0.0
  %401 = vmatmul.mubr.f32.gmra.mrb[0].mxu0 %v161
  %v402 = vpop.f32.mrb[0].mxu0
  %v403 = vadd.f32 %v109, %v402
  %v404 = vpop.f32.mrb[0].mxu0
  %405 = vmatprep.mubr.f32.mxu0 0.0
  %406 = vmatmul.mubr.f32.gmra.mrb[0].mxu0 %v164
  %v407 = vpop.f32.mrb[0].mxu0
  %v408 = vadd.f32 %v109, %v407
  %v409 = vpop.f32.mrb[0].mxu0
  %410 = vmatprep.mubr.f32.mxu0 0.0
  %411 = vmatmul.mubr.f32.gmra.mrb[0].mxu0 %v167
  %v412 = vpop.f32.mrb[0].mxu0
  %v413 = vadd.f32 %v109, %v412
  %v414 = vpop.f32.mrb[0].mxu0
  %415 = vmatprep.mubr.f32.mxu0 0.0
  %416 = vmatmul.mubr.f32.gmra.mrb[0].mxu0 %v170
  %v417 = vpop.f32.mrb[0].mxu0
  %v418 = vadd.f32 %v109, %v417
  %v419 = vpop.f32.mrb[0].mxu0
  %420 = vmatprep.mubr.f32.mxu0 0.0
  %421 = vmatmul.mubr.f32.gmra.mrb[0].mxu0 %v173
  %v422 = vpop.f32.mrb[0].mxu0
  %v423 = vadd.f32 %v109, %v422
  %v424 = vpop.f32.mrb[0].mxu0
  %425 = vmatprep.mubr.f32.mxu0 0.0
  %426 = vmatmul.mubr.f32.gmra.mrb[0].mxu0 %v176
  %v427 = vpop.f32.mrb[0].mxu0
  %v428 = vadd.f32 %v109, %v427
  %v429 = vpop.f32.mrb[0].mxu0
  %430 = vmatprep.mubr.f32.mxu0 0.0
  %431 = vmatmul.mubr.f32.gmra.mrb[0].mxu0 %v179
  %v432 = vpop.f32.mrb[0].mxu0
  %v433 = vadd.f32 %v109, %v432
  %v434 = vpop.f32.mrb[0].mxu0
  %435 = vmatprep.mubr.f32.mxu0 0.0
  %436 = vmatmul.mubr.f32.gmra.mrb[0].mxu0 %v182
  %v437 = vpop.f32.mrb[0].mxu0
  %v438 = vadd.f32 %v109, %v437
  %v439 = vpop.f32.mrb[0].mxu0
  %440 = vmatprep.mubr.f32.mxu0 0.0
  %441 = vmatmul.mubr.f32.gmra.mrb[0].mxu0 %v185
  %v442 = vpop.f32.mrb[0].mxu0
  %v443 = vadd.f32 %v109, %v442
  %v444 = vpop.f32.mrb[0].mxu0
  %445 = vmatprep.mubr.f32.mxu0 0.0
  %446 = vmatmul.mubr.f32.gmra.mrb[0].mxu0 %v188
  %v447 = vpop.f32.mrb[0].mxu0
  %v448 = vadd.f32 %v109, %v447
  %v449 = vpop.f32.mrb[0].mxu0
  %450 = vmatprep.mubr.f32.mxu0 0.0
  %451 = vmatmul.mubr.f32.gmra.mrb[0].mxu0 %v191
  %v452 = vpop.f32.mrb[0].mxu0
  %v453 = vadd.f32 %v109, %v452
  %v454 = vpop.f32.mrb[0].mxu0
  %455 = vmatprep.mubr.f32.mxu0 0.0
  %456 = vmatmul.mubr.f32.gmra.mrb[0].mxu0 %v194
  %v457 = vpop.f32.mrb[0].mxu0
  %v458 = vadd.f32 %v109, %v457
  %v459 = vpop.f32.mrb[0].mxu0
  %460 = vmatprep.mubr.f32.mxu0 0.0
  %461 = vmatmul.mubr.f32.gmra.mrb[0].mxu0 %v197
  %v462 = vpop.f32.mrb[0].mxu0
  %v463 = vadd.f32 %v109, %v462
  %v464 = vpop.f32.mrb[0].mxu0
  %465 = vmatprep.mubr.f32.mxu0 0.0
  %466 = vmatmul.mubr.f32.gmra.mrb[0].mxu0 %v200
  %v467 = vpop.f32.mrb[0].mxu0
  %v468 = vadd.f32 %v109, %v467
  %v469 = vpop.f32.mrb[0].mxu0
  %470 = vmatprep.mubr.f32.mxu0 0.0
  %471 = vmatmul.mubr.f32.gmra.mrb[0].mxu0 %v203
  %v472 = vpop.f32.mrb[0].mxu0
  %v473 = vadd.f32 %v109, %v472
  %v474 = vpop.f32.mrb[0].mxu0
  %475 = vmatprep.mubr.f32.mxu0 0.0
  %476 = vmatmul.mubr.f32.gmra.mrb[0].mxu0 %v206
  %v477 = vpop.f32.mrb[0].mxu0
  %v478 = vadd.f32 %v109, %v477
  %v479 = vpop.f32.mrb[0].mxu0
  %480 = vmatprep.mubr.f32.mxu0 0.0
  %481 = vmatmul.mubr.f32.gmra.mrb[0].mxu0 %v209
  %v482 = vpop.f32.mrb[0].mxu0
  %v483 = vadd.f32 %v109, %v482
  %v484 = vpop.f32.mrb[0].mxu0
  %485 = vmatprep.mubr.f32.mxu0 0.0
  %486 = vmatmul.mubr.f32.gmra.mrb[0].mxu0 %v212
  %v487 = vpop.f32.mrb[0].mxu0
  %v488 = vadd.f32 %v109, %v487
  %v489 = vpop.f32.mrb[0].mxu0
  %490 = vmatprep.mubr.f32.mxu0 0.0
  %491 = vmatmul.mubr.f32.gmra.mrb[0].mxu0 %v215
  %v492 = vpop.f32.mrb[0].mxu0
  %v493 = vadd.f32 %v109, %v492
  %v494 = vpop.f32.mrb[0].mxu0
  %495 = vmatprep.mubr.f32.mxu0 0.0
  %496 = vmatmul.mubr.f32.gmra.mrb[0].mxu0 %v218
  %v497 = vpop.f32.mrb[0].mxu0
  %v498 = vadd.f32 %v109, %v497
  %v499 = vpop.f32.mrb[0].mxu0
  %500 = vmatprep.mubr.f32.mxu0 0.0
  %501 = vmatmul.mubr.f32.gmra.mrb[0].mxu0 %v221
  %v502 = vpop.f32.mrb[0].mxu0
  %v503 = vadd.f32 %v109, %v502
  %v504 = vpop.f32.mrb[0].mxu0
  %505 = vmatprep.mubr.f32.mxu0 0.0
  %506 = vmatmul.mubr.f32.gmra.mrb[0].mxu0 %v224
  %v507 = vpop.f32.mrb[0].mxu0
  %v508 = vadd.f32 %v109, %v507
  %v509 = vpop.f32.mrb[0].mxu0
  %510 = vmatprep.mubr.f32.mxu0 0.0
  %511 = vmatmul.mubr.f32.gmra.mrb[0].mxu0 %v227
  %v512 = vpop.f32.mrb[0].mxu0
  %v513 = vadd.f32 %v109, %v512
  %v514 = vpop.f32.mrb[0].mxu0
  %515 = vmatprep.mubr.f32.mxu0 0.0
  %516 = vmatmul.mubr.f32.gmra.mrb[0].mxu0 %v230
  %v517 = vpop.f32.mrb[0].mxu0
  %v518 = vadd.f32 %v109, %v517
  %v519 = vpop.f32.mrb[0].mxu0
  %520 = vmatprep.mubr.f32.mxu0 0.0
  %521 = vmatmul.mubr.f32.gmra.mrb[0].mxu0 %v233
  %v522 = vpop.f32.mrb[0].mxu0
  %v523 = vadd.f32 %v109, %v522
  %v524 = vpop.f32.mrb[0].mxu0
  %525 = vmatprep.mubr.f32.mxu0 0.0
  %526 = vmatmul.mubr.f32.gmra.mrb[0].mxu0 %v236
  %v527 = vpop.f32.mrb[0].mxu0
  %v528 = vadd.f32 %v109, %v527
  %v529 = vpop.f32.mrb[0].mxu0
  %530 = vmatprep.mubr.f32.mxu0 0.0
  %531 = vmatmul.mubr.f32.gmra.mrb[0].mxu0 %v239
  %v532 = vpop.f32.mrb[0].mxu0
  %v533 = vadd.f32 %v109, %v532
  %v534 = vpop.f32.mrb[0].mxu0
  %535 = vmatprep.mubr.f32.mxu0 0.0
  %536 = vmatmul.mubr.f32.gmra.mrb[0].mxu0 %v242
  %v537 = vpop.f32.mrb[0].mxu0
  %v538 = vadd.f32 %v109, %v537
  %v539 = vpop.f32.mrb[0].mxu0
  %540 = vmatprep.mubr.f32.mxu0 0.0
  %541 = vmatmul.mubr.f32.gmra.mrb[0].mxu0 %v245
  %v542 = vpop.f32.mrb[0].mxu0
  %v543 = vadd.f32 %v109, %v542
  %v544 = vpop.f32.mrb[0].mxu0
  %545 = vmatprep.mubr.f32.mxu0 0.0
  %546 = vmatmul.mubr.f32.gmra.mrb[0].mxu0 %v248
  %v547 = vpop.f32.mrb[0].mxu0
  %v548 = vadd.f32 %v109, %v547
  %v549 = vpop.f32.mrb[0].mxu0
  %550 = vmatprep.mubr.f32.mxu0 0.0
  %551 = vmatmul.mubr.f32.gmra.mrb[0].mxu0 %v251
  %v552 = vpop.f32.mrb[0].mxu0
  %v553 = vadd.f32 %v109, %v552
  %v554 = vpop.f32.mrb[0].mxu0
  %555 = vmatprep.mubr.f32.mxu0 0.0
  %556 = vmatmul.mubr.f32.gmra.mrb[0].mxu0 %v254
  %v557 = vpop.f32.mrb[0].mxu0
  %v558 = vadd.f32 %v109, %v557
  %v559 = vpop.f32.mrb[0].mxu0
  %560 = vdwg.mxu0
  %v561 = vmax.f32 %v323, 0.0
  %v562 = vmax.f32 %v328, 0.0
  %v563 = vmax.f32 %v333, 0.0
  %v564 = vmax.f32 %v338, 0.0
  %v565 = vmax.f32 %v343, 0.0
  %v566 = vmax.f32 %v348, 0.0
  %v567 = vmax.f32 %v353, 0.0
  %v568 = vmax.f32 %v358, 0.0
  %v569 = vmax.f32 %v363, 0.0
  %v570 = vmax.f32 %v368, 0.0
  %v571 = vmax.f32 %v373, 0.0
  %v572 = vmax.f32 %v378, 0.0
  %v573 = vmax.f32 %v383, 0.0
  %v574 = vmax.f32 %v388, 0.0
  %v575 = vmax.f32 %v393, 0.0
  %v576 = vmax.f32 %v398, 0.0
  %v577 = vmax.f32 %v403, 0.0
  %v578 = vmax.f32 %v408, 0.0
  %v579 = vmax.f32 %v413, 0.0
  %v580 = vmax.f32 %v418, 0.0
  %v581 = vmax.f32 %v423, 0.0
  %v582 = vmax.f32 %v428, 0.0
  %v583 = vmax.f32 %v433, 0.0
  %v584 = vmax.f32 %v438, 0.0
  %v585 = vmax.f32 %v443, 0.0
  %v586 = vmax.f32 %v448, 0.0
  %v587 = vmax.f32 %v453, 0.0
  %v588 = vmax.f32 %v458, 0.0
  %v589 = vmax.f32 %v463, 0.0
  %v590 = vmax.f32 %v468, 0.0
  %v591 = vmax.f32 %v473, 0.0
  %v592 = vmax.f32 %v478, 0.0
  %v593 = vmax.f32 %v483, 0.0
  %v594 = vmax.f32 %v488, 0.0
  %v595 = vmax.f32 %v493, 0.0
  %v596 = vmax.f32 %v498, 0.0
  %v597 = vmax.f32 %v503, 0.0
  %v598 = vmax.f32 %v508, 0.0
  %v599 = vmax.f32 %v513, 0.0
  %v600 = vmax.f32 %v518, 0.0
  %v601 = vmax.f32 %v523, 0.0
  %v602 = vmax.f32 %v528, 0.0
  %v603 = vmax.f32 %v533, 0.0
  %v604 = vmax.f32 %v538, 0.0
  %v605 = vmax.f32 %v543, 0.0
  %v606 = vmax.f32 %v548, 0.0
  %v607 = vmax.f32 %v553, 0.0
  %v608 = vmax.f32 %v558, 0.0
  %vm649 = vcmask 1046528
  %v650 = vrot.slane %v561, 1
  %v651 = vrot.slane %v562, 1
  %v652 = vsel %vm649, %v650, %v651
  %v653 = vrot.slane %v563, 1
  %v654 = vsel %vm649, %v651, %v653
  %v655 = vrot.slane %v564, 1
  %v656 = vsel %vm649, %v653, %v655
  %v657 = vrot.slane %v565, 1
  %v658 = vsel %vm649, %v655, %v657
  %v659 = vrot.slane %v567, 1
  %v660 = vrot.slane %v568, 1
  %v661 = vsel %vm649, %v659, %v660
  %v662 = vrot.slane %v569, 1
  %v663 = vsel %vm649, %v660, %v662
  %v664 = vrot.slane %v570, 1
  %v665 = vsel %vm649, %v662, %v664
  %v666 = vrot.slane %v571, 1
  %v667 = vsel %vm649, %v664, %v666
  %v668 = vrot.slane %v573, 1
  %v669 = vrot.slane %v574, 1
  %v670 = vsel %vm649, %v668, %v669
  %v671 = vrot.slane %v575, 1
  %v672 = vsel %vm649, %v669, %v671
  %v673 = vrot.slane %v576, 1
  %v674 = vsel %vm649, %v671, %v673
  %v675 = vrot.slane %v577, 1
  %v676 = vsel %vm649, %v673, %v675
  %v677 = vrot.slane %v579, 1
  %v678 = vrot.slane %v580, 1
  %v679 = vsel %vm649, %v677, %v678
  %v680 = vrot.slane %v581, 1
  %v681 = vsel %vm649, %v678, %v680
  %v682 = vrot.slane %v582, 1
  %v683 = vsel %vm649, %v680, %v682
  %v684 = vrot.slane %v583, 1
  %v685 = vsel %vm649, %v682, %v684
  %v686 = vrot.slane %v585, 1
  %v687 = vrot.slane %v586, 1
  %v688 = vsel %vm649, %v686, %v687
  %v689 = vrot.slane %v587, 1
  %v690 = vsel %vm649, %v687, %v689
  %v691 = vrot.slane %v588, 1
  %v692 = vsel %vm649, %v689, %v691
  %v693 = vrot.slane %v589, 1
  %v694 = vsel %vm649, %v691, %v693
  %v695 = vrot.slane %v591, 1
  %v696 = vrot.slane %v592, 1
  %v697 = vsel %vm649, %v695, %v696
  %v698 = vrot.slane %v593, 1
  %v699 = vsel %vm649, %v696, %v698
  %v700 = vrot.slane %v594, 1
  %v701 = vsel %vm649, %v698, %v700
  %v702 = vrot.slane %v595, 1
  %v703 = vsel %vm649, %v700, %v702
  %v704 = vrot.slane %v597, 1
  %v705 = vrot.slane %v598, 1
  %v706 = vsel %vm649, %v704, %v705
  %v707 = vrot.slane %v599, 1
  %v708 = vsel %vm649, %v705, %v707
  %v709 = vrot.slane %v600, 1
  %v710 = vsel %vm649, %v707, %v709
  %v711 = vrot.slane %v601, 1
  %v712 = vsel %vm649, %v709, %v711
  %v713 = vrot.slane %v603, 1
  %v714 = vrot.slane %v604, 1
  %v715 = vsel %vm649, %v713, %v714
  %v716 = vrot.slane %v605, 1
  %v717 = vsel %vm649, %v714, %v716
  %v718 = vrot.slane %v606, 1
  %v719 = vsel %vm649, %v716, %v718
  %v720 = vrot.slane %v607, 1
  %v721 = vsel %vm649, %v718, %v720
  %722 = vrot.lane.b32.xlu0 %v652, 32
  %v723 = vpop.permute.xlu0 %722
  %724 = vrot.lane.b32.xlu0 %v654, 32
  %v725 = vpop.permute.xlu0 %724
  %726 = vrot.lane.b32.xlu0 %v656, 32
  %v727 = vpop.permute.xlu0 %726
  %728 = vrot.lane.b32.xlu0 %v658, 32
  %v729 = vpop.permute.xlu0 %728
  %730 = vrot.lane.b32.xlu0 %v661, 32
  %v731 = vpop.permute.xlu0 %730
  %732 = vrot.lane.b32.xlu0 %v663, 32
  %v733 = vpop.permute.xlu0 %732
  %734 = vrot.lane.b32.xlu0 %v665, 32
  %v735 = vpop.permute.xlu0 %734
  %736 = vrot.lane.b32.xlu0 %v667, 32
  %v737 = vpop.permute.xlu0 %736
  %738 = vrot.lane.b32.xlu0 %v670, 32
  %v739 = vpop.permute.xlu0 %738
  %740 = vrot.lane.b32.xlu0 %v672, 32
  %v741 = vpop.permute.xlu0 %740
  %742 = vrot.lane.b32.xlu0 %v674, 32
  %v743 = vpop.permute.xlu0 %742
  %744 = vrot.lane.b32.xlu0 %v676, 32
  %v745 = vpop.permute.xlu0 %744
  %746 = vrot.lane.b32.xlu0 %v679, 32
  %v747 = vpop.permute.xlu0 %746
  %748 = vrot.lane.b32.xlu0 %v681, 32
  %v749 = vpop.permute.xlu0 %748
  %750 = vrot.lane.b32.xlu0 %v683, 32
  %v751 = vpop.permute.xlu0 %750
  %752 = vrot.lane.b32.xlu0 %v685, 32
  %v753 = vpop.permute.xlu0 %752
  %754 = vrot.lane.b32.xlu0 %v688, 32
  %v755 = vpop.permute.xlu0 %754
  %756 = vrot.lane.b32.xlu0 %v690, 32
  %v757 = vpop.permute.xlu0 %756
  %758 = vrot.lane.b32.xlu0 %v692, 32
  %v759 = vpop.permute.xlu0 %758
  %760 = vrot.lane.b32.xlu0 %v694, 32
  %v761 = vpop.permute.xlu0 %760
  %762 = vrot.lane.b32.xlu0 %v697, 32
  %v763 = vpop.permute.xlu0 %762
  %764 = vrot.lane.b32.xlu0 %v699, 32
  %v765 = vpop.permute.xlu0 %764
  %766 = vrot.lane.b32.xlu0 %v701, 32
  %v767 = vpop.permute.xlu0 %766
  %768 = vrot.lane.b32.xlu0 %v703, 32
  %v769 = vpop.permute.xlu0 %768
  %770 = vrot.lane.b32.xlu0 %v706, 32
  %v771 = vpop.permute.xlu0 %770
  %772 = vrot.lane.b32.xlu0 %v708, 32
  %v773 = vpop.permute.xlu0 %772
  %774 = vrot.lane.b32.xlu0 %v710, 32
  %v775 = vpop.permute.xlu0 %774
  %776 = vrot.lane.b32.xlu0 %v712, 32
  %v777 = vpop.permute.xlu0 %776
  %778 = vrot.lane.b32.xlu0 %v715, 32
  %v779 = vpop.permute.xlu0 %778
  %780 = vrot.lane.b32.xlu0 %v717, 32
  %v781 = vpop.permute.xlu0 %780
  %782 = vrot.lane.b32.xlu0 %v719, 32
  %v783 = vpop.permute.xlu0 %782
  %784 = vrot.lane.b32.xlu0 %v721, 32
  %v785 = vpop.permute.xlu0 %784
  %vm818 = vcmask 1045504
  %v819 = vrot.slane %v561, 2
  %v820 = vrot.slane %v562, 2
  %v821 = vsel %vm818, %v819, %v820
  %v822 = vrot.slane %v563, 2
  %v823 = vsel %vm818, %v820, %v822
  %v824 = vrot.slane %v564, 2
  %v825 = vsel %vm818, %v822, %v824
  %v826 = vrot.slane %v565, 2
  %v827 = vsel %vm818, %v824, %v826
  %v828 = vrot.slane %v567, 2
  %v829 = vrot.slane %v568, 2
  %v830 = vsel %vm818, %v828, %v829
  %v831 = vrot.slane %v569, 2
  %v832 = vsel %vm818, %v829, %v831
  %v833 = vrot.slane %v570, 2
  %v834 = vsel %vm818, %v831, %v833
  %v835 = vrot.slane %v571, 2
  %v836 = vsel %vm818, %v833, %v835
  %v837 = vrot.slane %v573, 2
  %v838 = vrot.slane %v574, 2
  %v839 = vsel %vm818, %v837, %v838
  %v840 = vrot.slane %v575, 2
  %v841 = vsel %vm818, %v838, %v840
  %v842 = vrot.slane %v576, 2
  %v843 = vsel %vm818, %v840, %v842
  %v844 = vrot.slane %v577, 2
  %v845 = vsel %vm818, %v842, %v844
  %v846 = vrot.slane %v579, 2
  %v847 = vrot.slane %v580, 2
  %v848 = vsel %vm818, %v846, %v847
  %v849 = vrot.slane %v581, 2
  %v850 = vsel %vm818, %v847, %v849
  %v851 = vrot.slane %v582, 2
  %v852 = vsel %vm818, %v849, %v851
  %v853 = vrot.slane %v583, 2
  %v854 = vsel %vm818, %v851, %v853
  %v855 = vrot.slane %v585, 2
  %v856 = vrot.slane %v586, 2
  %v857 = vsel %vm818, %v855, %v856
  %v858 = vrot.slane %v587, 2
  %v859 = vsel %vm818, %v856, %v858
  %v860 = vrot.slane %v588, 2
  %v861 = vsel %vm818, %v858, %v860
  %v862 = vrot.slane %v589, 2
  %v863 = vsel %vm818, %v860, %v862
  %v864 = vrot.slane %v591, 2
  %v865 = vrot.slane %v592, 2
  %v866 = vsel %vm818, %v864, %v865
  %v867 = vrot.slane %v593, 2
  %v868 = vsel %vm818, %v865, %v867
  %v869 = vrot.slane %v594, 2
  %v870 = vsel %vm818, %v867, %v869
  %v871 = vrot.slane %v595, 2
  %v872 = vsel %vm818, %v869, %v871
  %v873 = vrot.slane %v597, 2
  %v874 = vrot.slane %v598, 2
  %v875 = vsel %vm818, %v873, %v874
  %v876 = vrot.slane %v599, 2
  %v877 = vsel %vm818, %v874, %v876
  %v878 = vrot.slane %v600, 2
  %v879 = vsel %vm818, %v876, %v878
  %v880 = vrot.slane %v601, 2
  %v881 = vsel %vm818, %v878, %v880
  %v882 = vrot.slane %v603, 2
  %v883 = vrot.slane %v604, 2
  %v884 = vsel %vm818, %v882, %v883
  %v885 = vrot.slane %v605, 2
  %v886 = vsel %vm818, %v883, %v885
  %v887 = vrot.slane %v606, 2
  %v888 = vsel %vm818, %v885, %v887
  %v889 = vrot.slane %v607, 2
  %v890 = vsel %vm818, %v887, %v889
  %891 = vrot.lane.b32.xlu0 %v821, 64
  %v892 = vpop.permute.xlu0 %891
  %893 = vrot.lane.b32.xlu0 %v823, 64
  %v894 = vpop.permute.xlu0 %893
  %895 = vrot.lane.b32.xlu0 %v825, 64
  %v896 = vpop.permute.xlu0 %895
  %897 = vrot.lane.b32.xlu0 %v827, 64
  %v898 = vpop.permute.xlu0 %897
  %899 = vrot.lane.b32.xlu0 %v830, 64
  %v900 = vpop.permute.xlu0 %899
  %901 = vrot.lane.b32.xlu0 %v832, 64
  %v902 = vpop.permute.xlu0 %901
  %903 = vrot.lane.b32.xlu0 %v834, 64
  %v904 = vpop.permute.xlu0 %903
  %905 = vrot.lane.b32.xlu0 %v836, 64
  %v906 = vpop.permute.xlu0 %905
  %907 = vrot.lane.b32.xlu0 %v839, 64
  %v908 = vpop.permute.xlu0 %907
  %909 = vrot.lane.b32.xlu0 %v841, 64
  %v910 = vpop.permute.xlu0 %909
  %911 = vrot.lane.b32.xlu0 %v843, 64
  %v912 = vpop.permute.xlu0 %911
  %913 = vrot.lane.b32.xlu0 %v845, 64
  %v914 = vpop.permute.xlu0 %913
  %915 = vrot.lane.b32.xlu0 %v848, 64
  %v916 = vpop.permute.xlu0 %915
  %917 = vrot.lane.b32.xlu0 %v850, 64
  %v918 = vpop.permute.xlu0 %917
  %919 = vrot.lane.b32.xlu0 %v852, 64
  %v920 = vpop.permute.xlu0 %919
  %921 = vrot.lane.b32.xlu0 %v854, 64
  %v922 = vpop.permute.xlu0 %921
  %923 = vrot.lane.b32.xlu0 %v857, 64
  %v924 = vpop.permute.xlu0 %923
  %925 = vrot.lane.b32.xlu0 %v859, 64
  %v926 = vpop.permute.xlu0 %925
  %927 = vrot.lane.b32.xlu0 %v861, 64
  %v928 = vpop.permute.xlu0 %927
  %929 = vrot.lane.b32.xlu0 %v863, 64
  %v930 = vpop.permute.xlu0 %929
  %931 = vrot.lane.b32.xlu0 %v866, 64
  %v932 = vpop.permute.xlu0 %931
  %933 = vrot.lane.b32.xlu0 %v868, 64
  %v934 = vpop.permute.xlu0 %933
  %935 = vrot.lane.b32.xlu0 %v870, 64
  %v936 = vpop.permute.xlu0 %935
  %937 = vrot.lane.b32.xlu0 %v872, 64
  %v938 = vpop.permute.xlu0 %937
  %939 = vrot.lane.b32.xlu0 %v875, 64
  %v940 = vpop.permute.xlu0 %939
  %941 = vrot.lane.b32.xlu0 %v877, 64
  %v942 = vpop.permute.xlu0 %941
  %943 = vrot.lane.b32.xlu0 %v879, 64
  %v944 = vpop.permute.xlu0 %943
  %945 = vrot.lane.b32.xlu0 %v881, 64
  %v946 = vpop.permute.xlu0 %945
  %947 = vrot.lane.b32.xlu0 %v884, 64
  %v948 = vpop.permute.xlu0 %947
  %949 = vrot.lane.b32.xlu0 %v886, 64
  %v950 = vpop.permute.xlu0 %949
  %951 = vrot.lane.b32.xlu0 %v888, 64
  %v952 = vpop.permute.xlu0 %951
  %953 = vrot.lane.b32.xlu0 %v890, 64
  %v954 = vpop.permute.xlu0 %953
  %vm987 = vcmask 1044480
  %v988 = vrot.slane %v561, 3
  %v989 = vrot.slane %v562, 3
  %v990 = vsel %vm987, %v988, %v989
  %v991 = vrot.slane %v563, 3
  %v992 = vsel %vm987, %v989, %v991
  %v993 = vrot.slane %v564, 3
  %v994 = vsel %vm987, %v991, %v993
  %v995 = vrot.slane %v565, 3
  %v996 = vsel %vm987, %v993, %v995
  %v997 = vrot.slane %v567, 3
  %v998 = vrot.slane %v568, 3
  %v999 = vsel %vm987, %v997, %v998
  %v1000 = vrot.slane %v569, 3
  %v1001 = vsel %vm987, %v998, %v1000
  %v1002 = vrot.slane %v570, 3
  %v1003 = vsel %vm987, %v1000, %v1002
  %v1004 = vrot.slane %v571, 3
  %v1005 = vsel %vm987, %v1002, %v1004
  %v1006 = vrot.slane %v573, 3
  %v1007 = vrot.slane %v574, 3
  %v1008 = vsel %vm987, %v1006, %v1007
  %v1009 = vrot.slane %v575, 3
  %v1010 = vsel %vm987, %v1007, %v1009
  %v1011 = vrot.slane %v576, 3
  %v1012 = vsel %vm987, %v1009, %v1011
  %v1013 = vrot.slane %v577, 3
  %v1014 = vsel %vm987, %v1011, %v1013
  %v1015 = vrot.slane %v579, 3
  %v1016 = vrot.slane %v580, 3
  %v1017 = vsel %vm987, %v1015, %v1016
  %v1018 = vrot.slane %v581, 3
  %v1019 = vsel %vm987, %v1016, %v1018
  %v1020 = vrot.slane %v582, 3
  %v1021 = vsel %vm987, %v1018, %v1020
  %v1022 = vrot.slane %v583, 3
  %v1023 = vsel %vm987, %v1020, %v1022
  %v1024 = vrot.slane %v585, 3
  %v1025 = vrot.slane %v586, 3
  %v1026 = vsel %vm987, %v1024, %v1025
  %v1027 = vrot.slane %v587, 3
  %v1028 = vsel %vm987, %v1025, %v1027
  %v1029 = vrot.slane %v588, 3
  %v1030 = vsel %vm987, %v1027, %v1029
  %v1031 = vrot.slane %v589, 3
  %v1032 = vsel %vm987, %v1029, %v1031
  %v1033 = vrot.slane %v591, 3
  %v1034 = vrot.slane %v592, 3
  %v1035 = vsel %vm987, %v1033, %v1034
  %v1036 = vrot.slane %v593, 3
  %v1037 = vsel %vm987, %v1034, %v1036
  %v1038 = vrot.slane %v594, 3
  %v1039 = vsel %vm987, %v1036, %v1038
  %v1040 = vrot.slane %v595, 3
  %v1041 = vsel %vm987, %v1038, %v1040
  %v1042 = vrot.slane %v597, 3
  %v1043 = vrot.slane %v598, 3
  %v1044 = vsel %vm987, %v1042, %v1043
  %v1045 = vrot.slane %v599, 3
  %v1046 = vsel %vm987, %v1043, %v1045
  %v1047 = vrot.slane %v600, 3
  %v1048 = vsel %vm987, %v1045, %v1047
  %v1049 = vrot.slane %v601, 3
  %v1050 = vsel %vm987, %v1047, %v1049
  %v1051 = vrot.slane %v603, 3
  %v1052 = vrot.slane %v604, 3
  %v1053 = vsel %vm987, %v1051, %v1052
  %v1054 = vrot.slane %v605, 3
  %v1055 = vsel %vm987, %v1052, %v1054
  %v1056 = vrot.slane %v606, 3
  %v1057 = vsel %vm987, %v1054, %v1056
  %v1058 = vrot.slane %v607, 3
  %v1059 = vsel %vm987, %v1056, %v1058
  %1060 = vrot.lane.b32.xlu0 %v990, 96
  %v1061 = vpop.permute.xlu0 %1060
  %1062 = vrot.lane.b32.xlu0 %v992, 96
  %v1063 = vpop.permute.xlu0 %1062
  %1064 = vrot.lane.b32.xlu0 %v994, 96
  %v1065 = vpop.permute.xlu0 %1064
  %1066 = vrot.lane.b32.xlu0 %v996, 96
  %v1067 = vpop.permute.xlu0 %1066
  %1068 = vrot.lane.b32.xlu0 %v999, 96
  %v1069 = vpop.permute.xlu0 %1068
  %1070 = vrot.lane.b32.xlu0 %v1001, 96
  %v1071 = vpop.permute.xlu0 %1070
  %1072 = vrot.lane.b32.xlu0 %v1003, 96
  %v1073 = vpop.permute.xlu0 %1072
  %1074 = vrot.lane.b32.xlu0 %v1005, 96
  %v1075 = vpop.permute.xlu0 %1074
  %1076 = vrot.lane.b32.xlu0 %v1008, 96
  %v1077 = vpop.permute.xlu0 %1076
  %1078 = vrot.lane.b32.xlu0 %v1010, 96
  %v1079 = vpop.permute.xlu0 %1078
  %1080 = vrot.lane.b32.xlu0 %v1012, 96
  %v1081 = vpop.permute.xlu0 %1080
  %1082 = vrot.lane.b32.xlu0 %v1014, 96
  %v1083 = vpop.permute.xlu0 %1082
  %1084 = vrot.lane.b32.xlu0 %v1017, 96
  %v1085 = vpop.permute.xlu0 %1084
  %1086 = vrot.lane.b32.xlu0 %v1019, 96
  %v1087 = vpop.permute.xlu0 %1086
  %1088 = vrot.lane.b32.xlu0 %v1021, 96
  %v1089 = vpop.permute.xlu0 %1088
  %1090 = vrot.lane.b32.xlu0 %v1023, 96
  %v1091 = vpop.permute.xlu0 %1090
  %1092 = vrot.lane.b32.xlu0 %v1026, 96
  %v1093 = vpop.permute.xlu0 %1092
  %1094 = vrot.lane.b32.xlu0 %v1028, 96
  %v1095 = vpop.permute.xlu0 %1094
  %1096 = vrot.lane.b32.xlu0 %v1030, 96
  %v1097 = vpop.permute.xlu0 %1096
  %1098 = vrot.lane.b32.xlu0 %v1032, 96
  %v1099 = vpop.permute.xlu0 %1098
  %1100 = vrot.lane.b32.xlu0 %v1035, 96
  %v1101 = vpop.permute.xlu0 %1100
  %1102 = vrot.lane.b32.xlu0 %v1037, 96
  %v1103 = vpop.permute.xlu0 %1102
  %1104 = vrot.lane.b32.xlu0 %v1039, 96
  %v1105 = vpop.permute.xlu0 %1104
  %1106 = vrot.lane.b32.xlu0 %v1041, 96
  %v1107 = vpop.permute.xlu0 %1106
  %1108 = vrot.lane.b32.xlu0 %v1044, 96
  %v1109 = vpop.permute.xlu0 %1108
  %1110 = vrot.lane.b32.xlu0 %v1046, 96
  %v1111 = vpop.permute.xlu0 %1110
  %1112 = vrot.lane.b32.xlu0 %v1048, 96
  %v1113 = vpop.permute.xlu0 %1112
  %1114 = vrot.lane.b32.xlu0 %v1050, 96
  %v1115 = vpop.permute.xlu0 %1114
  %1116 = vrot.lane.b32.xlu0 %v1053, 96
  %v1117 = vpop.permute.xlu0 %1116
  %1118 = vrot.lane.b32.xlu0 %v1055, 96
  %v1119 = vpop.permute.xlu0 %1118
  %1120 = vrot.lane.b32.xlu0 %v1057, 96
  %v1121 = vpop.permute.xlu0 %1120
  %1122 = vrot.lane.b32.xlu0 %v1059, 96
  %v1123 = vpop.permute.xlu0 %1122
  %vm1156 = vcmask 1043456
  %v1157 = vrot.slane %v561, 4
  %v1158 = vrot.slane %v562, 4
  %v1159 = vsel %vm1156, %v1157, %v1158
  %v1160 = vrot.slane %v563, 4
  %v1161 = vsel %vm1156, %v1158, %v1160
  %v1162 = vrot.slane %v564, 4
  %v1163 = vsel %vm1156, %v1160, %v1162
  %v1164 = vrot.slane %v565, 4
  %v1165 = vsel %vm1156, %v1162, %v1164
  %v1166 = vrot.slane %v567, 4
  %v1167 = vrot.slane %v568, 4
  %v1168 = vsel %vm1156, %v1166, %v1167
  %v1169 = vrot.slane %v569, 4
  %v1170 = vsel %vm1156, %v1167, %v1169
  %v1171 = vrot.slane %v570, 4
  %v1172 = vsel %vm1156, %v1169, %v1171
  %v1173 = vrot.slane %v571, 4
  %v1174 = vsel %vm1156, %v1171, %v1173
  %v1175 = vrot.slane %v573, 4
  %v1176 = vrot.slane %v574, 4
  %v1177 = vsel %vm1156, %v1175, %v1176
  %v1178 = vrot.slane %v575, 4
  %v1179 = vsel %vm1156, %v1176, %v1178
  %v1180 = vrot.slane %v576, 4
  %v1181 = vsel %vm1156, %v1178, %v1180
  %v1182 = vrot.slane %v577, 4
  %v1183 = vsel %vm1156, %v1180, %v1182
  %v1184 = vrot.slane %v579, 4
  %v1185 = vrot.slane %v580, 4
  %v1186 = vsel %vm1156, %v1184, %v1185
  %v1187 = vrot.slane %v581, 4
  %v1188 = vsel %vm1156, %v1185, %v1187
  %v1189 = vrot.slane %v582, 4
  %v1190 = vsel %vm1156, %v1187, %v1189
  %v1191 = vrot.slane %v583, 4
  %v1192 = vsel %vm1156, %v1189, %v1191
  %v1193 = vrot.slane %v585, 4
  %v1194 = vrot.slane %v586, 4
  %v1195 = vsel %vm1156, %v1193, %v1194
  %v1196 = vrot.slane %v587, 4
  %v1197 = vsel %vm1156, %v1194, %v1196
  %v1198 = vrot.slane %v588, 4
  %v1199 = vsel %vm1156, %v1196, %v1198
  %v1200 = vrot.slane %v589, 4
  %v1201 = vsel %vm1156, %v1198, %v1200
  %v1202 = vrot.slane %v591, 4
  %v1203 = vrot.slane %v592, 4
  %v1204 = vsel %vm1156, %v1202, %v1203
  %v1205 = vrot.slane %v593, 4
  %v1206 = vsel %vm1156, %v1203, %v1205
  %v1207 = vrot.slane %v594, 4
  %v1208 = vsel %vm1156, %v1205, %v1207
  %v1209 = vrot.slane %v595, 4
  %v1210 = vsel %vm1156, %v1207, %v1209
  %v1211 = vrot.slane %v597, 4
  %v1212 = vrot.slane %v598, 4
  %v1213 = vsel %vm1156, %v1211, %v1212
  %v1214 = vrot.slane %v599, 4
  %v1215 = vsel %vm1156, %v1212, %v1214
  %v1216 = vrot.slane %v600, 4
  %v1217 = vsel %vm1156, %v1214, %v1216
  %v1218 = vrot.slane %v601, 4
  %v1219 = vsel %vm1156, %v1216, %v1218
  %v1220 = vrot.slane %v603, 4
  %v1221 = vrot.slane %v604, 4
  %v1222 = vsel %vm1156, %v1220, %v1221
  %v1223 = vrot.slane %v605, 4
  %v1224 = vsel %vm1156, %v1221, %v1223
  %v1225 = vrot.slane %v606, 4
  %v1226 = vsel %vm1156, %v1223, %v1225
  %v1227 = vrot.slane %v607, 4
  %v1228 = vsel %vm1156, %v1225, %v1227
  %vm1261 = vcmask 1042432
  %v1262 = vrot.slane %v561, 5
  %v1263 = vrot.slane %v562, 5
  %v1264 = vsel %vm1261, %v1262, %v1263
  %v1265 = vrot.slane %v563, 5
  %v1266 = vsel %vm1261, %v1263, %v1265
  %v1267 = vrot.slane %v564, 5
  %v1268 = vsel %vm1261, %v1265, %v1267
  %v1269 = vrot.slane %v565, 5
  %v1270 = vsel %vm1261, %v1267, %v1269
  %v1271 = vrot.slane %v567, 5
  %v1272 = vrot.slane %v568, 5
  %v1273 = vsel %vm1261, %v1271, %v1272
  %v1274 = vrot.slane %v569, 5
  %v1275 = vsel %vm1261, %v1272, %v1274
  %v1276 = vrot.slane %v570, 5
  %v1277 = vsel %vm1261, %v1274, %v1276
  %v1278 = vrot.slane %v571, 5
  %v1279 = vsel %vm1261, %v1276, %v1278
  %v1280 = vrot.slane %v573, 5
  %v1281 = vrot.slane %v574, 5
  %v1282 = vsel %vm1261, %v1280, %v1281
  %v1283 = vrot.slane %v575, 5
  %v1284 = vsel %vm1261, %v1281, %v1283
  %v1285 = vrot.slane %v576, 5
  %v1286 = vsel %vm1261, %v1283, %v1285
  %v1287 = vrot.slane %v577, 5
  %v1288 = vsel %vm1261, %v1285, %v1287
  %v1289 = vrot.slane %v579, 5
  %v1290 = vrot.slane %v580, 5
  %v1291 = vsel %vm1261, %v1289, %v1290
  %v1292 = vrot.slane %v581, 5
  %v1293 = vsel %vm1261, %v1290, %v1292
  %v1294 = vrot.slane %v582, 5
  %v1295 = vsel %vm1261, %v1292, %v1294
  %v1296 = vrot.slane %v583, 5
  %v1297 = vsel %vm1261, %v1294, %v1296
  %v1298 = vrot.slane %v585, 5
  %v1299 = vrot.slane %v586, 5
  %v1300 = vsel %vm1261, %v1298, %v1299
  %v1301 = vrot.slane %v587, 5
  %v1302 = vsel %vm1261, %v1299, %v1301
  %v1303 = vrot.slane %v588, 5
  %v1304 = vsel %vm1261, %v1301, %v1303
  %v1305 = vrot.slane %v589, 5
  %v1306 = vsel %vm1261, %v1303, %v1305
  %v1307 = vrot.slane %v591, 5
  %v1308 = vrot.slane %v592, 5
  %v1309 = vsel %vm1261, %v1307, %v1308
  %v1310 = vrot.slane %v593, 5
  %v1311 = vsel %vm1261, %v1308, %v1310
  %v1312 = vrot.slane %v594, 5
  %v1313 = vsel %vm1261, %v1310, %v1312
  %v1314 = vrot.slane %v595, 5
  %v1315 = vsel %vm1261, %v1312, %v1314
  %v1316 = vrot.slane %v597, 5
  %v1317 = vrot.slane %v598, 5
  %v1318 = vsel %vm1261, %v1316, %v1317
  %v1319 = vrot.slane %v599, 5
  %v1320 = vsel %vm1261, %v1317, %v1319
  %v1321 = vrot.slane %v600, 5
  %v1322 = vsel %vm1261, %v1319, %v1321
  %v1323 = vrot.slane %v601, 5
  %v1324 = vsel %vm1261, %v1321, %v1323
  %v1325 = vrot.slane %v603, 5
  %v1326 = vrot.slane %v604, 5
  %v1327 = vsel %vm1261, %v1325, %v1326
  %v1328 = vrot.slane %v605, 5
  %v1329 = vsel %vm1261, %v1326, %v1328
  %v1330 = vrot.slane %v606, 5
  %v1331 = vsel %vm1261, %v1328, %v1330
  %v1332 = vrot.slane %v607, 5
  %v1333 = vsel %vm1261, %v1330, %v1332
  %1334 = vrot.lane.b32.xlu0 %v1264, 32
  %v1335 = vpop.permute.xlu0 %1334
  %1336 = vrot.lane.b32.xlu0 %v1266, 32
  %v1337 = vpop.permute.xlu0 %1336
  %1338 = vrot.lane.b32.xlu0 %v1268, 32
  %v1339 = vpop.permute.xlu0 %1338
  %1340 = vrot.lane.b32.xlu0 %v1270, 32
  %v1341 = vpop.permute.xlu0 %1340
  %1342 = vrot.lane.b32.xlu0 %v1273, 32
  %v1343 = vpop.permute.xlu0 %1342
  %1344 = vrot.lane.b32.xlu0 %v1275, 32
  %v1345 = vpop.permute.xlu0 %1344
  %1346 = vrot.lane.b32.xlu0 %v1277, 32
  %v1347 = vpop.permute.xlu0 %1346
  %1348 = vrot.lane.b32.xlu0 %v1279, 32
  %v1349 = vpop.permute.xlu0 %1348
  %1350 = vrot.lane.b32.xlu0 %v1282, 32
  %v1351 = vpop.permute.xlu0 %1350
  %1352 = vrot.lane.b32.xlu0 %v1284, 32
  %v1353 = vpop.permute.xlu0 %1352
  %1354 = vrot.lane.b32.xlu0 %v1286, 32
  %v1355 = vpop.permute.xlu0 %1354
  %1356 = vrot.lane.b32.xlu0 %v1288, 32
  %v1357 = vpop.permute.xlu0 %1356
  %1358 = vrot.lane.b32.xlu0 %v1291, 32
  %v1359 = vpop.permute.xlu0 %1358
  %1360 = vrot.lane.b32.xlu0 %v1293, 32
  %v1361 = vpop.permute.xlu0 %1360
  %1362 = vrot.lane.b32.xlu0 %v1295, 32
  %v1363 = vpop.permute.xlu0 %1362
  %1364 = vrot.lane.b32.xlu0 %v1297, 32
  %v1365 = vpop.permute.xlu0 %1364
  %1366 = vrot.lane.b32.xlu0 %v1300, 32
  %v1367 = vpop.permute.xlu0 %1366
  %1368 = vrot.lane.b32.xlu0 %v1302, 32
  %v1369 = vpop.permute.xlu0 %1368
  %1370 = vrot.lane.b32.xlu0 %v1304, 32
  %v1371 = vpop.permute.xlu0 %1370
  %1372 = vrot.lane.b32.xlu0 %v1306, 32
  %v1373 = vpop.permute.xlu0 %1372
  %1374 = vrot.lane.b32.xlu0 %v1309, 32
  %v1375 = vpop.permute.xlu0 %1374
  %1376 = vrot.lane.b32.xlu0 %v1311, 32
  %v1377 = vpop.permute.xlu0 %1376
  %1378 = vrot.lane.b32.xlu0 %v1313, 32
  %v1379 = vpop.permute.xlu0 %1378
  %1380 = vrot.lane.b32.xlu0 %v1315, 32
  %v1381 = vpop.permute.xlu0 %1380
  %1382 = vrot.lane.b32.xlu0 %v1318, 32
  %v1383 = vpop.permute.xlu0 %1382
  %1384 = vrot.lane.b32.xlu0 %v1320, 32
  %v1385 = vpop.permute.xlu0 %1384
  %1386 = vrot.lane.b32.xlu0 %v1322, 32
  %v1387 = vpop.permute.xlu0 %1386
  %1388 = vrot.lane.b32.xlu0 %v1324, 32
  %v1389 = vpop.permute.xlu0 %1388
  %1390 = vrot.lane.b32.xlu0 %v1327, 32
  %v1391 = vpop.permute.xlu0 %1390
  %1392 = vrot.lane.b32.xlu0 %v1329, 32
  %v1393 = vpop.permute.xlu0 %1392
  %1394 = vrot.lane.b32.xlu0 %v1331, 32
  %v1395 = vpop.permute.xlu0 %1394
  %1396 = vrot.lane.b32.xlu0 %v1333, 32
  %v1397 = vpop.permute.xlu0 %1396
  %vm1430 = vcmask 1041408
  %v1431 = vrot.slane %v561, 6
  %v1432 = vrot.slane %v562, 6
  %v1433 = vsel %vm1430, %v1431, %v1432
  %v1434 = vrot.slane %v563, 6
  %v1435 = vsel %vm1430, %v1432, %v1434
  %v1436 = vrot.slane %v564, 6
  %v1437 = vsel %vm1430, %v1434, %v1436
  %v1438 = vrot.slane %v565, 6
  %v1439 = vsel %vm1430, %v1436, %v1438
  %v1440 = vrot.slane %v567, 6
  %v1441 = vrot.slane %v568, 6
  %v1442 = vsel %vm1430, %v1440, %v1441
  %v1443 = vrot.slane %v569, 6
  %v1444 = vsel %vm1430, %v1441, %v1443
  %v1445 = vrot.slane %v570, 6
  %v1446 = vsel %vm1430, %v1443, %v1445
  %v1447 = vrot.slane %v571, 6
  %v1448 = vsel %vm1430, %v1445, %v1447
  %v1449 = vrot.slane %v573, 6
  %v1450 = vrot.slane %v574, 6
  %v1451 = vsel %vm1430, %v1449, %v1450
  %v1452 = vrot.slane %v575, 6
  %v1453 = vsel %vm1430, %v1450, %v1452
  %v1454 = vrot.slane %v576, 6
  %v1455 = vsel %vm1430, %v1452, %v1454
  %v1456 = vrot.slane %v577, 6
  %v1457 = vsel %vm1430, %v1454, %v1456
  %v1458 = vrot.slane %v579, 6
  %v1459 = vrot.slane %v580, 6
  %v1460 = vsel %vm1430, %v1458, %v1459
  %v1461 = vrot.slane %v581, 6
  %v1462 = vsel %vm1430, %v1459, %v1461
  %v1463 = vrot.slane %v582, 6
  %v1464 = vsel %vm1430, %v1461, %v1463
  %v1465 = vrot.slane %v583, 6
  %v1466 = vsel %vm1430, %v1463, %v1465
  %v1467 = vrot.slane %v585, 6
  %v1468 = vrot.slane %v586, 6
  %v1469 = vsel %vm1430, %v1467, %v1468
  %v1470 = vrot.slane %v587, 6
  %v1471 = vsel %vm1430, %v1468, %v1470
  %v1472 = vrot.slane %v588, 6
  %v1473 = vsel %vm1430, %v1470, %v1472
  %v1474 = vrot.slane %v589, 6
  %v1475 = vsel %vm1430, %v1472, %v1474
  %v1476 = vrot.slane %v591, 6
  %v1477 = vrot.slane %v592, 6
  %v1478 = vsel %vm1430, %v1476, %v1477
  %v1479 = vrot.slane %v593, 6
  %v1480 = vsel %vm1430, %v1477, %v1479
  %v1481 = vrot.slane %v594, 6
  %v1482 = vsel %vm1430, %v1479, %v1481
  %v1483 = vrot.slane %v595, 6
  %v1484 = vsel %vm1430, %v1481, %v1483
  %v1485 = vrot.slane %v597, 6
  %v1486 = vrot.slane %v598, 6
  %v1487 = vsel %vm1430, %v1485, %v1486
  %v1488 = vrot.slane %v599, 6
  %v1489 = vsel %vm1430, %v1486, %v1488
  %v1490 = vrot.slane %v600, 6
  %v1491 = vsel %vm1430, %v1488, %v1490
  %v1492 = vrot.slane %v601, 6
  %v1493 = vsel %vm1430, %v1490, %v1492
  %v1494 = vrot.slane %v603, 6
  %v1495 = vrot.slane %v604, 6
  %v1496 = vsel %vm1430, %v1494, %v1495
  %v1497 = vrot.slane %v605, 6
  %v1498 = vsel %vm1430, %v1495, %v1497
  %v1499 = vrot.slane %v606, 6
  %v1500 = vsel %vm1430, %v1497, %v1499
  %v1501 = vrot.slane %v607, 6
  %v1502 = vsel %vm1430, %v1499, %v1501
  %1503 = vrot.lane.b32.xlu0 %v1433, 64
  %v1504 = vpop.permute.xlu0 %1503
  %1505 = vrot.lane.b32.xlu0 %v1435, 64
  %v1506 = vpop.permute.xlu0 %1505
  %1507 = vrot.lane.b32.xlu0 %v1437, 64
  %v1508 = vpop.permute.xlu0 %1507
  %1509 = vrot.lane.b32.xlu0 %v1439, 64
  %v1510 = vpop.permute.xlu0 %1509
  %1511 = vrot.lane.b32.xlu0 %v1442, 64
  %v1512 = vpop.permute.xlu0 %1511
  %1513 = vrot.lane.b32.xlu0 %v1444, 64
  %v1514 = vpop.permute.xlu0 %1513
  %1515 = vrot.lane.b32.xlu0 %v1446, 64
  %v1516 = vpop.permute.xlu0 %1515
  %1517 = vrot.lane.b32.xlu0 %v1448, 64
  %v1518 = vpop.permute.xlu0 %1517
  %1519 = vrot.lane.b32.xlu0 %v1451, 64
  %v1520 = vpop.permute.xlu0 %1519
  %1521 = vrot.lane.b32.xlu0 %v1453, 64
  %v1522 = vpop.permute.xlu0 %1521
  %1523 = vrot.lane.b32.xlu0 %v1455, 64
  %v1524 = vpop.permute.xlu0 %1523
  %1525 = vrot.lane.b32.xlu0 %v1457, 64
  %v1526 = vpop.permute.xlu0 %1525
  %1527 = vrot.lane.b32.xlu0 %v1460, 64
  %v1528 = vpop.permute.xlu0 %1527
  %1529 = vrot.lane.b32.xlu0 %v1462, 64
  %v1530 = vpop.permute.xlu0 %1529
  %1531 = vrot.lane.b32.xlu0 %v1464, 64
  %v1532 = vpop.permute.xlu0 %1531
  %1533 = vrot.lane.b32.xlu0 %v1466, 64
  %v1534 = vpop.permute.xlu0 %1533
  %1535 = vrot.lane.b32.xlu0 %v1469, 64
  %v1536 = vpop.permute.xlu0 %1535
  %1537 = vrot.lane.b32.xlu0 %v1471, 64
  %v1538 = vpop.permute.xlu0 %1537
  %1539 = vrot.lane.b32.xlu0 %v1473, 64
  %v1540 = vpop.permute.xlu0 %1539
  %1541 = vrot.lane.b32.xlu0 %v1475, 64
  %v1542 = vpop.permute.xlu0 %1541
  %1543 = vrot.lane.b32.xlu0 %v1478, 64
  %v1544 = vpop.permute.xlu0 %1543
  %1545 = vrot.lane.b32.xlu0 %v1480, 64
  %v1546 = vpop.permute.xlu0 %1545
  %1547 = vrot.lane.b32.xlu0 %v1482, 64
  %v1548 = vpop.permute.xlu0 %1547
  %1549 = vrot.lane.b32.xlu0 %v1484, 64
  %v1550 = vpop.permute.xlu0 %1549
  %1551 = vrot.lane.b32.xlu0 %v1487, 64
  %v1552 = vpop.permute.xlu0 %1551
  %1553 = vrot.lane.b32.xlu0 %v1489, 64
  %v1554 = vpop.permute.xlu0 %1553
  %1555 = vrot.lane.b32.xlu0 %v1491, 64
  %v1556 = vpop.permute.xlu0 %1555
  %1557 = vrot.lane.b32.xlu0 %v1493, 64
  %v1558 = vpop.permute.xlu0 %1557
  %1559 = vrot.lane.b32.xlu0 %v1496, 64
  %v1560 = vpop.permute.xlu0 %1559
  %1561 = vrot.lane.b32.xlu0 %v1498, 64
  %v1562 = vpop.permute.xlu0 %1561
  %1563 = vrot.lane.b32.xlu0 %v1500, 64
  %v1564 = vpop.permute.xlu0 %1563
  %1565 = vrot.lane.b32.xlu0 %v1502, 64
  %v1566 = vpop.permute.xlu0 %1565
  %vm1599 = vcmask 1040384
  %v1600 = vrot.slane %v561, 7
  %v1601 = vrot.slane %v562, 7
  %v1602 = vsel %vm1599, %v1600, %v1601
  %v1603 = vrot.slane %v563, 7
  %v1604 = vsel %vm1599, %v1601, %v1603
  %v1605 = vrot.slane %v564, 7
  %v1606 = vsel %vm1599, %v1603, %v1605
  %v1607 = vrot.slane %v565, 7
  %v1608 = vsel %vm1599, %v1605, %v1607
  %v1609 = vrot.slane %v567, 7
  %v1610 = vrot.slane %v568, 7
  %v1611 = vsel %vm1599, %v1609, %v1610
  %v1612 = vrot.slane %v569, 7
  %v1613 = vsel %vm1599, %v1610, %v1612
  %v1614 = vrot.slane %v570, 7
  %v1615 = vsel %vm1599, %v1612, %v1614
  %v1616 = vrot.slane %v571, 7
  %v1617 = vsel %vm1599, %v1614, %v1616
  %v1618 = vrot.slane %v573, 7
  %v1619 = vrot.slane %v574, 7
  %v1620 = vsel %vm1599, %v1618, %v1619
  %v1621 = vrot.slane %v575, 7
  %v1622 = vsel %vm1599, %v1619, %v1621
  %v1623 = vrot.slane %v576, 7
  %v1624 = vsel %vm1599, %v1621, %v1623
  %v1625 = vrot.slane %v577, 7
  %v1626 = vsel %vm1599, %v1623, %v1625
  %v1627 = vrot.slane %v579, 7
  %v1628 = vrot.slane %v580, 7
  %v1629 = vsel %vm1599, %v1627, %v1628
  %v1630 = vrot.slane %v581, 7
  %v1631 = vsel %vm1599, %v1628, %v1630
  %v1632 = vrot.slane %v582, 7
  %v1633 = vsel %vm1599, %v1630, %v1632
  %v1634 = vrot.slane %v583, 7
  %v1635 = vsel %vm1599, %v1632, %v1634
  %v1636 = vrot.slane %v585, 7
  %v1637 = vrot.slane %v586, 7
  %v1638 = vsel %vm1599, %v1636, %v1637
  %v1639 = vrot.slane %v587, 7
  %v1640 = vsel %vm1599, %v1637, %v1639
  %v1641 = vrot.slane %v588, 7
  %v1642 = vsel %vm1599, %v1639, %v1641
  %v1643 = vrot.slane %v589, 7
  %v1644 = vsel %vm1599, %v1641, %v1643
  %v1645 = vrot.slane %v591, 7
  %v1646 = vrot.slane %v592, 7
  %v1647 = vsel %vm1599, %v1645, %v1646
  %v1648 = vrot.slane %v593, 7
  %v1649 = vsel %vm1599, %v1646, %v1648
  %v1650 = vrot.slane %v594, 7
  %v1651 = vsel %vm1599, %v1648, %v1650
  %v1652 = vrot.slane %v595, 7
  %v1653 = vsel %vm1599, %v1650, %v1652
  %v1654 = vrot.slane %v597, 7
  %v1655 = vrot.slane %v598, 7
  %v1656 = vsel %vm1599, %v1654, %v1655
  %v1657 = vrot.slane %v599, 7
  %v1658 = vsel %vm1599, %v1655, %v1657
  %v1659 = vrot.slane %v600, 7
  %v1660 = vsel %vm1599, %v1657, %v1659
  %v1661 = vrot.slane %v601, 7
  %v1662 = vsel %vm1599, %v1659, %v1661
  %v1663 = vrot.slane %v603, 7
  %v1664 = vrot.slane %v604, 7
  %v1665 = vsel %vm1599, %v1663, %v1664
  %v1666 = vrot.slane %v605, 7
  %v1667 = vsel %vm1599, %v1664, %v1666
  %v1668 = vrot.slane %v606, 7
  %v1669 = vsel %vm1599, %v1666, %v1668
  %v1670 = vrot.slane %v607, 7
  %v1671 = vsel %vm1599, %v1668, %v1670
  %1672 = vrot.lane.b32.xlu0 %v1602, 96
  %v1673 = vpop.permute.xlu0 %1672
  %1674 = vrot.lane.b32.xlu0 %v1604, 96
  %v1675 = vpop.permute.xlu0 %1674
  %1676 = vrot.lane.b32.xlu0 %v1606, 96
  %v1677 = vpop.permute.xlu0 %1676
  %1678 = vrot.lane.b32.xlu0 %v1608, 96
  %v1679 = vpop.permute.xlu0 %1678
  %1680 = vrot.lane.b32.xlu0 %v1611, 96
  %v1681 = vpop.permute.xlu0 %1680
  %1682 = vrot.lane.b32.xlu0 %v1613, 96
  %v1683 = vpop.permute.xlu0 %1682
  %1684 = vrot.lane.b32.xlu0 %v1615, 96
  %v1685 = vpop.permute.xlu0 %1684
  %1686 = vrot.lane.b32.xlu0 %v1617, 96
  %v1687 = vpop.permute.xlu0 %1686
  %1688 = vrot.lane.b32.xlu0 %v1620, 96
  %v1689 = vpop.permute.xlu0 %1688
  %1690 = vrot.lane.b32.xlu0 %v1622, 96
  %v1691 = vpop.permute.xlu0 %1690
  %1692 = vrot.lane.b32.xlu0 %v1624, 96
  %v1693 = vpop.permute.xlu0 %1692
  %1694 = vrot.lane.b32.xlu0 %v1626, 96
  %v1695 = vpop.permute.xlu0 %1694
  %1696 = vrot.lane.b32.xlu0 %v1629, 96
  %v1697 = vpop.permute.xlu0 %1696
  %1698 = vrot.lane.b32.xlu0 %v1631, 96
  %v1699 = vpop.permute.xlu0 %1698
  %1700 = vrot.lane.b32.xlu0 %v1633, 96
  %v1701 = vpop.permute.xlu0 %1700
  %1702 = vrot.lane.b32.xlu0 %v1635, 96
  %v1703 = vpop.permute.xlu0 %1702
  %1704 = vrot.lane.b32.xlu0 %v1638, 96
  %v1705 = vpop.permute.xlu0 %1704
  %1706 = vrot.lane.b32.xlu0 %v1640, 96
  %v1707 = vpop.permute.xlu0 %1706
  %1708 = vrot.lane.b32.xlu0 %v1642, 96
  %v1709 = vpop.permute.xlu0 %1708
  %1710 = vrot.lane.b32.xlu0 %v1644, 96
  %v1711 = vpop.permute.xlu0 %1710
  %1712 = vrot.lane.b32.xlu0 %v1647, 96
  %v1713 = vpop.permute.xlu0 %1712
  %1714 = vrot.lane.b32.xlu0 %v1649, 96
  %v1715 = vpop.permute.xlu0 %1714
  %1716 = vrot.lane.b32.xlu0 %v1651, 96
  %v1717 = vpop.permute.xlu0 %1716
  %1718 = vrot.lane.b32.xlu0 %v1653, 96
  %v1719 = vpop.permute.xlu0 %1718
  %1720 = vrot.lane.b32.xlu0 %v1656, 96
  %v1721 = vpop.permute.xlu0 %1720
  %1722 = vrot.lane.b32.xlu0 %v1658, 96
  %v1723 = vpop.permute.xlu0 %1722
  %1724 = vrot.lane.b32.xlu0 %v1660, 96
  %v1725 = vpop.permute.xlu0 %1724
  %1726 = vrot.lane.b32.xlu0 %v1662, 96
  %v1727 = vpop.permute.xlu0 %1726
  %1728 = vrot.lane.b32.xlu0 %v1665, 96
  %v1729 = vpop.permute.xlu0 %1728
  %1730 = vrot.lane.b32.xlu0 %v1667, 96
  %v1731 = vpop.permute.xlu0 %1730
  %1732 = vrot.lane.b32.xlu0 %v1669, 96
  %v1733 = vpop.permute.xlu0 %1732
  %1734 = vrot.lane.b32.xlu0 %v1671, 96
  %v1735 = vpop.permute.xlu0 %1734
  %v1776 = vrot.slane %v566, 1
  %v1777 = vsel %vm649, %v657, %v1776
  %v1778 = vrot.slane %v572, 1
  %v1779 = vsel %vm649, %v666, %v1778
  %v1780 = vrot.slane %v578, 1
  %v1781 = vsel %vm649, %v675, %v1780
  %v1782 = vrot.slane %v584, 1
  %v1783 = vsel %vm649, %v684, %v1782
  %v1784 = vrot.slane %v590, 1
  %v1785 = vsel %vm649, %v693, %v1784
  %v1786 = vrot.slane %v596, 1
  %v1787 = vsel %vm649, %v702, %v1786
  %v1788 = vrot.slane %v602, 1
  %v1789 = vsel %vm649, %v711, %v1788
  %v1790 = vrot.slane %v608, 1
  %v1791 = vsel %vm649, %v720, %v1790
  %1792 = vrot.lane.b32.xlu0 %v1777, 32
  %v1793 = vpop.permute.xlu0 %1792
  %1794 = vrot.lane.b32.xlu0 %v1779, 32
  %v1795 = vpop.permute.xlu0 %1794
  %1796 = vrot.lane.b32.xlu0 %v1781, 32
  %v1797 = vpop.permute.xlu0 %1796
  %1798 = vrot.lane.b32.xlu0 %v1783, 32
  %v1799 = vpop.permute.xlu0 %1798
  %1800 = vrot.lane.b32.xlu0 %v1785, 32
  %v1801 = vpop.permute.xlu0 %1800
  %1802 = vrot.lane.b32.xlu0 %v1787, 32
  %v1803 = vpop.permute.xlu0 %1802
  %1804 = vrot.lane.b32.xlu0 %v1789, 32
  %v1805 = vpop.permute.xlu0 %1804
  %1806 = vrot.lane.b32.xlu0 %v1791, 32
  %v1807 = vpop.permute.xlu0 %1806
  %v1816 = vrot.slane %v566, 2
  %v1817 = vsel %vm818, %v826, %v1816
  %v1818 = vrot.slane %v572, 2
  %v1819 = vsel %vm818, %v835, %v1818
  %v1820 = vrot.slane %v578, 2
  %v1821 = vsel %vm818, %v844, %v1820
  %v1822 = vrot.slane %v584, 2
  %v1823 = vsel %vm818, %v853, %v1822
  %v1824 = vrot.slane %v590, 2
  %v1825 = vsel %vm818, %v862, %v1824
  %v1826 = vrot.slane %v596, 2
  %v1827 = vsel %vm818, %v871, %v1826
  %v1828 = vrot.slane %v602, 2
  %v1829 = vsel %vm818, %v880, %v1828
  %v1830 = vrot.slane %v608, 2
  %v1831 = vsel %vm818, %v889, %v1830
  %1832 = vrot.lane.b32.xlu0 %v1817, 64
  %v1833 = vpop.permute.xlu0 %1832
  %1834 = vrot.lane.b32.xlu0 %v1819, 64
  %v1835 = vpop.permute.xlu0 %1834
  %1836 = vrot.lane.b32.xlu0 %v1821, 64
  %v1837 = vpop.permute.xlu0 %1836
  %1838 = vrot.lane.b32.xlu0 %v1823, 64
  %v1839 = vpop.permute.xlu0 %1838
  %1840 = vrot.lane.b32.xlu0 %v1825, 64
  %v1841 = vpop.permute.xlu0 %1840
  %1842 = vrot.lane.b32.xlu0 %v1827, 64
  %v1843 = vpop.permute.xlu0 %1842
  %1844 = vrot.lane.b32.xlu0 %v1829, 64
  %v1845 = vpop.permute.xlu0 %1844
  %1846 = vrot.lane.b32.xlu0 %v1831, 64
  %v1847 = vpop.permute.xlu0 %1846
  %v1856 = vrot.slane %v566, 3
  %v1857 = vsel %vm987, %v995, %v1856
  %v1858 = vrot.slane %v572, 3
  %v1859 = vsel %vm987, %v1004, %v1858
  %v1860 = vrot.slane %v578, 3
  %v1861 = vsel %vm987, %v1013, %v1860
  %v1862 = vrot.slane %v584, 3
  %v1863 = vsel %vm987, %v1022, %v1862
  %v1864 = vrot.slane %v590, 3
  %v1865 = vsel %vm987, %v1031, %v1864
  %v1866 = vrot.slane %v596, 3
  %v1867 = vsel %vm987, %v1040, %v1866
  %v1868 = vrot.slane %v602, 3
  %v1869 = vsel %vm987, %v1049, %v1868
  %v1870 = vrot.slane %v608, 3
  %v1871 = vsel %vm987, %v1058, %v1870
  %1872 = vrot.lane.b32.xlu0 %v1857, 96
  %v1873 = vpop.permute.xlu0 %1872
  %1874 = vrot.lane.b32.xlu0 %v1859, 96
  %v1875 = vpop.permute.xlu0 %1874
  %1876 = vrot.lane.b32.xlu0 %v1861, 96
  %v1877 = vpop.permute.xlu0 %1876
  %1878 = vrot.lane.b32.xlu0 %v1863, 96
  %v1879 = vpop.permute.xlu0 %1878
  %1880 = vrot.lane.b32.xlu0 %v1865, 96
  %v1881 = vpop.permute.xlu0 %1880
  %1882 = vrot.lane.b32.xlu0 %v1867, 96
  %v1883 = vpop.permute.xlu0 %1882
  %1884 = vrot.lane.b32.xlu0 %v1869, 96
  %v1885 = vpop.permute.xlu0 %1884
  %1886 = vrot.lane.b32.xlu0 %v1871, 96
  %v1887 = vpop.permute.xlu0 %1886
  %v1896 = vrot.slane %v566, 4
  %v1897 = vsel %vm1156, %v1164, %v1896
  %v1898 = vrot.slane %v572, 4
  %v1899 = vsel %vm1156, %v1173, %v1898
  %v1900 = vrot.slane %v578, 4
  %v1901 = vsel %vm1156, %v1182, %v1900
  %v1902 = vrot.slane %v584, 4
  %v1903 = vsel %vm1156, %v1191, %v1902
  %v1904 = vrot.slane %v590, 4
  %v1905 = vsel %vm1156, %v1200, %v1904
  %v1906 = vrot.slane %v596, 4
  %v1907 = vsel %vm1156, %v1209, %v1906
  %v1908 = vrot.slane %v602, 4
  %v1909 = vsel %vm1156, %v1218, %v1908
  %v1910 = vrot.slane %v608, 4
  %v1911 = vsel %vm1156, %v1227, %v1910
  %v1920 = vrot.slane %v566, 5
  %v1921 = vsel %vm1261, %v1269, %v1920
  %v1922 = vrot.slane %v572, 5
  %v1923 = vsel %vm1261, %v1278, %v1922
  %v1924 = vrot.slane %v578, 5
  %v1925 = vsel %vm1261, %v1287, %v1924
  %v1926 = vrot.slane %v584, 5
  %v1927 = vsel %vm1261, %v1296, %v1926
  %v1928 = vrot.slane %v590, 5
  %v1929 = vsel %vm1261, %v1305, %v1928
  %v1930 = vrot.slane %v596, 5
  %v1931 = vsel %vm1261, %v1314, %v1930
  %v1932 = vrot.slane %v602, 5
  %v1933 = vsel %vm1261, %v1323, %v1932
  %v1934 = vrot.slane %v608, 5
  %v1935 = vsel %vm1261, %v1332, %v1934
  %1936 = vrot.lane.b32.xlu0 %v1921, 32
  %v1937 = vpop.permute.xlu0 %1936
  %1938 = vrot.lane.b32.xlu0 %v1923, 32
  %v1939 = vpop.permute.xlu0 %1938
  %1940 = vrot.lane.b32.xlu0 %v1925, 32
  %v1941 = vpop.permute.xlu0 %1940
  %1942 = vrot.lane.b32.xlu0 %v1927, 32
  %v1943 = vpop.permute.xlu0 %1942
  %1944 = vrot.lane.b32.xlu0 %v1929, 32
  %v1945 = vpop.permute.xlu0 %1944
  %1946 = vrot.lane.b32.xlu0 %v1931, 32
  %v1947 = vpop.permute.xlu0 %1946
  %1948 = vrot.lane.b32.xlu0 %v1933, 32
  %v1949 = vpop.permute.xlu0 %1948
  %1950 = vrot.lane.b32.xlu0 %v1935, 32
  %v1951 = vpop.permute.xlu0 %1950
  %v1960 = vrot.slane %v566, 6
  %v1961 = vsel %vm1430, %v1438, %v1960
  %v1962 = vrot.slane %v572, 6
  %v1963 = vsel %vm1430, %v1447, %v1962
  %v1964 = vrot.slane %v578, 6
  %v1965 = vsel %vm1430, %v1456, %v1964
  %v1966 = vrot.slane %v584, 6
  %v1967 = vsel %vm1430, %v1465, %v1966
  %v1968 = vrot.slane %v590, 6
  %v1969 = vsel %vm1430, %v1474, %v1968
  %v1970 = vrot.slane %v596, 6
  %v1971 = vsel %vm1430, %v1483, %v1970
  %v1972 = vrot.slane %v602, 6
  %v1973 = vsel %vm1430, %v1492, %v1972
  %v1974 = vrot.slane %v608, 6
  %v1975 = vsel %vm1430, %v1501, %v1974
  %1976 = vrot.lane.b32.xlu0 %v1961, 64
  %v1977 = vpop.permute.xlu0 %1976
  %1978 = vrot.lane.b32.xlu0 %v1963, 64
  %v1979 = vpop.permute.xlu0 %1978
  %1980 = vrot.lane.b32.xlu0 %v1965, 64
  %v1981 = vpop.permute.xlu0 %1980
  %1982 = vrot.lane.b32.xlu0 %v1967, 64
  %v1983 = vpop.permute.xlu0 %1982
  %1984 = vrot.lane.b32.xlu0 %v1969, 64
  %v1985 = vpop.permute.xlu0 %1984
  %1986 = vrot.lane.b32.xlu0 %v1971, 64
  %v1987 = vpop.permute.xlu0 %1986
  %1988 = vrot.lane.b32.xlu0 %v1973, 64
  %v1989 = vpop.permute.xlu0 %1988
  %1990 = vrot.lane.b32.xlu0 %v1975, 64
  %v1991 = vpop.permute.xlu0 %1990
  %v2000 = vrot.slane %v566, 7
  %v2001 = vsel %vm1599, %v1607, %v2000
  %v2002 = vrot.slane %v572, 7
  %v2003 = vsel %vm1599, %v1616, %v2002
  %v2004 = vrot.slane %v578, 7
  %v2005 = vsel %vm1599, %v1625, %v2004
  %v2006 = vrot.slane %v584, 7
  %v2007 = vsel %vm1599, %v1634, %v2006
  %v2008 = vrot.slane %v590, 7
  %v2009 = vsel %vm1599, %v1643, %v2008
  %v2010 = vrot.slane %v596, 7
  %v2011 = vsel %vm1599, %v1652, %v2010
  %v2012 = vrot.slane %v602, 7
  %v2013 = vsel %vm1599, %v1661, %v2012
  %v2014 = vrot.slane %v608, 7
  %v2015 = vsel %vm1599, %v1670, %v2014
  %2016 = vrot.lane.b32.xlu0 %v2001, 96
  %v2017 = vpop.permute.xlu0 %2016
  %2018 = vrot.lane.b32.xlu0 %v2003, 96
  %v2019 = vpop.permute.xlu0 %2018
  %2020 = vrot.lane.b32.xlu0 %v2005, 96
  %v2021 = vpop.permute.xlu0 %2020
  %2022 = vrot.lane.b32.xlu0 %v2007, 96
  %v2023 = vpop.permute.xlu0 %2022
  %2024 = vrot.lane.b32.xlu0 %v2009, 96
  %v2025 = vpop.permute.xlu0 %2024
  %2026 = vrot.lane.b32.xlu0 %v2011, 96
  %v2027 = vpop.permute.xlu0 %2026
  %2028 = vrot.lane.b32.xlu0 %v2013, 96
  %v2029 = vpop.permute.xlu0 %2028
  %2030 = vrot.lane.b32.xlu0 %v2015, 96
  %v2031 = vpop.permute.xlu0 %2030
  %vm2040 = vcmask 261120
  %v2041 = vsel %vm2040, %v561, %v723
  %v2042 = vsel %vm2040, %v562, %v725
  %v2043 = vsel %vm2040, %v563, %v727
  %v2044 = vsel %vm2040, %v564, %v729
  %v2045 = vsel %vm2040, %v567, %v731
  %v2046 = vsel %vm2040, %v568, %v733
  %v2047 = vsel %vm2040, %v569, %v735
  %v2048 = vsel %vm2040, %v570, %v737
  %v2049 = vsel %vm2040, %v573, %v739
  %v2050 = vsel %vm2040, %v574, %v741
  %v2051 = vsel %vm2040, %v575, %v743
  %v2052 = vsel %vm2040, %v576, %v745
  %v2053 = vsel %vm2040, %v579, %v747
  %v2054 = vsel %vm2040, %v580, %v749
  %v2055 = vsel %vm2040, %v581, %v751
  %v2056 = vsel %vm2040, %v582, %v753
  %v2057 = vsel %vm2040, %v585, %v755
  %v2058 = vsel %vm2040, %v586, %v757
  %v2059 = vsel %vm2040, %v587, %v759
  %v2060 = vsel %vm2040, %v588, %v761
  %v2061 = vsel %vm2040, %v591, %v763
  %v2062 = vsel %vm2040, %v592, %v765
  %v2063 = vsel %vm2040, %v593, %v767
  %v2064 = vsel %vm2040, %v594, %v769
  %v2065 = vsel %vm2040, %v597, %v771
  %v2066 = vsel %vm2040, %v598, %v773
  %v2067 = vsel %vm2040, %v599, %v775
  %v2068 = vsel %vm2040, %v600, %v777
  %v2069 = vsel %vm2040, %v603, %v779
  %v2070 = vsel %vm2040, %v604, %v781
  %v2071 = vsel %vm2040, %v605, %v783
  %v2072 = vsel %vm2040, %v606, %v785
  %vm2073 = vcmask 523264
  %v2074 = vsel %vm2073, %v2041, %v892
  %v2075 = vsel %vm2073, %v2042, %v894
  %v2076 = vsel %vm2073, %v2043, %v896
  %v2077 = vsel %vm2073, %v2044, %v898
  %v2078 = vsel %vm2073, %v2045, %v900
  %v2079 = vsel %vm2073, %v2046, %v902
  %v2080 = vsel %vm2073, %v2047, %v904
  %v2081 = vsel %vm2073, %v2048, %v906
  %v2082 = vsel %vm2073, %v2049, %v908
  %v2083 = vsel %vm2073, %v2050, %v910
  %v2084 = vsel %vm2073, %v2051, %v912
  %v2085 = vsel %vm2073, %v2052, %v914
  %v2086 = vsel %vm2073, %v2053, %v916
  %v2087 = vsel %vm2073, %v2054, %v918
  %v2088 = vsel %vm2073, %v2055, %v920
  %v2089 = vsel %vm2073, %v2056, %v922
  %v2090 = vsel %vm2073, %v2057, %v924
  %v2091 = vsel %vm2073, %v2058, %v926
  %v2092 = vsel %vm2073, %v2059, %v928
  %v2093 = vsel %vm2073, %v2060, %v930
  %v2094 = vsel %vm2073, %v2061, %v932
  %v2095 = vsel %vm2073, %v2062, %v934
  %v2096 = vsel %vm2073, %v2063, %v936
  %v2097 = vsel %vm2073, %v2064, %v938
  %v2098 = vsel %vm2073, %v2065, %v940
  %v2099 = vsel %vm2073, %v2066, %v942
  %v2100 = vsel %vm2073, %v2067, %v944
  %v2101 = vsel %vm2073, %v2068, %v946
  %v2102 = vsel %vm2073, %v2069, %v948
  %v2103 = vsel %vm2073, %v2070, %v950
  %v2104 = vsel %vm2073, %v2071, %v952
  %v2105 = vsel %vm2073, %v2072, %v954
  %v2106 = vsel %vm111, %v2074, %v1061
  %v2107 = vsel %vm111, %v2075, %v1063
  %v2108 = vsel %vm111, %v2076, %v1065
  %v2109 = vsel %vm111, %v2077, %v1067
  %v2110 = vsel %vm111, %v2078, %v1069
  %v2111 = vsel %vm111, %v2079, %v1071
  %v2112 = vsel %vm111, %v2080, %v1073
  %v2113 = vsel %vm111, %v2081, %v1075
  %v2114 = vsel %vm111, %v2082, %v1077
  %v2115 = vsel %vm111, %v2083, %v1079
  %v2116 = vsel %vm111, %v2084, %v1081
  %v2117 = vsel %vm111, %v2085, %v1083
  %v2118 = vsel %vm111, %v2086, %v1085
  %v2119 = vsel %vm111, %v2087, %v1087
  %v2120 = vsel %vm111, %v2088, %v1089
  %v2121 = vsel %vm111, %v2089, %v1091
  %v2122 = vsel %vm111, %v2090, %v1093
  %v2123 = vsel %vm111, %v2091, %v1095
  %v2124 = vsel %vm111, %v2092, %v1097
  %v2125 = vsel %vm111, %v2093, %v1099
  %v2126 = vsel %vm111, %v2094, %v1101
  %v2127 = vsel %vm111, %v2095, %v1103
  %v2128 = vsel %vm111, %v2096, %v1105
  %v2129 = vsel %vm111, %v2097, %v1107
  %v2130 = vsel %vm111, %v2098, %v1109
  %v2131 = vsel %vm111, %v2099, %v1111
  %v2132 = vsel %vm111, %v2100, %v1113
  %v2133 = vsel %vm111, %v2101, %v1115
  %v2134 = vsel %vm111, %v2102, %v1117
  %v2135 = vsel %vm111, %v2103, %v1119
  %v2136 = vsel %vm111, %v2104, %v1121
  %v2137 = vsel %vm111, %v2105, %v1123
  %v2138 = vsel %vm2040, %v1159, %v1335
  %v2139 = vsel %vm2040, %v1161, %v1337
  %v2140 = vsel %vm2040, %v1163, %v1339
  %v2141 = vsel %vm2040, %v1165, %v1341
  %v2142 = vsel %vm2040, %v1168, %v1343
  %v2143 = vsel %vm2040, %v1170, %v1345
  %v2144 = vsel %vm2040, %v1172, %v1347
  %v2145 = vsel %vm2040, %v1174, %v1349
  %v2146 = vsel %vm2040, %v1177, %v1351
  %v2147 = vsel %vm2040, %v1179, %v1353
  %v2148 = vsel %vm2040, %v1181, %v1355
  %v2149 = vsel %vm2040, %v1183, %v1357
  %v2150 = vsel %vm2040, %v1186, %v1359
  %v2151 = vsel %vm2040, %v1188, %v1361
  %v2152 = vsel %vm2040, %v1190, %v1363
  %v2153 = vsel %vm2040, %v1192, %v1365
  %v2154 = vsel %vm2040, %v1195, %v1367
  %v2155 = vsel %vm2040, %v1197, %v1369
  %v2156 = vsel %vm2040, %v1199, %v1371
  %v2157 = vsel %vm2040, %v1201, %v1373
  %v2158 = vsel %vm2040, %v1204, %v1375
  %v2159 = vsel %vm2040, %v1206, %v1377
  %v2160 = vsel %vm2040, %v1208, %v1379
  %v2161 = vsel %vm2040, %v1210, %v1381
  %v2162 = vsel %vm2040, %v1213, %v1383
  %v2163 = vsel %vm2040, %v1215, %v1385
  %v2164 = vsel %vm2040, %v1217, %v1387
  %v2165 = vsel %vm2040, %v1219, %v1389
  %v2166 = vsel %vm2040, %v1222, %v1391
  %v2167 = vsel %vm2040, %v1224, %v1393
  %v2168 = vsel %vm2040, %v1226, %v1395
  %v2169 = vsel %vm2040, %v1228, %v1397
  %v2170 = vsel %vm2073, %v2138, %v1504
  %v2171 = vsel %vm2073, %v2139, %v1506
  %v2172 = vsel %vm2073, %v2140, %v1508
  %v2173 = vsel %vm2073, %v2141, %v1510
  %v2174 = vsel %vm2073, %v2142, %v1512
  %v2175 = vsel %vm2073, %v2143, %v1514
  %v2176 = vsel %vm2073, %v2144, %v1516
  %v2177 = vsel %vm2073, %v2145, %v1518
  %v2178 = vsel %vm2073, %v2146, %v1520
  %v2179 = vsel %vm2073, %v2147, %v1522
  %v2180 = vsel %vm2073, %v2148, %v1524
  %v2181 = vsel %vm2073, %v2149, %v1526
  %v2182 = vsel %vm2073, %v2150, %v1528
  %v2183 = vsel %vm2073, %v2151, %v1530
  %v2184 = vsel %vm2073, %v2152, %v1532
  %v2185 = vsel %vm2073, %v2153, %v1534
  %v2186 = vsel %vm2073, %v2154, %v1536
  %v2187 = vsel %vm2073, %v2155, %v1538
  %v2188 = vsel %vm2073, %v2156, %v1540
  %v2189 = vsel %vm2073, %v2157, %v1542
  %v2190 = vsel %vm2073, %v2158, %v1544
  %v2191 = vsel %vm2073, %v2159, %v1546
  %v2192 = vsel %vm2073, %v2160, %v1548
  %v2193 = vsel %vm2073, %v2161, %v1550
  %v2194 = vsel %vm2073, %v2162, %v1552
  %v2195 = vsel %vm2073, %v2163, %v1554
  %v2196 = vsel %vm2073, %v2164, %v1556
  %v2197 = vsel %vm2073, %v2165, %v1558
  %v2198 = vsel %vm2073, %v2166, %v1560
  %v2199 = vsel %vm2073, %v2167, %v1562
  %v2200 = vsel %vm2073, %v2168, %v1564
  %v2201 = vsel %vm2073, %v2169, %v1566
  %v2202 = vsel %vm111, %v2170, %v1673
  %v2203 = vsel %vm111, %v2171, %v1675
  %v2204 = vsel %vm111, %v2172, %v1677
  %v2205 = vsel %vm111, %v2173, %v1679
  %v2206 = vsel %vm111, %v2174, %v1681
  %v2207 = vsel %vm111, %v2175, %v1683
  %v2208 = vsel %vm111, %v2176, %v1685
  %v2209 = vsel %vm111, %v2177, %v1687
  %v2210 = vsel %vm111, %v2178, %v1689
  %v2211 = vsel %vm111, %v2179, %v1691
  %v2212 = vsel %vm111, %v2180, %v1693
  %v2213 = vsel %vm111, %v2181, %v1695
  %v2214 = vsel %vm111, %v2182, %v1697
  %v2215 = vsel %vm111, %v2183, %v1699
  %v2216 = vsel %vm111, %v2184, %v1701
  %v2217 = vsel %vm111, %v2185, %v1703
  %v2218 = vsel %vm111, %v2186, %v1705
  %v2219 = vsel %vm111, %v2187, %v1707
  %v2220 = vsel %vm111, %v2188, %v1709
  %v2221 = vsel %vm111, %v2189, %v1711
  %v2222 = vsel %vm111, %v2190, %v1713
  %v2223 = vsel %vm111, %v2191, %v1715
  %v2224 = vsel %vm111, %v2192, %v1717
  %v2225 = vsel %vm111, %v2193, %v1719
  %v2226 = vsel %vm111, %v2194, %v1721
  %v2227 = vsel %vm111, %v2195, %v1723
  %v2228 = vsel %vm111, %v2196, %v1725
  %v2229 = vsel %vm111, %v2197, %v1727
  %v2230 = vsel %vm111, %v2198, %v1729
  %v2231 = vsel %vm111, %v2199, %v1731
  %v2232 = vsel %vm111, %v2200, %v1733
  %v2233 = vsel %vm111, %v2201, %v1735
  %v2234 = vsel %vm2040, %v565, %v1793
  %v2235 = vsel %vm2040, %v571, %v1795
  %v2236 = vsel %vm2040, %v577, %v1797
  %v2237 = vsel %vm2040, %v583, %v1799
  %v2238 = vsel %vm2040, %v589, %v1801
  %v2239 = vsel %vm2040, %v595, %v1803
  %v2240 = vsel %vm2040, %v601, %v1805
  %v2241 = vsel %vm2040, %v607, %v1807
  %v2242 = vsel %vm2073, %v2234, %v1833
  %v2243 = vsel %vm2073, %v2235, %v1835
  %v2244 = vsel %vm2073, %v2236, %v1837
  %v2245 = vsel %vm2073, %v2237, %v1839
  %v2246 = vsel %vm2073, %v2238, %v1841
  %v2247 = vsel %vm2073, %v2239, %v1843
  %v2248 = vsel %vm2073, %v2240, %v1845
  %v2249 = vsel %vm2073, %v2241, %v1847
  %v2250 = vsel %vm111, %v2242, %v1873
  %v2251 = vsel %vm111, %v2243, %v1875
  %v2252 = vsel %vm111, %v2244, %v1877
  %v2253 = vsel %vm111, %v2245, %v1879
  %v2254 = vsel %vm111, %v2246, %v1881
  %v2255 = vsel %vm111, %v2247, %v1883
  %v2256 = vsel %vm111, %v2248, %v1885
  %v2257 = vsel %vm111, %v2249, %v1887
  %v2258 = vsel %vm2040, %v1897, %v1937
  %v2259 = vsel %vm2040, %v1899, %v1939
  %v2260 = vsel %vm2040, %v1901, %v1941
  %v2261 = vsel %vm2040, %v1903, %v1943
  %v2262 = vsel %vm2040, %v1905, %v1945
  %v2263 = vsel %vm2040, %v1907, %v1947
  %v2264 = vsel %vm2040, %v1909, %v1949
  %v2265 = vsel %vm2040, %v1911, %v1951
  %v2266 = vsel %vm2073, %v2258, %v1977
  %v2267 = vsel %vm2073, %v2259, %v1979
  %v2268 = vsel %vm2073, %v2260, %v1981
  %v2269 = vsel %vm2073, %v2261, %v1983
  %v2270 = vsel %vm2073, %v2262, %v1985
  %v2271 = vsel %vm2073, %v2263, %v1987
  %v2272 = vsel %vm2073, %v2264, %v1989
  %v2273 = vsel %vm2073, %v2265, %v1991
  %v2274 = vsel %vm111, %v2266, %v2017
  %v2275 = vsel %vm111, %v2267, %v2019
  %v2276 = vsel %vm111, %v2268, %v2021
  %v2277 = vsel %vm111, %v2269, %v2023
  %v2278 = vsel %vm111, %v2270, %v2025
  %v2279 = vsel %vm111, %v2271, %v2027
  %v2280 = vsel %vm111, %v2272, %v2029
  %v2281 = vsel %vm111, %v2273, %v2031
  %v2282 = vld [vmem:[%s3] sm:$0xff]
  %v2283 = vld [vmem:[%s3 + $0x8] sm:$0xff]
  %v2284 = vld [vmem:[%s3 + $0x10] sm:$0xff]
  %v2285 = vld [vmem:[%s3 + $0x18] sm:$0xff]
  %v2286 = vld [vmem:[%s3 + $0x20] sm:$0xff]
  %v2287 = vld [vmem:[%s3 + $0x28] sm:$0xff]
  %v2288 = vld [vmem:[%s3 + $0x30] sm:$0xff]
  %v2289 = vld [vmem:[%s3 + $0x38] sm:$0xff]
  %v2290 = vld [vmem:[%s3 + $0x40] sm:$0xff]
  %v2291 = vld [vmem:[%s3 + $0x48] sm:$0xff]
  %v2292 = vld [vmem:[%s3 + $0x50] sm:$0xff]
  %v2293 = vld [vmem:[%s3 + $0x58] sm:$0xff]
  %v2294 = vld [vmem:[%s3 + $0x60] sm:$0xff]
  %v2295 = vld [vmem:[%s3 + $0x68] sm:$0xff]
  %v2296 = vld [vmem:[%s3 + $0x70] sm:$0xff]
  %v2297 = vld [vmem:[%s3 + $0x78] sm:$0xff]
  %v2298 = vld [vmem:[%s3 + $0x80] sm:$0xff]
  %v2299 = vld [vmem:[%s3 + $0x88] sm:$0xff]
  %v2300 = vld [vmem:[%s3 + $0x90] sm:$0xff]
  %v2301 = vld [vmem:[%s3 + $0x98] sm:$0xff]
  %v2302 = vld [vmem:[%s3 + $0xa0] sm:$0xff]
  %v2303 = vld [vmem:[%s3 + $0xa8] sm:$0xff]
  %v2304 = vld [vmem:[%s3 + $0xb0] sm:$0xff]
  %v2305 = vld [vmem:[%s3 + $0xb8] sm:$0xff]
  %v2306 = vld [vmem:[%s3 + $0xc0] sm:$0xff]
  %v2307 = vld [vmem:[%s3 + $0xc8] sm:$0xff]
  %v2308 = vld [vmem:[%s3 + $0xd0] sm:$0xff]
  %v2309 = vld [vmem:[%s3 + $0xd8] sm:$0xff]
  %v2310 = vld [vmem:[%s3 + $0xe0] sm:$0xff]
  %v2311 = vld [vmem:[%s3 + $0xe8] sm:$0xff]
  %v2312 = vld [vmem:[%s3 + $0xf0] sm:$0xff]
  %v2313 = vld [vmem:[%s3 + $0xf8] sm:$0xff]
  %v2314 = vld [vmem:[%s3 + $0x100] sm:$0xff]
  %v2315 = vld [vmem:[%s3 + $0x108] sm:$0xff]
  %v2316 = vld [vmem:[%s3 + $0x110] sm:$0xff]
  %v2317 = vld [vmem:[%s3 + $0x118] sm:$0xff]
  %v2318 = vld [vmem:[%s3 + $0x120] sm:$0xff]
  %v2319 = vld [vmem:[%s3 + $0x128] sm:$0xff]
  %v2320 = vld [vmem:[%s3 + $0x130] sm:$0xff]
  %v2321 = vld [vmem:[%s3 + $0x138] sm:$0xff]
  %v2322 = vld [vmem:[%s3 + $0x140] sm:$0xff]
  %v2323 = vld [vmem:[%s3 + $0x148] sm:$0xff]
  %v2324 = vld [vmem:[%s3 + $0x150] sm:$0xff]
  %v2325 = vld [vmem:[%s3 + $0x158] sm:$0xff]
  %v2326 = vld [vmem:[%s3 + $0x160] sm:$0xff]
  %v2327 = vld [vmem:[%s3 + $0x168] sm:$0xff]
  %v2328 = vld [vmem:[%s3 + $0x170] sm:$0xff]
  %v2329 = vld [vmem:[%s3 + $0x178] sm:$0xff]
  %v2330 = vld [vmem:[%s3 + $0x180] sm:$0xff]
  %v2331 = vld [vmem:[%s3 + $0x188] sm:$0xff]
  %v2332 = vld [vmem:[%s3 + $0x190] sm:$0xff]
  %v2333 = vld [vmem:[%s3 + $0x198] sm:$0xff]
  %v2334 = vld [vmem:[%s3 + $0x1a0] sm:$0xff]
  %v2335 = vld [vmem:[%s3 + $0x1a8] sm:$0xff]
  %v2336 = vld [vmem:[%s3 + $0x1b0] sm:$0xff]
  %v2337 = vld [vmem:[%s3 + $0x1b8] sm:$0xff]
  %v2338 = vld [vmem:[%s3 + $0x1c0] sm:$0xff]
  %v2339 = vld [vmem:[%s3 + $0x1c8] sm:$0xff]
  %v2340 = vld [vmem:[%s3 + $0x1d0] sm:$0xff]
  %v2341 = vld [vmem:[%s3 + $0x1d8] sm:$0xff]
  %v2342 = vld [vmem:[%s3 + $0x1e0] sm:$0xff]
  %v2343 = vld [vmem:[%s3 + $0x1e8] sm:$0xff]
  %v2344 = vld [vmem:[%s3 + $0x1f0] sm:$0xff]
  %v2345 = vld [vmem:[%s3 + $0x1f8] sm:$0xff]
  %v2346 = vld [vmem:[%s4] sm:$0x1]
  %v2348 = vlaneseq
  %v2349 = vshrl.u32 %v2348, 7
  %v2350 = vsub.s32 0, %v2349
  %v2351 = vrot.slane %v2346, %v2350
  %2353 = vmatprep.subr.mxu0 0.0
  %2354 = vmatpush1.msra.mxu0 %v2282
  %2355 = vmatprep.subr.mxu0 0.0
  %2356 = vmatpush1.msra.mxu0 %v2283
  %2357 = vmatprep.subr.mxu0 0.0
  %2358 = vmatpush1.msra.mxu0 %v2284
  %2359 = vmatprep.subr.mxu0 0.0
  %2360 = vmatpush1.msra.mxu0 %v2285
  %2361 = vmatprep.subr.mxu0 0.0
  %2362 = vmatpush1.msra.mxu0 %v2286
  %2363 = vmatprep.subr.mxu0 0.0
  %2364 = vmatpush1.msra.mxu0 %v2287
  %2365 = vmatprep.subr.mxu0 0.0
  %2366 = vmatpush1.msra.mxu0 %v2288
  %2367 = vmatprep.subr.mxu0 0.0
  %2368 = vmatpush1.msra.mxu0 %v2289
  %2369 = vmatprep.subr.mxu0 0.0
  %2370 = vmatpush1.msra.mxu0 %v2290
  %2371 = vmatprep.subr.mxu0 0.0
  %2372 = vmatpush1.msra.mxu0 %v2291
  %2373 = vmatprep.subr.mxu0 0.0
  %2374 = vmatpush1.msra.mxu0 %v2292
  %2375 = vmatprep.subr.mxu0 0.0
  %2376 = vmatpush1.msra.mxu0 %v2293
  %2377 = vmatprep.subr.mxu0 0.0
  %2378 = vmatpush1.msra.mxu0 %v2294
  %2379 = vmatprep.subr.mxu0 0.0
  %2380 = vmatpush1.msra.mxu0 %v2295
  %2381 = vmatprep.subr.mxu0 0.0
  %2382 = vmatpush1.msra.mxu0 %v2296
  %2383 = vmatprep.subr.mxu0 0.0
  %2384 = vmatpush1.msra.mxu0 %v2297
  %2385 = vmatprep.subr.mxu0 0.0
  %2386 = vmatpush1.msra.mxu0 %v2298
  %2387 = vmatprep.subr.mxu0 0.0
  %2388 = vmatpush1.msra.mxu0 %v2299
  %2389 = vmatprep.subr.mxu0 0.0
  %2390 = vmatpush1.msra.mxu0 %v2300
  %2391 = vmatprep.subr.mxu0 0.0
  %2392 = vmatpush1.msra.mxu0 %v2301
  %2393 = vmatprep.subr.mxu0 0.0
  %2394 = vmatpush1.msra.mxu0 %v2302
  %2395 = vmatprep.subr.mxu0 0.0
  %2396 = vmatpush1.msra.mxu0 %v2303
  %2397 = vmatprep.subr.mxu0 0.0
  %2398 = vmatpush1.msra.mxu0 %v2304
  %2399 = vmatprep.subr.mxu0 0.0
  %2400 = vmatpush1.msra.mxu0 %v2305
  %2401 = vmatprep.subr.mxu0 0.0
  %2402 = vmatpush1.msra.mxu0 %v2306
  %2403 = vmatprep.subr.mxu0 0.0
  %2404 = vmatpush1.msra.mxu0 %v2307
  %2405 = vmatprep.subr.mxu0 0.0
  %2406 = vmatpush1.msra.mxu0 %v2308
  %2407 = vmatprep.subr.mxu0 0.0
  %2408 = vmatpush1.msra.mxu0 %v2309
  %2409 = vmatprep.subr.mxu0 0.0
  %2410 = vmatpush1.msra.mxu0 %v2310
  %2411 = vmatprep.subr.mxu0 0.0
  %2412 = vmatpush1.msra.mxu0 %v2311
  %2413 = vmatprep.subr.mxu0 0.0
  %2414 = vmatpush1.msra.mxu0 %v2312
  %2415 = vmatprep.subr.mxu0 0.0
  %2416 = vmatpush1.msra.mxu0 %v2313
  %2417 = vmatprep.mubr.f32.mxu0 %v2202
  %2418 = vmatmul.mubr.f32.gmra.mrb[0].mxu0 %v2106
  %v2419 = vpop.f32.mrb[0].mxu0
  %v2420 = vadd.f32 %v2351, %v2419
  %v2421 = vpop.f32.mrb[0].mxu0
  %2422 = vmatprep.mubr.f32.mxu0 %v2203
  %2423 = vmatmul.mubr.f32.gmra.mrb[0].mxu0 %v2107
  %v2424 = vpop.f32.mrb[0].mxu0
  %v2425 = vadd.f32 %v2351, %v2424
  %v2426 = vpop.f32.mrb[0].mxu0
  %2427 = vmatprep.mubr.f32.mxu0 %v2204
  %2428 = vmatmul.mubr.f32.gmra.mrb[0].mxu0 %v2108
  %v2429 = vpop.f32.mrb[0].mxu0
  %v2430 = vadd.f32 %v2351, %v2429
  %v2431 = vpop.f32.mrb[0].mxu0
  %2432 = vmatprep.mubr.f32.mxu0 %v2205
  %2433 = vmatmul.mubr.f32.gmra.mrb[0].mxu0 %v2109
  %v2434 = vpop.f32.mrb[0].mxu0
  %v2435 = vadd.f32 %v2351, %v2434
  %v2436 = vpop.f32.mrb[0].mxu0
  %2437 = vmatprep.mubr.f32.mxu0 %v2206
  %2438 = vmatmul.mubr.f32.gmra.mrb[0].mxu0 %v2110
  %v2439 = vpop.f32.mrb[0].mxu0
  %v2440 = vadd.f32 %v2351, %v2439
  %v2441 = vpop.f32.mrb[0].mxu0
  %2442 = vmatprep.mubr.f32.mxu0 %v2207
  %2443 = vmatmul.mubr.f32.gmra.mrb[0].mxu0 %v2111
  %v2444 = vpop.f32.mrb[0].mxu0
  %v2445 = vadd.f32 %v2351, %v2444
  %v2446 = vpop.f32.mrb[0].mxu0
  %2447 = vmatprep.mubr.f32.mxu0 %v2208
  %2448 = vmatmul.mubr.f32.gmra.mrb[0].mxu0 %v2112
  %v2449 = vpop.f32.mrb[0].mxu0
  %v2450 = vadd.f32 %v2351, %v2449
  %v2451 = vpop.f32.mrb[0].mxu0
  %2452 = vmatprep.mubr.f32.mxu0 %v2209
  %2453 = vmatmul.mubr.f32.gmra.mrb[0].mxu0 %v2113
  %v2454 = vpop.f32.mrb[0].mxu0
  %v2455 = vadd.f32 %v2351, %v2454
  %v2456 = vpop.f32.mrb[0].mxu0
  %2457 = vmatprep.mubr.f32.mxu0 %v2210
  %2458 = vmatmul.mubr.f32.gmra.mrb[0].mxu0 %v2114
  %v2459 = vpop.f32.mrb[0].mxu0
  %v2460 = vadd.f32 %v2351, %v2459
  %v2461 = vpop.f32.mrb[0].mxu0
  %2462 = vmatprep.mubr.f32.mxu0 %v2211
  %2463 = vmatmul.mubr.f32.gmra.mrb[0].mxu0 %v2115
  %v2464 = vpop.f32.mrb[0].mxu0
  %v2465 = vadd.f32 %v2351, %v2464
  %v2466 = vpop.f32.mrb[0].mxu0
  %2467 = vmatprep.mubr.f32.mxu0 %v2212
  %2468 = vmatmul.mubr.f32.gmra.mrb[0].mxu0 %v2116
  %v2469 = vpop.f32.mrb[0].mxu0
  %v2470 = vadd.f32 %v2351, %v2469
  %v2471 = vpop.f32.mrb[0].mxu0
  %2472 = vmatprep.mubr.f32.mxu0 %v2213
  %2473 = vmatmul.mubr.f32.gmra.mrb[0].mxu0 %v2117
  %v2474 = vpop.f32.mrb[0].mxu0
  %v2475 = vadd.f32 %v2351, %v2474
  %v2476 = vpop.f32.mrb[0].mxu0
  %2477 = vmatprep.mubr.f32.mxu0 %v2214
  %2478 = vmatmul.mubr.f32.gmra.mrb[0].mxu0 %v2118
  %v2479 = vpop.f32.mrb[0].mxu0
  %v2480 = vadd.f32 %v2351, %v2479
  %v2481 = vpop.f32.mrb[0].mxu0
  %2482 = vmatprep.mubr.f32.mxu0 %v2215
  %2483 = vmatmul.mubr.f32.gmra.mrb[0].mxu0 %v2119
  %v2484 = vpop.f32.mrb[0].mxu0
  %v2485 = vadd.f32 %v2351, %v2484
  %v2486 = vpop.f32.mrb[0].mxu0
  %2487 = vmatprep.mubr.f32.mxu0 %v2216
  %2488 = vmatmul.mubr.f32.gmra.mrb[0].mxu0 %v2120
  %v2489 = vpop.f32.mrb[0].mxu0
  %v2490 = vadd.f32 %v2351, %v2489
  %v2491 = vpop.f32.mrb[0].mxu0
  %2492 = vmatprep.mubr.f32.mxu0 %v2217
  %2493 = vmatmul.mubr.f32.gmra.mrb[0].mxu0 %v2121
  %v2494 = vpop.f32.mrb[0].mxu0
  %v2495 = vadd.f32 %v2351, %v2494
  %v2496 = vpop.f32.mrb[0].mxu0
  %2497 = vmatprep.mubr.f32.mxu0 %v2218
  %2498 = vmatmul.mubr.f32.gmra.mrb[0].mxu0 %v2122
  %v2499 = vpop.f32.mrb[0].mxu0
  %v2500 = vadd.f32 %v2351, %v2499
  %v2501 = vpop.f32.mrb[0].mxu0
  %2502 = vmatprep.mubr.f32.mxu0 %v2219
  %2503 = vmatmul.mubr.f32.gmra.mrb[0].mxu0 %v2123
  %v2504 = vpop.f32.mrb[0].mxu0
  %v2505 = vadd.f32 %v2351, %v2504
  %v2506 = vpop.f32.mrb[0].mxu0
  %2507 = vmatprep.mubr.f32.mxu0 %v2220
  %2508 = vmatmul.mubr.f32.gmra.mrb[0].mxu0 %v2124
  %v2509 = vpop.f32.mrb[0].mxu0
  %v2510 = vadd.f32 %v2351, %v2509
  %v2511 = vpop.f32.mrb[0].mxu0
  %2512 = vmatprep.mubr.f32.mxu0 %v2221
  %2513 = vmatmul.mubr.f32.gmra.mrb[0].mxu0 %v2125
  %v2514 = vpop.f32.mrb[0].mxu0
  %v2515 = vadd.f32 %v2351, %v2514
  %v2516 = vpop.f32.mrb[0].mxu0
  %2517 = vmatprep.mubr.f32.mxu0 %v2222
  %2518 = vmatmul.mubr.f32.gmra.mrb[0].mxu0 %v2126
  %v2519 = vpop.f32.mrb[0].mxu0
  %v2520 = vadd.f32 %v2351, %v2519
  %v2521 = vpop.f32.mrb[0].mxu0
  %2522 = vmatprep.mubr.f32.mxu0 %v2223
  %2523 = vmatmul.mubr.f32.gmra.mrb[0].mxu0 %v2127
  %v2524 = vpop.f32.mrb[0].mxu0
  %v2525 = vadd.f32 %v2351, %v2524
  %v2526 = vpop.f32.mrb[0].mxu0
  %2527 = vmatprep.mubr.f32.mxu0 %v2224
  %2528 = vmatmul.mubr.f32.gmra.mrb[0].mxu0 %v2128
  %v2529 = vpop.f32.mrb[0].mxu0
  %v2530 = vadd.f32 %v2351, %v2529
  %v2531 = vpop.f32.mrb[0].mxu0
  %2532 = vmatprep.mubr.f32.mxu0 %v2225
  %2533 = vmatmul.mubr.f32.gmra.mrb[0].mxu0 %v2129
  %v2534 = vpop.f32.mrb[0].mxu0
  %v2535 = vadd.f32 %v2351, %v2534
  %v2536 = vpop.f32.mrb[0].mxu0
  %2537 = vmatprep.mubr.f32.mxu0 %v2226
  %2538 = vmatmul.mubr.f32.gmra.mrb[0].mxu0 %v2130
  %v2539 = vpop.f32.mrb[0].mxu0
  %v2540 = vadd.f32 %v2351, %v2539
  %v2541 = vpop.f32.mrb[0].mxu0
  %2542 = vmatprep.mubr.f32.mxu0 %v2227
  %2543 = vmatmul.mubr.f32.gmra.mrb[0].mxu0 %v2131
  %v2544 = vpop.f32.mrb[0].mxu0
  %v2545 = vadd.f32 %v2351, %v2544
  %v2546 = vpop.f32.mrb[0].mxu0
  %2547 = vmatprep.mubr.f32.mxu0 %v2228
  %2548 = vmatmul.mubr.f32.gmra.mrb[0].mxu0 %v2132
  %v2549 = vpop.f32.mrb[0].mxu0
  %v2550 = vadd.f32 %v2351, %v2549
  %v2551 = vpop.f32.mrb[0].mxu0
  %2552 = vmatprep.mubr.f32.mxu0 %v2229
  %2553 = vmatmul.mubr.f32.gmra.mrb[0].mxu0 %v2133
  %v2554 = vpop.f32.mrb[0].mxu0
  %v2555 = vadd.f32 %v2351, %v2554
  %v2556 = vpop.f32.mrb[0].mxu0
  %2557 = vmatprep.mubr.f32.mxu0 %v2230
  %2558 = vmatmul.mubr.f32.gmra.mrb[0].mxu0 %v2134
  %v2559 = vpop.f32.mrb[0].mxu0
  %v2560 = vadd.f32 %v2351, %v2559
  %v2561 = vpop.f32.mrb[0].mxu0
  %2562 = vmatprep.mubr.f32.mxu0 %v2231
  %2563 = vmatmul.mubr.f32.gmra.mrb[0].mxu0 %v2135
  %v2564 = vpop.f32.mrb[0].mxu0
  %v2565 = vadd.f32 %v2351, %v2564
  %v2566 = vpop.f32.mrb[0].mxu0
  %2567 = vmatprep.mubr.f32.mxu0 %v2232
  %2568 = vmatmul.mubr.f32.gmra.mrb[0].mxu0 %v2136
  %v2569 = vpop.f32.mrb[0].mxu0
  %v2570 = vadd.f32 %v2351, %v2569
  %v2571 = vpop.f32.mrb[0].mxu0
  %2572 = vmatprep.mubr.f32.mxu0 %v2233
  %2573 = vmatmul.mubr.f32.gmra.mrb[0].mxu0 %v2137
  %v2574 = vpop.f32.mrb[0].mxu0
  %v2575 = vadd.f32 %v2351, %v2574
  %v2576 = vpop.f32.mrb[0].mxu0
  %2577 = vdwg.mxu0
  %2578 = vmatprep.subr.mxu0 0.0
  %2579 = vmatpush1.msra.mxu0 %v2314
  %2580 = vmatprep.subr.mxu0 0.0
  %2581 = vmatpush1.msra.mxu0 %v2315
  %2582 = vmatprep.subr.mxu0 0.0
  %2583 = vmatpush1.msra.mxu0 %v2316
  %2584 = vmatprep.subr.mxu0 0.0
  %2585 = vmatpush1.msra.mxu0 %v2317
  %2586 = vmatprep.subr.mxu0 0.0
  %2587 = vmatpush1.msra.mxu0 %v2318
  %2588 = vmatprep.subr.mxu0 0.0
  %2589 = vmatpush1.msra.mxu0 %v2319
  %2590 = vmatprep.subr.mxu0 0.0
  %2591 = vmatpush1.msra.mxu0 %v2320
  %2592 = vmatprep.subr.mxu0 0.0
  %2593 = vmatpush1.msra.mxu0 %v2321
  %2594 = vmatprep.subr.mxu0 0.0
  %2595 = vmatpush1.msra.mxu0 %v2322
  %2596 = vmatprep.subr.mxu0 0.0
  %2597 = vmatpush1.msra.mxu0 %v2323
  %2598 = vmatprep.subr.mxu0 0.0
  %2599 = vmatpush1.msra.mxu0 %v2324
  %2600 = vmatprep.subr.mxu0 0.0
  %2601 = vmatpush1.msra.mxu0 %v2325
  %2602 = vmatprep.subr.mxu0 0.0
  %2603 = vmatpush1.msra.mxu0 %v2326
  %2604 = vmatprep.subr.mxu0 0.0
  %2605 = vmatpush1.msra.mxu0 %v2327
  %2606 = vmatprep.subr.mxu0 0.0
  %2607 = vmatpush1.msra.mxu0 %v2328
  %2608 = vmatprep.subr.mxu0 0.0
  %2609 = vmatpush1.msra.mxu0 %v2329
  %2610 = vmatprep.subr.mxu0 0.0
  %2611 = vmatpush1.msra.mxu0 %v2330
  %2612 = vmatprep.subr.mxu0 0.0
  %2613 = vmatpush1.msra.mxu0 %v2331
  %2614 = vmatprep.subr.mxu0 0.0
  %2615 = vmatpush1.msra.mxu0 %v2332
  %2616 = vmatprep.subr.mxu0 0.0
  %2617 = vmatpush1.msra.mxu0 %v2333
  %2618 = vmatprep.subr.mxu0 0.0
  %2619 = vmatpush1.msra.mxu0 %v2334
  %2620 = vmatprep.subr.mxu0 0.0
  %2621 = vmatpush1.msra.mxu0 %v2335
  %2622 = vmatprep.subr.mxu0 0.0
  %2623 = vmatpush1.msra.mxu0 %v2336
  %2624 = vmatprep.subr.mxu0 0.0
  %2625 = vmatpush1.msra.mxu0 %v2337
  %2626 = vmatprep.subr.mxu0 0.0
  %2627 = vmatpush1.msra.mxu0 %v2338
  %2628 = vmatprep.subr.mxu0 0.0
  %2629 = vmatpush1.msra.mxu0 %v2339
  %2630 = vmatprep.subr.mxu0 0.0
  %2631 = vmatpush1.msra.mxu0 %v2340
  %2632 = vmatprep.subr.mxu0 0.0
  %2633 = vmatpush1.msra.mxu0 %v2341
  %2634 = vmatprep.subr.mxu0 0.0
  %2635 = vmatpush1.msra.mxu0 %v2342
  %2636 = vmatprep.subr.mxu0 0.0
  %2637 = vmatpush1.msra.mxu0 %v2343
  %2638 = vmatprep.subr.mxu0 0.0
  %2639 = vmatpush1.msra.mxu0 %v2344
  %2640 = vmatprep.subr.mxu0 0.0
  %2641 = vmatpush1.msra.mxu0 %v2345
  %2642 = vmatprep.mubr.f32.mxu0 %v2203
  %2643 = vmatmul.mubr.f32.gmra.mrb[0].mxu0 %v2107
  %v2644 = vpop.f32.mrb[0].mxu0
  %v2645 = vadd.f32 %v2420, %v2644
  %v2646 = vpop.f32.mrb[0].mxu0
  %2647 = vmatprep.mubr.f32.mxu0 %v2204
  %2648 = vmatmul.mubr.f32.gmra.mrb[0].mxu0 %v2108
  %v2649 = vpop.f32.mrb[0].mxu0
  %v2650 = vadd.f32 %v2425, %v2649
  %v2651 = vpop.f32.mrb[0].mxu0
  %2652 = vmatprep.mubr.f32.mxu0 %v2205
  %2653 = vmatmul.mubr.f32.gmra.mrb[0].mxu0 %v2109
  %v2654 = vpop.f32.mrb[0].mxu0
  %v2655 = vadd.f32 %v2430, %v2654
  %v2656 = vpop.f32.mrb[0].mxu0
  %2657 = vmatprep.mubr.f32.mxu0 %v2274
  %2658 = vmatmul.mubr.f32.gmra.mrb[0].mxu0 %v2250
  %v2659 = vpop.f32.mrb[0].mxu0
  %v2660 = vadd.f32 %v2435, %v2659
  %v2661 = vpop.f32.mrb[0].mxu0
  %2662 = vmatprep.mubr.f32.mxu0 %v2207
  %2663 = vmatmul.mubr.f32.gmra.mrb[0].mxu0 %v2111
  %v2664 = vpop.f32.mrb[0].mxu0
  %v2665 = vadd.f32 %v2440, %v2664
  %v2666 = vpop.f32.mrb[0].mxu0
  %2667 = vmatprep.mubr.f32.mxu0 %v2208
  %2668 = vmatmul.mubr.f32.gmra.mrb[0].mxu0 %v2112
  %v2669 = vpop.f32.mrb[0].mxu0
  %v2670 = vadd.f32 %v2445, %v2669
  %v2671 = vpop.f32.mrb[0].mxu0
  %2672 = vmatprep.mubr.f32.mxu0 %v2209
  %2673 = vmatmul.mubr.f32.gmra.mrb[0].mxu0 %v2113
  %v2674 = vpop.f32.mrb[0].mxu0
  %v2675 = vadd.f32 %v2450, %v2674
  %v2676 = vpop.f32.mrb[0].mxu0
  %2677 = vmatprep.mubr.f32.mxu0 %v2275
  %2678 = vmatmul.mubr.f32.gmra.mrb[0].mxu0 %v2251
  %v2679 = vpop.f32.mrb[0].mxu0
  %v2680 = vadd.f32 %v2455, %v2679
  %v2681 = vpop.f32.mrb[0].mxu0
  %2682 = vmatprep.mubr.f32.mxu0 %v2211
  %2683 = vmatmul.mubr.f32.gmra.mrb[0].mxu0 %v2115
  %v2684 = vpop.f32.mrb[0].mxu0
  %v2685 = vadd.f32 %v2460, %v2684
  %v2686 = vpop.f32.mrb[0].mxu0
  %2687 = vmatprep.mubr.f32.mxu0 %v2212
  %2688 = vmatmul.mubr.f32.gmra.mrb[0].mxu0 %v2116
  %v2689 = vpop.f32.mrb[0].mxu0
  %v2690 = vadd.f32 %v2465, %v2689
  %v2691 = vpop.f32.mrb[0].mxu0
  %2692 = vmatprep.mubr.f32.mxu0 %v2213
  %2693 = vmatmul.mubr.f32.gmra.mrb[0].mxu0 %v2117
  %v2694 = vpop.f32.mrb[0].mxu0
  %v2695 = vadd.f32 %v2470, %v2694
  %v2696 = vpop.f32.mrb[0].mxu0
  %2697 = vmatprep.mubr.f32.mxu0 %v2276
  %2698 = vmatmul.mubr.f32.gmra.mrb[0].mxu0 %v2252
  %v2699 = vpop.f32.mrb[0].mxu0
  %v2700 = vadd.f32 %v2475, %v2699
  %v2701 = vpop.f32.mrb[0].mxu0
  %2702 = vmatprep.mubr.f32.mxu0 %v2215
  %2703 = vmatmul.mubr.f32.gmra.mrb[0].mxu0 %v2119
  %v2704 = vpop.f32.mrb[0].mxu0
  %v2705 = vadd.f32 %v2480, %v2704
  %v2706 = vpop.f32.mrb[0].mxu0
  %2707 = vmatprep.mubr.f32.mxu0 %v2216
  %2708 = vmatmul.mubr.f32.gmra.mrb[0].mxu0 %v2120
  %v2709 = vpop.f32.mrb[0].mxu0
  %v2710 = vadd.f32 %v2485, %v2709
  %v2711 = vpop.f32.mrb[0].mxu0
  %2712 = vmatprep.mubr.f32.mxu0 %v2217
  %2713 = vmatmul.mubr.f32.gmra.mrb[0].mxu0 %v2121
  %v2714 = vpop.f32.mrb[0].mxu0
  %v2715 = vadd.f32 %v2490, %v2714
  %v2716 = vpop.f32.mrb[0].mxu0
  %2717 = vmatprep.mubr.f32.mxu0 %v2277
  %2718 = vmatmul.mubr.f32.gmra.mrb[0].mxu0 %v2253
  %v2719 = vpop.f32.mrb[0].mxu0
  %v2720 = vadd.f32 %v2495, %v2719
  %v2721 = vpop.f32.mrb[0].mxu0
  %2722 = vmatprep.mubr.f32.mxu0 %v2219
  %2723 = vmatmul.mubr.f32.gmra.mrb[0].mxu0 %v2123
  %v2724 = vpop.f32.mrb[0].mxu0
  %v2725 = vadd.f32 %v2500, %v2724
  %v2726 = vpop.f32.mrb[0].mxu0
  %2727 = vmatprep.mubr.f32.mxu0 %v2220
  %2728 = vmatmul.mubr.f32.gmra.mrb[0].mxu0 %v2124
  %v2729 = vpop.f32.mrb[0].mxu0
  %v2730 = vadd.f32 %v2505, %v2729
  %v2731 = vpop.f32.mrb[0].mxu0
  %2732 = vmatprep.mubr.f32.mxu0 %v2221
  %2733 = vmatmul.mubr.f32.gmra.mrb[0].mxu0 %v2125
  %v2734 = vpop.f32.mrb[0].mxu0
  %v2735 = vadd.f32 %v2510, %v2734
  %v2736 = vpop.f32.mrb[0].mxu0
  %2737 = vmatprep.mubr.f32.mxu0 %v2278
  %2738 = vmatmul.mubr.f32.gmra.mrb[0].mxu0 %v2254
  %v2739 = vpop.f32.mrb[0].mxu0
  %v2740 = vadd.f32 %v2515, %v2739
  %v2741 = vpop.f32.mrb[0].mxu0
  %2742 = vmatprep.mubr.f32.mxu0 %v2223
  %2743 = vmatmul.mubr.f32.gmra.mrb[0].mxu0 %v2127
  %v2744 = vpop.f32.mrb[0].mxu0
  %v2745 = vadd.f32 %v2520, %v2744
  %v2746 = vpop.f32.mrb[0].mxu0
  %2747 = vmatprep.mubr.f32.mxu0 %v2224
  %2748 = vmatmul.mubr.f32.gmra.mrb[0].mxu0 %v2128
  %v2749 = vpop.f32.mrb[0].mxu0
  %v2750 = vadd.f32 %v2525, %v2749
  %v2751 = vpop.f32.mrb[0].mxu0
  %2752 = vmatprep.mubr.f32.mxu0 %v2225
  %2753 = vmatmul.mubr.f32.gmra.mrb[0].mxu0 %v2129
  %v2754 = vpop.f32.mrb[0].mxu0
  %v2755 = vadd.f32 %v2530, %v2754
  %v2756 = vpop.f32.mrb[0].mxu0
  %2757 = vmatprep.mubr.f32.mxu0 %v2279
  %2758 = vmatmul.mubr.f32.gmra.mrb[0].mxu0 %v2255
  %v2759 = vpop.f32.mrb[0].mxu0
  %v2760 = vadd.f32 %v2535, %v2759
  %v2761 = vpop.f32.mrb[0].mxu0
  %2762 = vmatprep.mubr.f32.mxu0 %v2227
  %2763 = vmatmul.mubr.f32.gmra.mrb[0].mxu0 %v2131
  %v2764 = vpop.f32.mrb[0].mxu0
  %v2765 = vadd.f32 %v2540, %v2764
  %v2766 = vpop.f32.mrb[0].mxu0
  %2767 = vmatprep.mubr.f32.mxu0 %v2228
  %2768 = vmatmul.mubr.f32.gmra.mrb[0].mxu0 %v2132
  %v2769 = vpop.f32.mrb[0].mxu0
  %v2770 = vadd.f32 %v2545, %v2769
  %v2771 = vpop.f32.mrb[0].mxu0
  %2772 = vmatprep.mubr.f32.mxu0 %v2229
  %2773 = vmatmul.mubr.f32.gmra.mrb[0].mxu0 %v2133
  %v2774 = vpop.f32.mrb[0].mxu0
  %v2775 = vadd.f32 %v2550, %v2774
  %v2776 = vpop.f32.mrb[0].mxu0
  %2777 = vmatprep.mubr.f32.mxu0 %v2280
  %2778 = vmatmul.mubr.f32.gmra.mrb[0].mxu0 %v2256
  %v2779 = vpop.f32.mrb[0].mxu0
  %v2780 = vadd.f32 %v2555, %v2779
  %v2781 = vpop.f32.mrb[0].mxu0
  %2782 = vmatprep.mubr.f32.mxu0 %v2231
  %2783 = vmatmul.mubr.f32.gmra.mrb[0].mxu0 %v2135
  %v2784 = vpop.f32.mrb[0].mxu0
  %v2785 = vadd.f32 %v2560, %v2784
  %v2786 = vpop.f32.mrb[0].mxu0
  %2787 = vmatprep.mubr.f32.mxu0 %v2232
  %2788 = vmatmul.mubr.f32.gmra.mrb[0].mxu0 %v2136
  %v2789 = vpop.f32.mrb[0].mxu0
  %v2790 = vadd.f32 %v2565, %v2789
  %v2791 = vpop.f32.mrb[0].mxu0
  %2792 = vmatprep.mubr.f32.mxu0 %v2233
  %2793 = vmatmul.mubr.f32.gmra.mrb[0].mxu0 %v2137
  %v2794 = vpop.f32.mrb[0].mxu0
  %v2795 = vadd.f32 %v2570, %v2794
  %v2796 = vpop.f32.mrb[0].mxu0
  %2797 = vmatprep.mubr.f32.mxu0 %v2281
  %2798 = vmatmul.mubr.f32.gmra.mrb[0].mxu0 %v2257
  %v2799 = vpop.f32.mrb[0].mxu0
  %v2800 = vadd.f32 %v2575, %v2799
  %v2801 = vpop.f32.mrb[0].mxu0
  %2802 = vdwg.mxu0
  %v2803 = vmax.f32 %v2645, 0.0
  %v2804 = vmax.f32 %v2650, 0.0
  %v2805 = vmax.f32 %v2655, 0.0
  %v2806 = vmax.f32 %v2660, 0.0
  %v2807 = vmax.f32 %v2665, 0.0
  %v2808 = vmax.f32 %v2670, 0.0
  %v2809 = vmax.f32 %v2675, 0.0
  %v2810 = vmax.f32 %v2680, 0.0
  %v2811 = vmax.f32 %v2685, 0.0
  %v2812 = vmax.f32 %v2690, 0.0
  %v2813 = vmax.f32 %v2695, 0.0
  %v2814 = vmax.f32 %v2700, 0.0
  %v2815 = vmax.f32 %v2705, 0.0
  %v2816 = vmax.f32 %v2710, 0.0
  %v2817 = vmax.f32 %v2715, 0.0
  %v2818 = vmax.f32 %v2720, 0.0
  %v2819 = vmax.f32 %v2725, 0.0
  %v2820 = vmax.f32 %v2730, 0.0
  %v2821 = vmax.f32 %v2735, 0.0
  %v2822 = vmax.f32 %v2740, 0.0
  %v2823 = vmax.f32 %v2745, 0.0
  %v2824 = vmax.f32 %v2750, 0.0
  %v2825 = vmax.f32 %v2755, 0.0
  %v2826 = vmax.f32 %v2760, 0.0
  %v2827 = vmax.f32 %v2765, 0.0
  %v2828 = vmax.f32 %v2770, 0.0
  %v2829 = vmax.f32 %v2775, 0.0
  %v2830 = vmax.f32 %v2780, 0.0
  %v2831 = vmax.f32 %v2785, 0.0
  %v2832 = vmax.f32 %v2790, 0.0
  %v2833 = vmax.f32 %v2795, 0.0
  %v2834 = vmax.f32 %v2800, 0.0
  %v2867 = vrot.slane %v2803, 1
  %v2868 = vrot.slane %v2804, 1
  %v2869 = vsel %vm649, %v2867, %v2868
  %v2870 = vrot.slane %v2805, 1
  %v2871 = vsel %vm649, %v2868, %v2870
  %v2872 = vrot.slane %v2806, 1
  %v2873 = vsel %vm649, %v2870, %v2872
  %v2874 = vrot.slane %v2807, 1
  %v2875 = vrot.slane %v2808, 1
  %v2876 = vsel %vm649, %v2874, %v2875
  %v2877 = vrot.slane %v2809, 1
  %v2878 = vsel %vm649, %v2875, %v2877
  %v2879 = vrot.slane %v2810, 1
  %v2880 = vsel %vm649, %v2877, %v2879
  %v2881 = vrot.slane %v2811, 1
  %v2882 = vrot.slane %v2812, 1
  %v2883 = vsel %vm649, %v2881, %v2882
  %v2884 = vrot.slane %v2813, 1
  %v2885 = vsel %vm649, %v2882, %v2884
  %v2886 = vrot.slane %v2814, 1
  %v2887 = vsel %vm649, %v2884, %v2886
  %v2888 = vrot.slane %v2815, 1
  %v2889 = vrot.slane %v2816, 1
  %v2890 = vsel %vm649, %v2888, %v2889
  %v2891 = vrot.slane %v2817, 1
  %v2892 = vsel %vm649, %v2889, %v2891
  %v2893 = vrot.slane %v2818, 1
  %v2894 = vsel %vm649, %v2891, %v2893
  %v2895 = vrot.slane %v2819, 1
  %v2896 = vrot.slane %v2820, 1
  %v2897 = vsel %vm649, %v2895, %v2896
  %v2898 = vrot.slane %v2821, 1
  %v2899 = vsel %vm649, %v2896, %v2898
  %v2900 = vrot.slane %v2822, 1
  %v2901 = vsel %vm649, %v2898, %v2900
  %v2902 = vrot.slane %v2823, 1
  %v2903 = vrot.slane %v2824, 1
  %v2904 = vsel %vm649, %v2902, %v2903
  %v2905 = vrot.slane %v2825, 1
  %v2906 = vsel %vm649, %v2903, %v2905
  %v2907 = vrot.slane %v2826, 1
  %v2908 = vsel %vm649, %v2905, %v2907
  %v2909 = vrot.slane %v2827, 1
  %v2910 = vrot.slane %v2828, 1
  %v2911 = vsel %vm649, %v2909, %v2910
  %v2912 = vrot.slane %v2829, 1
  %v2913 = vsel %vm649, %v2910, %v2912
  %v2914 = vrot.slane %v2830, 1
  %v2915 = vsel %vm649, %v2912, %v2914
  %v2916 = vrot.slane %v2831, 1
  %v2917 = vrot.slane %v2832, 1
  %v2918 = vsel %vm649, %v2916, %v2917
  %v2919 = vrot.slane %v2833, 1
  %v2920 = vsel %vm649, %v2917, %v2919
  %v2921 = vrot.slane %v2834, 1
  %v2922 = vsel %vm649, %v2919, %v2921
  %2923 = vrot.lane.b32.xlu0 %v2869, 64
  %v2924 = vpop.permute.xlu0 %2923
  %2925 = vrot.lane.b32.xlu0 %v2871, 64
  %v2926 = vpop.permute.xlu0 %2925
  %2927 = vrot.lane.b32.xlu0 %v2873, 64
  %v2928 = vpop.permute.xlu0 %2927
  %2929 = vrot.lane.b32.xlu0 %v2876, 64
  %v2930 = vpop.permute.xlu0 %2929
  %2931 = vrot.lane.b32.xlu0 %v2878, 64
  %v2932 = vpop.permute.xlu0 %2931
  %2933 = vrot.lane.b32.xlu0 %v2880, 64
  %v2934 = vpop.permute.xlu0 %2933
  %2935 = vrot.lane.b32.xlu0 %v2883, 64
  %v2936 = vpop.permute.xlu0 %2935
  %2937 = vrot.lane.b32.xlu0 %v2885, 64
  %v2938 = vpop.permute.xlu0 %2937
  %2939 = vrot.lane.b32.xlu0 %v2887, 64
  %v2940 = vpop.permute.xlu0 %2939
  %2941 = vrot.lane.b32.xlu0 %v2890, 64
  %v2942 = vpop.permute.xlu0 %2941
  %2943 = vrot.lane.b32.xlu0 %v2892, 64
  %v2944 = vpop.permute.xlu0 %2943
  %2945 = vrot.lane.b32.xlu0 %v2894, 64
  %v2946 = vpop.permute.xlu0 %2945
  %2947 = vrot.lane.b32.xlu0 %v2897, 64
  %v2948 = vpop.permute.xlu0 %2947
  %2949 = vrot.lane.b32.xlu0 %v2899, 64
  %v2950 = vpop.permute.xlu0 %2949
  %2951 = vrot.lane.b32.xlu0 %v2901, 64
  %v2952 = vpop.permute.xlu0 %2951
  %2953 = vrot.lane.b32.xlu0 %v2904, 64
  %v2954 = vpop.permute.xlu0 %2953
  %2955 = vrot.lane.b32.xlu0 %v2906, 64
  %v2956 = vpop.permute.xlu0 %2955
  %2957 = vrot.lane.b32.xlu0 %v2908, 64
  %v2958 = vpop.permute.xlu0 %2957
  %2959 = vrot.lane.b32.xlu0 %v2911, 64
  %v2960 = vpop.permute.xlu0 %2959
  %2961 = vrot.lane.b32.xlu0 %v2913, 64
  %v2962 = vpop.permute.xlu0 %2961
  %2963 = vrot.lane.b32.xlu0 %v2915, 64
  %v2964 = vpop.permute.xlu0 %2963
  %2965 = vrot.lane.b32.xlu0 %v2918, 64
  %v2966 = vpop.permute.xlu0 %2965
  %2967 = vrot.lane.b32.xlu0 %v2920, 64
  %v2968 = vpop.permute.xlu0 %2967
  %2969 = vrot.lane.b32.xlu0 %v2922, 64
  %v2970 = vpop.permute.xlu0 %2969
  %v2995 = vrot.slane %v2803, 2
  %v2996 = vrot.slane %v2804, 2
  %v2997 = vsel %vm818, %v2995, %v2996
  %v2998 = vrot.slane %v2805, 2
  %v2999 = vsel %vm818, %v2996, %v2998
  %v3000 = vrot.slane %v2806, 2
  %v3001 = vsel %vm818, %v2998, %v3000
  %v3002 = vrot.slane %v2807, 2
  %v3003 = vrot.slane %v2808, 2
  %v3004 = vsel %vm818, %v3002, %v3003
  %v3005 = vrot.slane %v2809, 2
  %v3006 = vsel %vm818, %v3003, %v3005
  %v3007 = vrot.slane %v2810, 2
  %v3008 = vsel %vm818, %v3005, %v3007
  %v3009 = vrot.slane %v2811, 2
  %v3010 = vrot.slane %v2812, 2
  %v3011 = vsel %vm818, %v3009, %v3010
  %v3012 = vrot.slane %v2813, 2
  %v3013 = vsel %vm818, %v3010, %v3012
  %v3014 = vrot.slane %v2814, 2
  %v3015 = vsel %vm818, %v3012, %v3014
  %v3016 = vrot.slane %v2815, 2
  %v3017 = vrot.slane %v2816, 2
  %v3018 = vsel %vm818, %v3016, %v3017
  %v3019 = vrot.slane %v2817, 2
  %v3020 = vsel %vm818, %v3017, %v3019
  %v3021 = vrot.slane %v2818, 2
  %v3022 = vsel %vm818, %v3019, %v3021
  %v3023 = vrot.slane %v2819, 2
  %v3024 = vrot.slane %v2820, 2
  %v3025 = vsel %vm818, %v3023, %v3024
  %v3026 = vrot.slane %v2821, 2
  %v3027 = vsel %vm818, %v3024, %v3026
  %v3028 = vrot.slane %v2822, 2
  %v3029 = vsel %vm818, %v3026, %v3028
  %v3030 = vrot.slane %v2823, 2
  %v3031 = vrot.slane %v2824, 2
  %v3032 = vsel %vm818, %v3030, %v3031
  %v3033 = vrot.slane %v2825, 2
  %v3034 = vsel %vm818, %v3031, %v3033
  %v3035 = vrot.slane %v2826, 2
  %v3036 = vsel %vm818, %v3033, %v3035
  %v3037 = vrot.slane %v2827, 2
  %v3038 = vrot.slane %v2828, 2
  %v3039 = vsel %vm818, %v3037, %v3038
  %v3040 = vrot.slane %v2829, 2
  %v3041 = vsel %vm818, %v3038, %v3040
  %v3042 = vrot.slane %v2830, 2
  %v3043 = vsel %vm818, %v3040, %v3042
  %v3044 = vrot.slane %v2831, 2
  %v3045 = vrot.slane %v2832, 2
  %v3046 = vsel %vm818, %v3044, %v3045
  %v3047 = vrot.slane %v2833, 2
  %v3048 = vsel %vm818, %v3045, %v3047
  %v3049 = vrot.slane %v2834, 2
  %v3050 = vsel %vm818, %v3047, %v3049
  %v3075 = vrot.slane %v2803, 3
  %v3076 = vrot.slane %v2804, 3
  %v3077 = vsel %vm987, %v3075, %v3076
  %v3078 = vrot.slane %v2805, 3
  %v3079 = vsel %vm987, %v3076, %v3078
  %v3080 = vrot.slane %v2806, 3
  %v3081 = vsel %vm987, %v3078, %v3080
  %v3082 = vrot.slane %v2807, 3
  %v3083 = vrot.slane %v2808, 3
  %v3084 = vsel %vm987, %v3082, %v3083
  %v3085 = vrot.slane %v2809, 3
  %v3086 = vsel %vm987, %v3083, %v3085
  %v3087 = vrot.slane %v2810, 3
  %v3088 = vsel %vm987, %v3085, %v3087
  %v3089 = vrot.slane %v2811, 3
  %v3090 = vrot.slane %v2812, 3
  %v3091 = vsel %vm987, %v3089, %v3090
  %v3092 = vrot.slane %v2813, 3
  %v3093 = vsel %vm987, %v3090, %v3092
  %v3094 = vrot.slane %v2814, 3
  %v3095 = vsel %vm987, %v3092, %v3094
  %v3096 = vrot.slane %v2815, 3
  %v3097 = vrot.slane %v2816, 3
  %v3098 = vsel %vm987, %v3096, %v3097
  %v3099 = vrot.slane %v2817, 3
  %v3100 = vsel %vm987, %v3097, %v3099
  %v3101 = vrot.slane %v2818, 3
  %v3102 = vsel %vm987, %v3099, %v3101
  %v3103 = vrot.slane %v2819, 3
  %v3104 = vrot.slane %v2820, 3
  %v3105 = vsel %vm987, %v3103, %v3104
  %v3106 = vrot.slane %v2821, 3
  %v3107 = vsel %vm987, %v3104, %v3106
  %v3108 = vrot.slane %v2822, 3
  %v3109 = vsel %vm987, %v3106, %v3108
  %v3110 = vrot.slane %v2823, 3
  %v3111 = vrot.slane %v2824, 3
  %v3112 = vsel %vm987, %v3110, %v3111
  %v3113 = vrot.slane %v2825, 3
  %v3114 = vsel %vm987, %v3111, %v3113
  %v3115 = vrot.slane %v2826, 3
  %v3116 = vsel %vm987, %v3113, %v3115
  %v3117 = vrot.slane %v2827, 3
  %v3118 = vrot.slane %v2828, 3
  %v3119 = vsel %vm987, %v3117, %v3118
  %v3120 = vrot.slane %v2829, 3
  %v3121 = vsel %vm987, %v3118, %v3120
  %v3122 = vrot.slane %v2830, 3
  %v3123 = vsel %vm987, %v3120, %v3122
  %v3124 = vrot.slane %v2831, 3
  %v3125 = vrot.slane %v2832, 3
  %v3126 = vsel %vm987, %v3124, %v3125
  %v3127 = vrot.slane %v2833, 3
  %v3128 = vsel %vm987, %v3125, %v3127
  %v3129 = vrot.slane %v2834, 3
  %v3130 = vsel %vm987, %v3127, %v3129
  %3131 = vrot.lane.b32.xlu0 %v3077, 64
  %v3132 = vpop.permute.xlu0 %3131
  %3133 = vrot.lane.b32.xlu0 %v3079, 64
  %v3134 = vpop.permute.xlu0 %3133
  %3135 = vrot.lane.b32.xlu0 %v3081, 64
  %v3136 = vpop.permute.xlu0 %3135
  %3137 = vrot.lane.b32.xlu0 %v3084, 64
  %v3138 = vpop.permute.xlu0 %3137
  %3139 = vrot.lane.b32.xlu0 %v3086, 64
  %v3140 = vpop.permute.xlu0 %3139
  %3141 = vrot.lane.b32.xlu0 %v3088, 64
  %v3142 = vpop.permute.xlu0 %3141
  %3143 = vrot.lane.b32.xlu0 %v3091, 64
  %v3144 = vpop.permute.xlu0 %3143
  %3145 = vrot.lane.b32.xlu0 %v3093, 64
  %v3146 = vpop.permute.xlu0 %3145
  %3147 = vrot.lane.b32.xlu0 %v3095, 64
  %v3148 = vpop.permute.xlu0 %3147
  %3149 = vrot.lane.b32.xlu0 %v3098, 64
  %v3150 = vpop.permute.xlu0 %3149
  %3151 = vrot.lane.b32.xlu0 %v3100, 64
  %v3152 = vpop.permute.xlu0 %3151
  %3153 = vrot.lane.b32.xlu0 %v3102, 64
  %v3154 = vpop.permute.xlu0 %3153
  %3155 = vrot.lane.b32.xlu0 %v3105, 64
  %v3156 = vpop.permute.xlu0 %3155
  %3157 = vrot.lane.b32.xlu0 %v3107, 64
  %v3158 = vpop.permute.xlu0 %3157
  %3159 = vrot.lane.b32.xlu0 %v3109, 64
  %v3160 = vpop.permute.xlu0 %3159
  %3161 = vrot.lane.b32.xlu0 %v3112, 64
  %v3162 = vpop.permute.xlu0 %3161
  %3163 = vrot.lane.b32.xlu0 %v3114, 64
  %v3164 = vpop.permute.xlu0 %3163
  %3165 = vrot.lane.b32.xlu0 %v3116, 64
  %v3166 = vpop.permute.xlu0 %3165
  %3167 = vrot.lane.b32.xlu0 %v3119, 64
  %v3168 = vpop.permute.xlu0 %3167
  %3169 = vrot.lane.b32.xlu0 %v3121, 64
  %v3170 = vpop.permute.xlu0 %3169
  %3171 = vrot.lane.b32.xlu0 %v3123, 64
  %v3172 = vpop.permute.xlu0 %3171
  %3173 = vrot.lane.b32.xlu0 %v3126, 64
  %v3174 = vpop.permute.xlu0 %3173
  %3175 = vrot.lane.b32.xlu0 %v3128, 64
  %v3176 = vpop.permute.xlu0 %3175
  %3177 = vrot.lane.b32.xlu0 %v3130, 64
  %v3178 = vpop.permute.xlu0 %3177
  %v3203 = vrot.slane %v2803, 4
  %v3204 = vrot.slane %v2804, 4
  %v3205 = vsel %vm1156, %v3203, %v3204
  %v3206 = vrot.slane %v2805, 4
  %v3207 = vsel %vm1156, %v3204, %v3206
  %v3208 = vrot.slane %v2806, 4
  %v3209 = vsel %vm1156, %v3206, %v3208
  %v3210 = vrot.slane %v2807, 4
  %v3211 = vrot.slane %v2808, 4
  %v3212 = vsel %vm1156, %v3210, %v3211
  %v3213 = vrot.slane %v2809, 4
  %v3214 = vsel %vm1156, %v3211, %v3213
  %v3215 = vrot.slane %v2810, 4
  %v3216 = vsel %vm1156, %v3213, %v3215
  %v3217 = vrot.slane %v2811, 4
  %v3218 = vrot.slane %v2812, 4
  %v3219 = vsel %vm1156, %v3217, %v3218
  %v3220 = vrot.slane %v2813, 4
  %v3221 = vsel %vm1156, %v3218, %v3220
  %v3222 = vrot.slane %v2814, 4
  %v3223 = vsel %vm1156, %v3220, %v3222
  %v3224 = vrot.slane %v2815, 4
  %v3225 = vrot.slane %v2816, 4
  %v3226 = vsel %vm1156, %v3224, %v3225
  %v3227 = vrot.slane %v2817, 4
  %v3228 = vsel %vm1156, %v3225, %v3227
  %v3229 = vrot.slane %v2818, 4
  %v3230 = vsel %vm1156, %v3227, %v3229
  %v3231 = vrot.slane %v2819, 4
  %v3232 = vrot.slane %v2820, 4
  %v3233 = vsel %vm1156, %v3231, %v3232
  %v3234 = vrot.slane %v2821, 4
  %v3235 = vsel %vm1156, %v3232, %v3234
  %v3236 = vrot.slane %v2822, 4
  %v3237 = vsel %vm1156, %v3234, %v3236
  %v3238 = vrot.slane %v2823, 4
  %v3239 = vrot.slane %v2824, 4
  %v3240 = vsel %vm1156, %v3238, %v3239
  %v3241 = vrot.slane %v2825, 4
  %v3242 = vsel %vm1156, %v3239, %v3241
  %v3243 = vrot.slane %v2826, 4
  %v3244 = vsel %vm1156, %v3241, %v3243
  %v3245 = vrot.slane %v2827, 4
  %v3246 = vrot.slane %v2828, 4
  %v3247 = vsel %vm1156, %v3245, %v3246
  %v3248 = vrot.slane %v2829, 4
  %v3249 = vsel %vm1156, %v3246, %v3248
  %v3250 = vrot.slane %v2830, 4
  %v3251 = vsel %vm1156, %v3248, %v3250
  %v3252 = vrot.slane %v2831, 4
  %v3253 = vrot.slane %v2832, 4
  %v3254 = vsel %vm1156, %v3252, %v3253
  %v3255 = vrot.slane %v2833, 4
  %v3256 = vsel %vm1156, %v3253, %v3255
  %v3257 = vrot.slane %v2834, 4
  %v3258 = vsel %vm1156, %v3255, %v3257
  %v3283 = vrot.slane %v2803, 5
  %v3284 = vrot.slane %v2804, 5
  %v3285 = vsel %vm1261, %v3283, %v3284
  %v3286 = vrot.slane %v2805, 5
  %v3287 = vsel %vm1261, %v3284, %v3286
  %v3288 = vrot.slane %v2806, 5
  %v3289 = vsel %vm1261, %v3286, %v3288
  %v3290 = vrot.slane %v2807, 5
  %v3291 = vrot.slane %v2808, 5
  %v3292 = vsel %vm1261, %v3290, %v3291
  %v3293 = vrot.slane %v2809, 5
  %v3294 = vsel %vm1261, %v3291, %v3293
  %v3295 = vrot.slane %v2810, 5
  %v3296 = vsel %vm1261, %v3293, %v3295
  %v3297 = vrot.slane %v2811, 5
  %v3298 = vrot.slane %v2812, 5
  %v3299 = vsel %vm1261, %v3297, %v3298
  %v3300 = vrot.slane %v2813, 5
  %v3301 = vsel %vm1261, %v3298, %v3300
  %v3302 = vrot.slane %v2814, 5
  %v3303 = vsel %vm1261, %v3300, %v3302
  %v3304 = vrot.slane %v2815, 5
  %v3305 = vrot.slane %v2816, 5
  %v3306 = vsel %vm1261, %v3304, %v3305
  %v3307 = vrot.slane %v2817, 5
  %v3308 = vsel %vm1261, %v3305, %v3307
  %v3309 = vrot.slane %v2818, 5
  %v3310 = vsel %vm1261, %v3307, %v3309
  %v3311 = vrot.slane %v2819, 5
  %v3312 = vrot.slane %v2820, 5
  %v3313 = vsel %vm1261, %v3311, %v3312
  %v3314 = vrot.slane %v2821, 5
  %v3315 = vsel %vm1261, %v3312, %v3314
  %v3316 = vrot.slane %v2822, 5
  %v3317 = vsel %vm1261, %v3314, %v3316
  %v3318 = vrot.slane %v2823, 5
  %v3319 = vrot.slane %v2824, 5
  %v3320 = vsel %vm1261, %v3318, %v3319
  %v3321 = vrot.slane %v2825, 5
  %v3322 = vsel %vm1261, %v3319, %v3321
  %v3323 = vrot.slane %v2826, 5
  %v3324 = vsel %vm1261, %v3321, %v3323
  %v3325 = vrot.slane %v2827, 5
  %v3326 = vrot.slane %v2828, 5
  %v3327 = vsel %vm1261, %v3325, %v3326
  %v3328 = vrot.slane %v2829, 5
  %v3329 = vsel %vm1261, %v3326, %v3328
  %v3330 = vrot.slane %v2830, 5
  %v3331 = vsel %vm1261, %v3328, %v3330
  %v3332 = vrot.slane %v2831, 5
  %v3333 = vrot.slane %v2832, 5
  %v3334 = vsel %vm1261, %v3332, %v3333
  %v3335 = vrot.slane %v2833, 5
  %v3336 = vsel %vm1261, %v3333, %v3335
  %v3337 = vrot.slane %v2834, 5
  %v3338 = vsel %vm1261, %v3335, %v3337
  %3339 = vrot.lane.b32.xlu0 %v3285, 64
  %v3340 = vpop.permute.xlu0 %3339
  %3341 = vrot.lane.b32.xlu0 %v3287, 64
  %v3342 = vpop.permute.xlu0 %3341
  %3343 = vrot.lane.b32.xlu0 %v3289, 64
  %v3344 = vpop.permute.xlu0 %3343
  %3345 = vrot.lane.b32.xlu0 %v3292, 64
  %v3346 = vpop.permute.xlu0 %3345
  %3347 = vrot.lane.b32.xlu0 %v3294, 64
  %v3348 = vpop.permute.xlu0 %3347
  %3349 = vrot.lane.b32.xlu0 %v3296, 64
  %v3350 = vpop.permute.xlu0 %3349
  %3351 = vrot.lane.b32.xlu0 %v3299, 64
  %v3352 = vpop.permute.xlu0 %3351
  %3353 = vrot.lane.b32.xlu0 %v3301, 64
  %v3354 = vpop.permute.xlu0 %3353
  %3355 = vrot.lane.b32.xlu0 %v3303, 64
  %v3356 = vpop.permute.xlu0 %3355
  %3357 = vrot.lane.b32.xlu0 %v3306, 64
  %v3358 = vpop.permute.xlu0 %3357
  %3359 = vrot.lane.b32.xlu0 %v3308, 64
  %v3360 = vpop.permute.xlu0 %3359
  %3361 = vrot.lane.b32.xlu0 %v3310, 64
  %v3362 = vpop.permute.xlu0 %3361
  %3363 = vrot.lane.b32.xlu0 %v3313, 64
  %v3364 = vpop.permute.xlu0 %3363
  %3365 = vrot.lane.b32.xlu0 %v3315, 64
  %v3366 = vpop.permute.xlu0 %3365
  %3367 = vrot.lane.b32.xlu0 %v3317, 64
  %v3368 = vpop.permute.xlu0 %3367
  %3369 = vrot.lane.b32.xlu0 %v3320, 64
  %v3370 = vpop.permute.xlu0 %3369
  %3371 = vrot.lane.b32.xlu0 %v3322, 64
  %v3372 = vpop.permute.xlu0 %3371
  %3373 = vrot.lane.b32.xlu0 %v3324, 64
  %v3374 = vpop.permute.xlu0 %3373
  %3375 = vrot.lane.b32.xlu0 %v3327, 64
  %v3376 = vpop.permute.xlu0 %3375
  %3377 = vrot.lane.b32.xlu0 %v3329, 64
  %v3378 = vpop.permute.xlu0 %3377
  %3379 = vrot.lane.b32.xlu0 %v3331, 64
  %v3380 = vpop.permute.xlu0 %3379
  %3381 = vrot.lane.b32.xlu0 %v3334, 64
  %v3382 = vpop.permute.xlu0 %3381
  %3383 = vrot.lane.b32.xlu0 %v3336, 64
  %v3384 = vpop.permute.xlu0 %3383
  %3385 = vrot.lane.b32.xlu0 %v3338, 64
  %v3386 = vpop.permute.xlu0 %3385
  %v3411 = vrot.slane %v2803, 6
  %v3412 = vrot.slane %v2804, 6
  %v3413 = vsel %vm1430, %v3411, %v3412
  %v3414 = vrot.slane %v2805, 6
  %v3415 = vsel %vm1430, %v3412, %v3414
  %v3416 = vrot.slane %v2806, 6
  %v3417 = vsel %vm1430, %v3414, %v3416
  %v3418 = vrot.slane %v2807, 6
  %v3419 = vrot.slane %v2808, 6
  %v3420 = vsel %vm1430, %v3418, %v3419
  %v3421 = vrot.slane %v2809, 6
  %v3422 = vsel %vm1430, %v3419, %v3421
  %v3423 = vrot.slane %v2810, 6
  %v3424 = vsel %vm1430, %v3421, %v3423
  %v3425 = vrot.slane %v2811, 6
  %v3426 = vrot.slane %v2812, 6
  %v3427 = vsel %vm1430, %v3425, %v3426
  %v3428 = vrot.slane %v2813, 6
  %v3429 = vsel %vm1430, %v3426, %v3428
  %v3430 = vrot.slane %v2814, 6
  %v3431 = vsel %vm1430, %v3428, %v3430
  %v3432 = vrot.slane %v2815, 6
  %v3433 = vrot.slane %v2816, 6
  %v3434 = vsel %vm1430, %v3432, %v3433
  %v3435 = vrot.slane %v2817, 6
  %v3436 = vsel %vm1430, %v3433, %v3435
  %v3437 = vrot.slane %v2818, 6
  %v3438 = vsel %vm1430, %v3435, %v3437
  %v3439 = vrot.slane %v2819, 6
  %v3440 = vrot.slane %v2820, 6
  %v3441 = vsel %vm1430, %v3439, %v3440
  %v3442 = vrot.slane %v2821, 6
  %v3443 = vsel %vm1430, %v3440, %v3442
  %v3444 = vrot.slane %v2822, 6
  %v3445 = vsel %vm1430, %v3442, %v3444
  %v3446 = vrot.slane %v2823, 6
  %v3447 = vrot.slane %v2824, 6
  %v3448 = vsel %vm1430, %v3446, %v3447
  %v3449 = vrot.slane %v2825, 6
  %v3450 = vsel %vm1430, %v3447, %v3449
  %v3451 = vrot.slane %v2826, 6
  %v3452 = vsel %vm1430, %v3449, %v3451
  %v3453 = vrot.slane %v2827, 6
  %v3454 = vrot.slane %v2828, 6
  %v3455 = vsel %vm1430, %v3453, %v3454
  %v3456 = vrot.slane %v2829, 6
  %v3457 = vsel %vm1430, %v3454, %v3456
  %v3458 = vrot.slane %v2830, 6
  %v3459 = vsel %vm1430, %v3456, %v3458
  %v3460 = vrot.slane %v2831, 6
  %v3461 = vrot.slane %v2832, 6
  %v3462 = vsel %vm1430, %v3460, %v3461
  %v3463 = vrot.slane %v2833, 6
  %v3464 = vsel %vm1430, %v3461, %v3463
  %v3465 = vrot.slane %v2834, 6
  %v3466 = vsel %vm1430, %v3463, %v3465
  %v3491 = vrot.slane %v2803, 7
  %v3492 = vrot.slane %v2804, 7
  %v3493 = vsel %vm1599, %v3491, %v3492
  %v3494 = vrot.slane %v2805, 7
  %v3495 = vsel %vm1599, %v3492, %v3494
  %v3496 = vrot.slane %v2806, 7
  %v3497 = vsel %vm1599, %v3494, %v3496
  %v3498 = vrot.slane %v2807, 7
  %v3499 = vrot.slane %v2808, 7
  %v3500 = vsel %vm1599, %v3498, %v3499
  %v3501 = vrot.slane %v2809, 7
  %v3502 = vsel %vm1599, %v3499, %v3501
  %v3503 = vrot.slane %v2810, 7
  %v3504 = vsel %vm1599, %v3501, %v3503
  %v3505 = vrot.slane %v2811, 7
  %v3506 = vrot.slane %v2812, 7
  %v3507 = vsel %vm1599, %v3505, %v3506
  %v3508 = vrot.slane %v2813, 7
  %v3509 = vsel %vm1599, %v3506, %v3508
  %v3510 = vrot.slane %v2814, 7
  %v3511 = vsel %vm1599, %v3508, %v3510
  %v3512 = vrot.slane %v2815, 7
  %v3513 = vrot.slane %v2816, 7
  %v3514 = vsel %vm1599, %v3512, %v3513
  %v3515 = vrot.slane %v2817, 7
  %v3516 = vsel %vm1599, %v3513, %v3515
  %v3517 = vrot.slane %v2818, 7
  %v3518 = vsel %vm1599, %v3515, %v3517
  %v3519 = vrot.slane %v2819, 7
  %v3520 = vrot.slane %v2820, 7
  %v3521 = vsel %vm1599, %v3519, %v3520
  %v3522 = vrot.slane %v2821, 7
  %v3523 = vsel %vm1599, %v3520, %v3522
  %v3524 = vrot.slane %v2822, 7
  %v3525 = vsel %vm1599, %v3522, %v3524
  %v3526 = vrot.slane %v2823, 7
  %v3527 = vrot.slane %v2824, 7
  %v3528 = vsel %vm1599, %v3526, %v3527
  %v3529 = vrot.slane %v2825, 7
  %v3530 = vsel %vm1599, %v3527, %v3529
  %v3531 = vrot.slane %v2826, 7
  %v3532 = vsel %vm1599, %v3529, %v3531
  %v3533 = vrot.slane %v2827, 7
  %v3534 = vrot.slane %v2828, 7
  %v3535 = vsel %vm1599, %v3533, %v3534
  %v3536 = vrot.slane %v2829, 7
  %v3537 = vsel %vm1599, %v3534, %v3536
  %v3538 = vrot.slane %v2830, 7
  %v3539 = vsel %vm1599, %v3536, %v3538
  %v3540 = vrot.slane %v2831, 7
  %v3541 = vrot.slane %v2832, 7
  %v3542 = vsel %vm1599, %v3540, %v3541
  %v3543 = vrot.slane %v2833, 7
  %v3544 = vsel %vm1599, %v3541, %v3543
  %v3545 = vrot.slane %v2834, 7
  %v3546 = vsel %vm1599, %v3543, %v3545
  %3547 = vrot.lane.b32.xlu0 %v3493, 64
  %v3548 = vpop.permute.xlu0 %3547
  %3549 = vrot.lane.b32.xlu0 %v3495, 64
  %v3550 = vpop.permute.xlu0 %3549
  %3551 = vrot.lane.b32.xlu0 %v3497, 64
  %v3552 = vpop.permute.xlu0 %3551
  %3553 = vrot.lane.b32.xlu0 %v3500, 64
  %v3554 = vpop.permute.xlu0 %3553
  %3555 = vrot.lane.b32.xlu0 %v3502, 64
  %v3556 = vpop.permute.xlu0 %3555
  %3557 = vrot.lane.b32.xlu0 %v3504, 64
  %v3558 = vpop.permute.xlu0 %3557
  %3559 = vrot.lane.b32.xlu0 %v3507, 64
  %v3560 = vpop.permute.xlu0 %3559
  %3561 = vrot.lane.b32.xlu0 %v3509, 64
  %v3562 = vpop.permute.xlu0 %3561
  %3563 = vrot.lane.b32.xlu0 %v3511, 64
  %v3564 = vpop.permute.xlu0 %3563
  %3565 = vrot.lane.b32.xlu0 %v3514, 64
  %v3566 = vpop.permute.xlu0 %3565
  %3567 = vrot.lane.b32.xlu0 %v3516, 64
  %v3568 = vpop.permute.xlu0 %3567
  %3569 = vrot.lane.b32.xlu0 %v3518, 64
  %v3570 = vpop.permute.xlu0 %3569
  %3571 = vrot.lane.b32.xlu0 %v3521, 64
  %v3572 = vpop.permute.xlu0 %3571
  %3573 = vrot.lane.b32.xlu0 %v3523, 64
  %v3574 = vpop.permute.xlu0 %3573
  %3575 = vrot.lane.b32.xlu0 %v3525, 64
  %v3576 = vpop.permute.xlu0 %3575
  %3577 = vrot.lane.b32.xlu0 %v3528, 64
  %v3578 = vpop.permute.xlu0 %3577
  %3579 = vrot.lane.b32.xlu0 %v3530, 64
  %v3580 = vpop.permute.xlu0 %3579
  %3581 = vrot.lane.b32.xlu0 %v3532, 64
  %v3582 = vpop.permute.xlu0 %3581
  %3583 = vrot.lane.b32.xlu0 %v3535, 64
  %v3584 = vpop.permute.xlu0 %3583
  %3585 = vrot.lane.b32.xlu0 %v3537, 64
  %v3586 = vpop.permute.xlu0 %3585
  %3587 = vrot.lane.b32.xlu0 %v3539, 64
  %v3588 = vpop.permute.xlu0 %3587
  %3589 = vrot.lane.b32.xlu0 %v3542, 64
  %v3590 = vpop.permute.xlu0 %3589
  %3591 = vrot.lane.b32.xlu0 %v3544, 64
  %v3592 = vpop.permute.xlu0 %3591
  %3593 = vrot.lane.b32.xlu0 %v3546, 64
  %v3594 = vpop.permute.xlu0 %3593
  %v3619 = vsel %vm2073, %v2803, %v2924
  %v3620 = vsel %vm2073, %v2804, %v2926
  %v3621 = vsel %vm2073, %v2805, %v2928
  %v3622 = vsel %vm2073, %v2807, %v2930
  %v3623 = vsel %vm2073, %v2808, %v2932
  %v3624 = vsel %vm2073, %v2809, %v2934
  %v3625 = vsel %vm2073, %v2811, %v2936
  %v3626 = vsel %vm2073, %v2812, %v2938
  %v3627 = vsel %vm2073, %v2813, %v2940
  %v3628 = vsel %vm2073, %v2815, %v2942
  %v3629 = vsel %vm2073, %v2816, %v2944
  %v3630 = vsel %vm2073, %v2817, %v2946
  %v3631 = vsel %vm2073, %v2819, %v2948
  %v3632 = vsel %vm2073, %v2820, %v2950
  %v3633 = vsel %vm2073, %v2821, %v2952
  %v3634 = vsel %vm2073, %v2823, %v2954
  %v3635 = vsel %vm2073, %v2824, %v2956
  %v3636 = vsel %vm2073, %v2825, %v2958
  %v3637 = vsel %vm2073, %v2827, %v2960
  %v3638 = vsel %vm2073, %v2828, %v2962
  %v3639 = vsel %vm2073, %v2829, %v2964
  %v3640 = vsel %vm2073, %v2831, %v2966
  %v3641 = vsel %vm2073, %v2832, %v2968
  %v3642 = vsel %vm2073, %v2833, %v2970
  %v3643 = vsel %vm2073, %v2997, %v3132
  %v3644 = vsel %vm2073, %v2999, %v3134
  %v3645 = vsel %vm2073, %v3001, %v3136
  %v3646 = vsel %vm2073, %v3004, %v3138
  %v3647 = vsel %vm2073, %v3006, %v3140
  %v3648 = vsel %vm2073, %v3008, %v3142
  %v3649 = vsel %vm2073, %v3011, %v3144
  %v3650 = vsel %vm2073, %v3013, %v3146
  %v3651 = vsel %vm2073, %v3015, %v3148
  %v3652 = vsel %vm2073, %v3018, %v3150
  %v3653 = vsel %vm2073, %v3020, %v3152
  %v3654 = vsel %vm2073, %v3022, %v3154
  %v3655 = vsel %vm2073, %v3025, %v3156
  %v3656 = vsel %vm2073, %v3027, %v3158
  %v3657 = vsel %vm2073, %v3029, %v3160
  %v3658 = vsel %vm2073, %v3032, %v3162
  %v3659 = vsel %vm2073, %v3034, %v3164
  %v3660 = vsel %vm2073, %v3036, %v3166
  %v3661 = vsel %vm2073, %v3039, %v3168
  %v3662 = vsel %vm2073, %v3041, %v3170
  %v3663 = vsel %vm2073, %v3043, %v3172
  %v3664 = vsel %vm2073, %v3046, %v3174
  %v3665 = vsel %vm2073, %v3048, %v3176
  %v3666 = vsel %vm2073, %v3050, %v3178
  %v3667 = vsel %vm2073, %v3205, %v3340
  %v3668 = vsel %vm2073, %v3207, %v3342
  %v3669 = vsel %vm2073, %v3209, %v3344
  %v3670 = vsel %vm2073, %v3212, %v3346
  %v3671 = vsel %vm2073, %v3214, %v3348
  %v3672 = vsel %vm2073, %v3216, %v3350
  %v3673 = vsel %vm2073, %v3219, %v3352
  %v3674 = vsel %vm2073, %v3221, %v3354
  %v3675 = vsel %vm2073, %v3223, %v3356
  %v3676 = vsel %vm2073, %v3226, %v3358
  %v3677 = vsel %vm2073, %v3228, %v3360
  %v3678 = vsel %vm2073, %v3230, %v3362
  %v3679 = vsel %vm2073, %v3233, %v3364
  %v3680 = vsel %vm2073, %v3235, %v3366
  %v3681 = vsel %vm2073, %v3237, %v3368
  %v3682 = vsel %vm2073, %v3240, %v3370
  %v3683 = vsel %vm2073, %v3242, %v3372
  %v3684 = vsel %vm2073, %v3244, %v3374
  %v3685 = vsel %vm2073, %v3247, %v3376
  %v3686 = vsel %vm2073, %v3249, %v3378
  %v3687 = vsel %vm2073, %v3251, %v3380
  %v3688 = vsel %vm2073, %v3254, %v3382
  %v3689 = vsel %vm2073, %v3256, %v3384
  %v3690 = vsel %vm2073, %v3258, %v3386
  %v3691 = vsel %vm2073, %v3413, %v3548
  %v3692 = vsel %vm2073, %v3415, %v3550
  %v3693 = vsel %vm2073, %v3417, %v3552
  %v3694 = vsel %vm2073, %v3420, %v3554
  %v3695 = vsel %vm2073, %v3422, %v3556
  %v3696 = vsel %vm2073, %v3424, %v3558
  %v3697 = vsel %vm2073, %v3427, %v3560
  %v3698 = vsel %vm2073, %v3429, %v3562
  %v3699 = vsel %vm2073, %v3431, %v3564
  %v3700 = vsel %vm2073, %v3434, %v3566
  %v3701 = vsel %vm2073, %v3436, %v3568
  %v3702 = vsel %vm2073, %v3438, %v3570
  %v3703 = vsel %vm2073, %v3441, %v3572
  %v3704 = vsel %vm2073, %v3443, %v3574
  %v3705 = vsel %vm2073, %v3445, %v3576
  %v3706 = vsel %vm2073, %v3448, %v3578
  %v3707 = vsel %vm2073, %v3450, %v3580
  %v3708 = vsel %vm2073, %v3452, %v3582
  %v3709 = vsel %vm2073, %v3455, %v3584
  %v3710 = vsel %vm2073, %v3457, %v3586
  %v3711 = vsel %vm2073, %v3459, %v3588
  %v3712 = vsel %vm2073, %v3462, %v3590
  %v3713 = vsel %vm2073, %v3464, %v3592
  %v3714 = vsel %vm2073, %v3466, %v3594
  %v3715 = vld [vmem:[%s5] sm:$0xff]
  %v3716 = vld [vmem:[%s5 + $0x8] sm:$0xff]
  %v3717 = vld [vmem:[%s5 + $0x10] sm:$0xff]
  %v3718 = vld [vmem:[%s5 + $0x18] sm:$0xff]
  %v3719 = vld [vmem:[%s5 + $0x20] sm:$0xff]
  %v3720 = vld [vmem:[%s5 + $0x28] sm:$0xff]
  %v3721 = vld [vmem:[%s5 + $0x30] sm:$0xff]
  %v3722 = vld [vmem:[%s5 + $0x38] sm:$0xff]
  %v3723 = vld [vmem:[%s5 + $0x40] sm:$0xff]
  %v3724 = vld [vmem:[%s5 + $0x48] sm:$0xff]
  %v3725 = vld [vmem:[%s5 + $0x50] sm:$0xff]
  %v3726 = vld [vmem:[%s5 + $0x58] sm:$0xff]
  %v3727 = vld [vmem:[%s5 + $0x60] sm:$0xff]
  %v3728 = vld [vmem:[%s5 + $0x68] sm:$0xff]
  %v3729 = vld [vmem:[%s5 + $0x70] sm:$0xff]
  %v3730 = vld [vmem:[%s5 + $0x78] sm:$0xff]
  %v3731 = vld [vmem:[%s5 + $0x80] sm:$0xff]
  %v3732 = vld [vmem:[%s5 + $0x88] sm:$0xff]
  %v3733 = vld [vmem:[%s5 + $0x90] sm:$0xff]
  %v3734 = vld [vmem:[%s5 + $0x98] sm:$0xff]
  %v3735 = vld [vmem:[%s5 + $0xa0] sm:$0xff]
  %v3736 = vld [vmem:[%s5 + $0xa8] sm:$0xff]
  %v3737 = vld [vmem:[%s5 + $0xb0] sm:$0xff]
  %v3738 = vld [vmem:[%s5 + $0xb8] sm:$0xff]
  %v3739 = vld [vmem:[%s5 + $0xc0] sm:$0xff]
  %v3740 = vld [vmem:[%s5 + $0xc8] sm:$0xff]
  %v3741 = vld [vmem:[%s5 + $0xd0] sm:$0xff]
  %v3742 = vld [vmem:[%s5 + $0xd8] sm:$0xff]
  %v3743 = vld [vmem:[%s5 + $0xe0] sm:$0xff]
  %v3744 = vld [vmem:[%s5 + $0xe8] sm:$0xff]
  %v3745 = vld [vmem:[%s5 + $0xf0] sm:$0xff]
  %v3746 = vld [vmem:[%s5 + $0xf8] sm:$0xff]
  %v3747 = vld [vmem:[%s5 + $0x100] sm:$0xff]
  %v3748 = vld [vmem:[%s5 + $0x108] sm:$0xff]
  %v3749 = vld [vmem:[%s5 + $0x110] sm:$0xff]
  %v3750 = vld [vmem:[%s5 + $0x118] sm:$0xff]
  %v3751 = vld [vmem:[%s5 + $0x120] sm:$0xff]
  %v3752 = vld [vmem:[%s5 + $0x128] sm:$0xff]
  %v3753 = vld [vmem:[%s5 + $0x130] sm:$0xff]
  %v3754 = vld [vmem:[%s5 + $0x138] sm:$0xff]
  %v3755 = vld [vmem:[%s5 + $0x140] sm:$0xff]
  %v3756 = vld [vmem:[%s5 + $0x148] sm:$0xff]
  %v3757 = vld [vmem:[%s5 + $0x150] sm:$0xff]
  %v3758 = vld [vmem:[%s5 + $0x158] sm:$0xff]
  %v3759 = vld [vmem:[%s5 + $0x160] sm:$0xff]
  %v3760 = vld [vmem:[%s5 + $0x168] sm:$0xff]
  %v3761 = vld [vmem:[%s5 + $0x170] sm:$0xff]
  %v3762 = vld [vmem:[%s5 + $0x178] sm:$0xff]
  %v3763 = vld [vmem:[%s5 + $0x180] sm:$0xff]
  %v3764 = vld [vmem:[%s5 + $0x188] sm:$0xff]
  %v3765 = vld [vmem:[%s5 + $0x190] sm:$0xff]
  %v3766 = vld [vmem:[%s5 + $0x198] sm:$0xff]
  %v3767 = vld [vmem:[%s5 + $0x1a0] sm:$0xff]
  %v3768 = vld [vmem:[%s5 + $0x1a8] sm:$0xff]
  %v3769 = vld [vmem:[%s5 + $0x1b0] sm:$0xff]
  %v3770 = vld [vmem:[%s5 + $0x1b8] sm:$0xff]
  %v3771 = vld [vmem:[%s5 + $0x1c0] sm:$0xff]
  %v3772 = vld [vmem:[%s5 + $0x1c8] sm:$0xff]
  %v3773 = vld [vmem:[%s5 + $0x1d0] sm:$0xff]
  %v3774 = vld [vmem:[%s5 + $0x1d8] sm:$0xff]
  %v3775 = vld [vmem:[%s5 + $0x1e0] sm:$0xff]
  %v3776 = vld [vmem:[%s5 + $0x1e8] sm:$0xff]
  %v3777 = vld [vmem:[%s5 + $0x1f0] sm:$0xff]
  %v3778 = vld [vmem:[%s5 + $0x1f8] sm:$0xff]
  %v3779 = vld [vmem:[%s6] sm:$0x1]
  %v3781 = vlaneseq
  %v3782 = vshrl.u32 %v3781, 7
  %v3783 = vsub.s32 0, %v3782
  %v3784 = vrot.slane %v3779, %v3783
  %3786 = vmatprep.subr.mxu0 0.0
  %3787 = vmatpush1.msra.mxu0 %v3715
  %3788 = vmatprep.subr.mxu0 0.0
  %3789 = vmatpush1.msra.mxu0 %v3716
  %3790 = vmatprep.subr.mxu0 0.0
  %3791 = vmatpush1.msra.mxu0 %v3717
  %3792 = vmatprep.subr.mxu0 0.0
  %3793 = vmatpush1.msra.mxu0 %v3718
  %3794 = vmatprep.subr.mxu0 0.0
  %3795 = vmatpush1.msra.mxu0 %v3719
  %3796 = vmatprep.subr.mxu0 0.0
  %3797 = vmatpush1.msra.mxu0 %v3720
  %3798 = vmatprep.subr.mxu0 0.0
  %3799 = vmatpush1.msra.mxu0 %v3721
  %3800 = vmatprep.subr.mxu0 0.0
  %3801 = vmatpush1.msra.mxu0 %v3722
  %3802 = vmatprep.subr.mxu0 0.0
  %3803 = vmatpush1.msra.mxu0 %v3723
  %3804 = vmatprep.subr.mxu0 0.0
  %3805 = vmatpush1.msra.mxu0 %v3724
  %3806 = vmatprep.subr.mxu0 0.0
  %3807 = vmatpush1.msra.mxu0 %v3725
  %3808 = vmatprep.subr.mxu0 0.0
  %3809 = vmatpush1.msra.mxu0 %v3726
  %3810 = vmatprep.subr.mxu0 0.0
  %3811 = vmatpush1.msra.mxu0 %v3727
  %3812 = vmatprep.subr.mxu0 0.0
  %3813 = vmatpush1.msra.mxu0 %v3728
  %3814 = vmatprep.subr.mxu0 0.0
  %3815 = vmatpush1.msra.mxu0 %v3729
  %3816 = vmatprep.subr.mxu0 0.0
  %3817 = vmatpush1.msra.mxu0 %v3730
  %3818 = vmatprep.subr.mxu0 0.0
  %3819 = vmatpush1.msra.mxu0 %v3731
  %3820 = vmatprep.subr.mxu0 0.0
  %3821 = vmatpush1.msra.mxu0 %v3732
  %3822 = vmatprep.subr.mxu0 0.0
  %3823 = vmatpush1.msra.mxu0 %v3733
  %3824 = vmatprep.subr.mxu0 0.0
  %3825 = vmatpush1.msra.mxu0 %v3734
  %3826 = vmatprep.subr.mxu0 0.0
  %3827 = vmatpush1.msra.mxu0 %v3735
  %3828 = vmatprep.subr.mxu0 0.0
  %3829 = vmatpush1.msra.mxu0 %v3736
  %3830 = vmatprep.subr.mxu0 0.0
  %3831 = vmatpush1.msra.mxu0 %v3737
  %3832 = vmatprep.subr.mxu0 0.0
  %3833 = vmatpush1.msra.mxu0 %v3738
  %3834 = vmatprep.subr.mxu0 0.0
  %3835 = vmatpush1.msra.mxu0 %v3739
  %3836 = vmatprep.subr.mxu0 0.0
  %3837 = vmatpush1.msra.mxu0 %v3740
  %3838 = vmatprep.subr.mxu0 0.0
  %3839 = vmatpush1.msra.mxu0 %v3741
  %3840 = vmatprep.subr.mxu0 0.0
  %3841 = vmatpush1.msra.mxu0 %v3742
  %3842 = vmatprep.subr.mxu0 0.0
  %3843 = vmatpush1.msra.mxu0 %v3743
  %3844 = vmatprep.subr.mxu0 0.0
  %3845 = vmatpush1.msra.mxu0 %v3744
  %3846 = vmatprep.subr.mxu0 0.0
  %3847 = vmatpush1.msra.mxu0 %v3745
  %3848 = vmatprep.subr.mxu0 0.0
  %3849 = vmatpush1.msra.mxu0 %v3746
  %3850 = vmatprep.mubr.f32.mxu0 %v3643
  %3851 = vmatmul.mubr.f32.gmra.mrb[0].mxu0 %v3619
  %v3852 = vpop.f32.mrb[0].mxu0
  %v3853 = vadd.f32 %v3784, %v3852
  %v3854 = vpop.f32.mrb[0].mxu0
  %3855 = vmatprep.mubr.f32.mxu0 %v3644
  %3856 = vmatmul.mubr.f32.gmra.mrb[0].mxu0 %v3620
  %v3857 = vpop.f32.mrb[0].mxu0
  %v3858 = vadd.f32 %v3784, %v3857
  %v3859 = vpop.f32.mrb[0].mxu0
  %3860 = vmatprep.mubr.f32.mxu0 %v3645
  %3861 = vmatmul.mubr.f32.gmra.mrb[0].mxu0 %v3621
  %v3862 = vpop.f32.mrb[0].mxu0
  %v3863 = vadd.f32 %v3784, %v3862
  %v3864 = vpop.f32.mrb[0].mxu0
  %3865 = vmatprep.mubr.f32.mxu0 %v3646
  %3866 = vmatmul.mubr.f32.gmra.mrb[0].mxu0 %v3622
  %v3867 = vpop.f32.mrb[0].mxu0
  %v3868 = vadd.f32 %v3784, %v3867
  %v3869 = vpop.f32.mrb[0].mxu0
  %3870 = vmatprep.mubr.f32.mxu0 %v3647
  %3871 = vmatmul.mubr.f32.gmra.mrb[0].mxu0 %v3623
  %v3872 = vpop.f32.mrb[0].mxu0
  %v3873 = vadd.f32 %v3784, %v3872
  %v3874 = vpop.f32.mrb[0].mxu0
  %3875 = vmatprep.mubr.f32.mxu0 %v3648
  %3876 = vmatmul.mubr.f32.gmra.mrb[0].mxu0 %v3624
  %v3877 = vpop.f32.mrb[0].mxu0
  %v3878 = vadd.f32 %v3784, %v3877
  %v3879 = vpop.f32.mrb[0].mxu0
  %3880 = vmatprep.mubr.f32.mxu0 %v3649
  %3881 = vmatmul.mubr.f32.gmra.mrb[0].mxu0 %v3625
  %v3882 = vpop.f32.mrb[0].mxu0
  %v3883 = vadd.f32 %v3784, %v3882
  %v3884 = vpop.f32.mrb[0].mxu0
  %3885 = vmatprep.mubr.f32.mxu0 %v3650
  %3886 = vmatmul.mubr.f32.gmra.mrb[0].mxu0 %v3626
  %v3887 = vpop.f32.mrb[0].mxu0
  %v3888 = vadd.f32 %v3784, %v3887
  %v3889 = vpop.f32.mrb[0].mxu0
  %3890 = vmatprep.mubr.f32.mxu0 %v3651
  %3891 = vmatmul.mubr.f32.gmra.mrb[0].mxu0 %v3627
  %v3892 = vpop.f32.mrb[0].mxu0
  %v3893 = vadd.f32 %v3784, %v3892
  %v3894 = vpop.f32.mrb[0].mxu0
  %3895 = vmatprep.mubr.f32.mxu0 %v3652
  %3896 = vmatmul.mubr.f32.gmra.mrb[0].mxu0 %v3628
  %v3897 = vpop.f32.mrb[0].mxu0
  %v3898 = vadd.f32 %v3784, %v3897
  %v3899 = vpop.f32.mrb[0].mxu0
  %3900 = vmatprep.mubr.f32.mxu0 %v3653
  %3901 = vmatmul.mubr.f32.gmra.mrb[0].mxu0 %v3629
  %v3902 = vpop.f32.mrb[0].mxu0
  %v3903 = vadd.f32 %v3784, %v3902
  %v3904 = vpop.f32.mrb[0].mxu0
  %3905 = vmatprep.mubr.f32.mxu0 %v3654
  %3906 = vmatmul.mubr.f32.gmra.mrb[0].mxu0 %v3630
  %v3907 = vpop.f32.mrb[0].mxu0
  %v3908 = vadd.f32 %v3784, %v3907
  %v3909 = vpop.f32.mrb[0].mxu0
  %3910 = vmatprep.mubr.f32.mxu0 %v3655
  %3911 = vmatmul.mubr.f32.gmra.mrb[0].mxu0 %v3631
  %v3912 = vpop.f32.mrb[0].mxu0
  %v3913 = vadd.f32 %v3784, %v3912
  %v3914 = vpop.f32.mrb[0].mxu0
  %3915 = vmatprep.mubr.f32.mxu0 %v3656
  %3916 = vmatmul.mubr.f32.gmra.mrb[0].mxu0 %v3632
  %v3917 = vpop.f32.mrb[0].mxu0
  %v3918 = vadd.f32 %v3784, %v3917
  %v3919 = vpop.f32.mrb[0].mxu0
  %3920 = vmatprep.mubr.f32.mxu0 %v3657
  %3921 = vmatmul.mubr.f32.gmra.mrb[0].mxu0 %v3633
  %v3922 = vpop.f32.mrb[0].mxu0
  %v3923 = vadd.f32 %v3784, %v3922
  %v3924 = vpop.f32.mrb[0].mxu0
  %3925 = vmatprep.mubr.f32.mxu0 %v3658
  %3926 = vmatmul.mubr.f32.gmra.mrb[0].mxu0 %v3634
  %v3927 = vpop.f32.mrb[0].mxu0
  %v3928 = vadd.f32 %v3784, %v3927
  %v3929 = vpop.f32.mrb[0].mxu0
  %3930 = vmatprep.mubr.f32.mxu0 %v3659
  %3931 = vmatmul.mubr.f32.gmra.mrb[0].mxu0 %v3635
  %v3932 = vpop.f32.mrb[0].mxu0
  %v3933 = vadd.f32 %v3784, %v3932
  %v3934 = vpop.f32.mrb[0].mxu0
  %3935 = vmatprep.mubr.f32.mxu0 %v3660
  %3936 = vmatmul.mubr.f32.gmra.mrb[0].mxu0 %v3636
  %v3937 = vpop.f32.mrb[0].mxu0
  %v3938 = vadd.f32 %v3784, %v3937
  %v3939 = vpop.f32.mrb[0].mxu0
  %3940 = vmatprep.mubr.f32.mxu0 %v3661
  %3941 = vmatmul.mubr.f32.gmra.mrb[0].mxu0 %v3637
  %v3942 = vpop.f32.mrb[0].mxu0
  %v3943 = vadd.f32 %v3784, %v3942
  %v3944 = vpop.f32.mrb[0].mxu0
  %3945 = vmatprep.mubr.f32.mxu0 %v3662
  %3946 = vmatmul.mubr.f32.gmra.mrb[0].mxu0 %v3638
  %v3947 = vpop.f32.mrb[0].mxu0
  %v3948 = vadd.f32 %v3784, %v3947
  %v3949 = vpop.f32.mrb[0].mxu0
  %3950 = vmatprep.mubr.f32.mxu0 %v3663
  %3951 = vmatmul.mubr.f32.gmra.mrb[0].mxu0 %v3639
  %v3952 = vpop.f32.mrb[0].mxu0
  %v3953 = vadd.f32 %v3784, %v3952
  %v3954 = vpop.f32.mrb[0].mxu0
  %3955 = vmatprep.mubr.f32.mxu0 %v3664
  %3956 = vmatmul.mubr.f32.gmra.mrb[0].mxu0 %v3640
  %v3957 = vpop.f32.mrb[0].mxu0
  %v3958 = vadd.f32 %v3784, %v3957
  %v3959 = vpop.f32.mrb[0].mxu0
  %3960 = vmatprep.mubr.f32.mxu0 %v3665
  %3961 = vmatmul.mubr.f32.gmra.mrb[0].mxu0 %v3641
  %v3962 = vpop.f32.mrb[0].mxu0
  %v3963 = vadd.f32 %v3784, %v3962
  %v3964 = vpop.f32.mrb[0].mxu0
  %3965 = vmatprep.mubr.f32.mxu0 %v3666
  %3966 = vmatmul.mubr.f32.gmra.mrb[0].mxu0 %v3642
  %v3967 = vpop.f32.mrb[0].mxu0
  %v3968 = vadd.f32 %v3784, %v3967
  %v3969 = vpop.f32.mrb[0].mxu0
  %3970 = vdwg.mxu0
  %3971 = vmatprep.subr.mxu0 0.0
  %3972 = vmatpush1.msra.mxu0 %v3747
  %3973 = vmatprep.subr.mxu0 0.0
  %3974 = vmatpush1.msra.mxu0 %v3748
  %3975 = vmatprep.subr.mxu0 0.0
  %3976 = vmatpush1.msra.mxu0 %v3749
  %3977 = vmatprep.subr.mxu0 0.0
  %3978 = vmatpush1.msra.mxu0 %v3750
  %3979 = vmatprep.subr.mxu0 0.0
  %3980 = vmatpush1.msra.mxu0 %v3751
  %3981 = vmatprep.subr.mxu0 0.0
  %3982 = vmatpush1.msra.mxu0 %v3752
  %3983 = vmatprep.subr.mxu0 0.0
  %3984 = vmatpush1.msra.mxu0 %v3753
  %3985 = vmatprep.subr.mxu0 0.0
  %3986 = vmatpush1.msra.mxu0 %v3754
  %3987 = vmatprep.subr.mxu0 0.0
  %3988 = vmatpush1.msra.mxu0 %v3755
  %3989 = vmatprep.subr.mxu0 0.0
  %3990 = vmatpush1.msra.mxu0 %v3756
  %3991 = vmatprep.subr.mxu0 0.0
  %3992 = vmatpush1.msra.mxu0 %v3757
  %3993 = vmatprep.subr.mxu0 0.0
  %3994 = vmatpush1.msra.mxu0 %v3758
  %3995 = vmatprep.subr.mxu0 0.0
  %3996 = vmatpush1.msra.mxu0 %v3759
  %3997 = vmatprep.subr.mxu0 0.0
  %3998 = vmatpush1.msra.mxu0 %v3760
  %3999 = vmatprep.subr.mxu0 0.0
  %4000 = vmatpush1.msra.mxu0 %v3761
  %4001 = vmatprep.subr.mxu0 0.0
  %4002 = vmatpush1.msra.mxu0 %v3762
  %4003 = vmatprep.subr.mxu0 0.0
  %4004 = vmatpush1.msra.mxu0 %v3763
  %4005 = vmatprep.subr.mxu0 0.0
  %4006 = vmatpush1.msra.mxu0 %v3764
  %4007 = vmatprep.subr.mxu0 0.0
  %4008 = vmatpush1.msra.mxu0 %v3765
  %4009 = vmatprep.subr.mxu0 0.0
  %4010 = vmatpush1.msra.mxu0 %v3766
  %4011 = vmatprep.subr.mxu0 0.0
  %4012 = vmatpush1.msra.mxu0 %v3767
  %4013 = vmatprep.subr.mxu0 0.0
  %4014 = vmatpush1.msra.mxu0 %v3768
  %4015 = vmatprep.subr.mxu0 0.0
  %4016 = vmatpush1.msra.mxu0 %v3769
  %4017 = vmatprep.subr.mxu0 0.0
  %4018 = vmatpush1.msra.mxu0 %v3770
  %4019 = vmatprep.subr.mxu0 0.0
  %4020 = vmatpush1.msra.mxu0 %v3771
  %4021 = vmatprep.subr.mxu0 0.0
  %4022 = vmatpush1.msra.mxu0 %v3772
  %4023 = vmatprep.subr.mxu0 0.0
  %4024 = vmatpush1.msra.mxu0 %v3773
  %4025 = vmatprep.subr.mxu0 0.0
  %4026 = vmatpush1.msra.mxu0 %v3774
  %4027 = vmatprep.subr.mxu0 0.0
  %4028 = vmatpush1.msra.mxu0 %v3775
  %4029 = vmatprep.subr.mxu0 0.0
  %4030 = vmatpush1.msra.mxu0 %v3776
  %4031 = vmatprep.subr.mxu0 0.0
  %4032 = vmatpush1.msra.mxu0 %v3777
  %4033 = vmatprep.subr.mxu0 0.0
  %4034 = vmatpush1.msra.mxu0 %v3778
  %4035 = vmatprep.mubr.f32.mxu0 %v3691
  %4036 = vmatmul.mubr.f32.gmra.mrb[0].mxu0 %v3667
  %v4037 = vpop.f32.mrb[0].mxu0
  %v4038 = vadd.f32 %v3853, %v4037
  %v4039 = vpop.f32.mrb[0].mxu0
  %4040 = vmatprep.mubr.f32.mxu0 %v3692
  %4041 = vmatmul.mubr.f32.gmra.mrb[0].mxu0 %v3668
  %v4042 = vpop.f32.mrb[0].mxu0
  %v4043 = vadd.f32 %v3858, %v4042
  %v4044 = vpop.f32.mrb[0].mxu0
  %4045 = vmatprep.mubr.f32.mxu0 %v3693
  %4046 = vmatmul.mubr.f32.gmra.mrb[0].mxu0 %v3669
  %v4047 = vpop.f32.mrb[0].mxu0
  %v4048 = vadd.f32 %v3863, %v4047
  %v4049 = vpop.f32.mrb[0].mxu0
  %4050 = vmatprep.mubr.f32.mxu0 %v3694
  %4051 = vmatmul.mubr.f32.gmra.mrb[0].mxu0 %v3670
  %v4052 = vpop.f32.mrb[0].mxu0
  %v4053 = vadd.f32 %v3868, %v4052
  %v4054 = vpop.f32.mrb[0].mxu0
  %4055 = vmatprep.mubr.f32.mxu0 %v3695
  %4056 = vmatmul.mubr.f32.gmra.mrb[0].mxu0 %v3671
  %v4057 = vpop.f32.mrb[0].mxu0
  %v4058 = vadd.f32 %v3873, %v4057
  %v4059 = vpop.f32.mrb[0].mxu0
  %4060 = vmatprep.mubr.f32.mxu0 %v3696
  %4061 = vmatmul.mubr.f32.gmra.mrb[0].mxu0 %v3672
  %v4062 = vpop.f32.mrb[0].mxu0
  %v4063 = vadd.f32 %v3878, %v4062
  %v4064 = vpop.f32.mrb[0].mxu0
  %4065 = vmatprep.mubr.f32.mxu0 %v3697
  %4066 = vmatmul.mubr.f32.gmra.mrb[0].mxu0 %v3673
  %v4067 = vpop.f32.mrb[0].mxu0
  %v4068 = vadd.f32 %v3883, %v4067
  %v4069 = vpop.f32.mrb[0].mxu0
  %4070 = vmatprep.mubr.f32.mxu0 %v3698
  %4071 = vmatmul.mubr.f32.gmra.mrb[0].mxu0 %v3674
  %v4072 = vpop.f32.mrb[0].mxu0
  %v4073 = vadd.f32 %v3888, %v4072
  %v4074 = vpop.f32.mrb[0].mxu0
  %4075 = vmatprep.mubr.f32.mxu0 %v3699
  %4076 = vmatmul.mubr.f32.gmra.mrb[0].mxu0 %v3675
  %v4077 = vpop.f32.mrb[0].mxu0
  %v4078 = vadd.f32 %v3893, %v4077
  %v4079 = vpop.f32.mrb[0].mxu0
  %4080 = vmatprep.mubr.f32.mxu0 %v3700
  %4081 = vmatmul.mubr.f32.gmra.mrb[0].mxu0 %v3676
  %v4082 = vpop.f32.mrb[0].mxu0
  %v4083 = vadd.f32 %v3898, %v4082
  %v4084 = vpop.f32.mrb[0].mxu0
  %4085 = vmatprep.mubr.f32.mxu0 %v3701
  %4086 = vmatmul.mubr.f32.gmra.mrb[0].mxu0 %v3677
  %v4087 = vpop.f32.mrb[0].mxu0
  %v4088 = vadd.f32 %v3903, %v4087
  %v4089 = vpop.f32.mrb[0].mxu0
  %4090 = vmatprep.mubr.f32.mxu0 %v3702
  %4091 = vmatmul.mubr.f32.gmra.mrb[0].mxu0 %v3678
  %v4092 = vpop.f32.mrb[0].mxu0
  %v4093 = vadd.f32 %v3908, %v4092
  %v4094 = vpop.f32.mrb[0].mxu0
  %4095 = vmatprep.mubr.f32.mxu0 %v3703
  %4096 = vmatmul.mubr.f32.gmra.mrb[0].mxu0 %v3679
  %v4097 = vpop.f32.mrb[0].mxu0
  %v4098 = vadd.f32 %v3913, %v4097
  %v4099 = vpop.f32.mrb[0].mxu0
  %4100 = vmatprep.mubr.f32.mxu0 %v3704
  %4101 = vmatmul.mubr.f32.gmra.mrb[0].mxu0 %v3680
  %v4102 = vpop.f32.mrb[0].mxu0
  %v4103 = vadd.f32 %v3918, %v4102
  %v4104 = vpop.f32.mrb[0].mxu0
  %4105 = vmatprep.mubr.f32.mxu0 %v3705
  %4106 = vmatmul.mubr.f32.gmra.mrb[0].mxu0 %v3681
  %v4107 = vpop.f32.mrb[0].mxu0
  %v4108 = vadd.f32 %v3923, %v4107
  %v4109 = vpop.f32.mrb[0].mxu0
  %4110 = vmatprep.mubr.f32.mxu0 %v3706
  %4111 = vmatmul.mubr.f32.gmra.mrb[0].mxu0 %v3682
  %v4112 = vpop.f32.mrb[0].mxu0
  %v4113 = vadd.f32 %v3928, %v4112
  %v4114 = vpop.f32.mrb[0].mxu0
  %4115 = vmatprep.mubr.f32.mxu0 %v3707
  %4116 = vmatmul.mubr.f32.gmra.mrb[0].mxu0 %v3683
  %v4117 = vpop.f32.mrb[0].mxu0
  %v4118 = vadd.f32 %v3933, %v4117
  %v4119 = vpop.f32.mrb[0].mxu0
  %4120 = vmatprep.mubr.f32.mxu0 %v3708
  %4121 = vmatmul.mubr.f32.gmra.mrb[0].mxu0 %v3684
  %v4122 = vpop.f32.mrb[0].mxu0
  %v4123 = vadd.f32 %v3938, %v4122
  %v4124 = vpop.f32.mrb[0].mxu0
  %4125 = vmatprep.mubr.f32.mxu0 %v3709
  %4126 = vmatmul.mubr.f32.gmra.mrb[0].mxu0 %v3685
  %v4127 = vpop.f32.mrb[0].mxu0
  %v4128 = vadd.f32 %v3943, %v4127
  %v4129 = vpop.f32.mrb[0].mxu0
  %4130 = vmatprep.mubr.f32.mxu0 %v3710
  %4131 = vmatmul.mubr.f32.gmra.mrb[0].mxu0 %v3686
  %v4132 = vpop.f32.mrb[0].mxu0
  %v4133 = vadd.f32 %v3948, %v4132
  %v4134 = vpop.f32.mrb[0].mxu0
  %4135 = vmatprep.mubr.f32.mxu0 %v3711
  %4136 = vmatmul.mubr.f32.gmra.mrb[0].mxu0 %v3687
  %v4137 = vpop.f32.mrb[0].mxu0
  %v4138 = vadd.f32 %v3953, %v4137
  %v4139 = vpop.f32.mrb[0].mxu0
  %4140 = vmatprep.mubr.f32.mxu0 %v3712
  %4141 = vmatmul.mubr.f32.gmra.mrb[0].mxu0 %v3688
  %v4142 = vpop.f32.mrb[0].mxu0
  %v4143 = vadd.f32 %v3958, %v4142
  %v4144 = vpop.f32.mrb[0].mxu0
  %4145 = vmatprep.mubr.f32.mxu0 %v3713
  %4146 = vmatmul.mubr.f32.gmra.mrb[0].mxu0 %v3689
  %v4147 = vpop.f32.mrb[0].mxu0
  %v4148 = vadd.f32 %v3963, %v4147
  %v4149 = vpop.f32.mrb[0].mxu0
  %4150 = vmatprep.mubr.f32.mxu0 %v3714
  %4151 = vmatmul.mubr.f32.gmra.mrb[0].mxu0 %v3690
  %v4152 = vpop.f32.mrb[0].mxu0
  %v4153 = vadd.f32 %v3968, %v4152
  %v4154 = vpop.f32.mrb[0].mxu0
  %4155 = vdwg.mxu0
  %v4156 = vmax.f32 %v4038, 0.0
  %v4157 = vmax.f32 %v4043, 0.0
  %v4158 = vmax.f32 %v4048, 0.0
  %v4159 = vmax.f32 %v4053, 0.0
  %v4160 = vmax.f32 %v4058, 0.0
  %v4161 = vmax.f32 %v4063, 0.0
  %v4162 = vmax.f32 %v4068, 0.0
  %v4163 = vmax.f32 %v4073, 0.0
  %v4164 = vmax.f32 %v4078, 0.0
  %v4165 = vmax.f32 %v4083, 0.0
  %v4166 = vmax.f32 %v4088, 0.0
  %v4167 = vmax.f32 %v4093, 0.0
  %v4168 = vmax.f32 %v4098, 0.0
  %v4169 = vmax.f32 %v4103, 0.0
  %v4170 = vmax.f32 %v4108, 0.0
  %v4171 = vmax.f32 %v4113, 0.0
  %v4172 = vmax.f32 %v4118, 0.0
  %v4173 = vmax.f32 %v4123, 0.0
  %v4174 = vmax.f32 %v4128, 0.0
  %v4175 = vmax.f32 %v4133, 0.0
  %v4176 = vmax.f32 %v4138, 0.0
  %v4177 = vmax.f32 %v4143, 0.0
  %v4178 = vmax.f32 %v4148, 0.0
  %v4179 = vmax.f32 %v4153, 0.0
  %v4180 = vlaneseq
  %v4181 = vshrl.u32 %v4180, 7
  %v4182 = vadd.s32 %v4181, 8
  %v4183 = vadd.s32 %v4181, 16
  %vm4184 = vcmp.lt.s32.totalorder %v4181, 19
  %vm4185 = vcmp.lt.s32.totalorder %v4182, 19
  %vm4186 = vcmp.lt.s32.totalorder %v4183, 19
  %v4187 = vsel %vm4184, 1, 0
  %v4188 = vsel %vm4185, 1, 0
  %v4189 = vsel %vm4186, 1, 0
  %vm4190 = vcmp.eq.s32.totalorder %v4187, 1
  %vm4191 = vcmp.eq.s32.totalorder %v4188, 1
  %vm4192 = vcmp.eq.s32.totalorder %v4189, 1
  %v4193 = vsel %vm4190, %v4156, 0.0
  %v4194 = vsel %vm4191, %v4157, 0.0
  %v4195 = vsel %vm4192, %v4158, 0.0
  %v4196 = vsel %vm4190, %v4159, 0.0
  %v4197 = vsel %vm4191, %v4160, 0.0
  %v4198 = vsel %vm4192, %v4161, 0.0
  %v4199 = vsel %vm4190, %v4162, 0.0
  %v4200 = vsel %vm4191, %v4163, 0.0
  %v4201 = vsel %vm4192, %v4164, 0.0
  %v4202 = vsel %vm4190, %v4165, 0.0
  %v4203 = vsel %vm4191, %v4166, 0.0
  %v4204 = vsel %vm4192, %v4167, 0.0
  %v4205 = vsel %vm4190, %v4168, 0.0
  %v4206 = vsel %vm4191, %v4169, 0.0
  %v4207 = vsel %vm4192, %v4170, 0.0
  %v4208 = vsel %vm4190, %v4171, 0.0
  %v4209 = vsel %vm4191, %v4172, 0.0
  %v4210 = vsel %vm4192, %v4173, 0.0
  %v4211 = vsel %vm4190, %v4174, 0.0
  %v4212 = vsel %vm4191, %v4175, 0.0
  %v4213 = vsel %vm4192, %v4176, 0.0
  %v4214 = vsel %vm4190, %v4177, 0.0
  %v4215 = vsel %vm4191, %v4178, 0.0
  %v4216 = vsel %vm4192, %v4179, 0.0
  %v4217 = vsel %vm2040, %v4193, -inf
  %v4218 = vsel %vm2040, %v4194, -inf
  %v4219 = vmax.f32 %v4217, %v4218
  %v4220 = vsel %vm2040, %v4195, -inf
  %v4221 = vmax.f32 %v4219, %v4220
  %v4222 = vrot.slane %v4221, 4
  %v4223 = vmax.f32 %v4221, %v4222
  %v4224 = vrot.slane %v4223, 2
  %v4225 = vmax.f32 %v4223, %v4224
  %v4226 = vrot.slane %v4225, 1
  %v4227 = vmax.f32 %v4225, %v4226
  %v4228 = vsel %vm2040, %v4196, -inf
  %v4229 = vsel %vm2040, %v4197, -inf
  %v4230 = vmax.f32 %v4228, %v4229
  %v4231 = vsel %vm2040, %v4198, -inf
  %v4232 = vmax.f32 %v4230, %v4231
  %v4233 = vrot.slane %v4232, 4
  %v4234 = vmax.f32 %v4232, %v4233
  %v4235 = vrot.slane %v4234, 2
  %v4236 = vmax.f32 %v4234, %v4235
  %v4237 = vrot.slane %v4236, 1
  %v4238 = vmax.f32 %v4236, %v4237
  %v4239 = vsel %vm2040, %v4199, -inf
  %v4240 = vsel %vm2040, %v4200, -inf
  %v4241 = vmax.f32 %v4239, %v4240
  %v4242 = vsel %vm2040, %v4201, -inf
  %v4243 = vmax.f32 %v4241, %v4242
  %v4244 = vrot.slane %v4243, 4
  %v4245 = vmax.f32 %v4243, %v4244
  %v4246 = vrot.slane %v4245, 2
  %v4247 = vmax.f32 %v4245, %v4246
  %v4248 = vrot.slane %v4247, 1
  %v4249 = vmax.f32 %v4247, %v4248
  %v4250 = vsel %vm2040, %v4202, -inf
  %v4251 = vsel %vm2040, %v4203, -inf
  %v4252 = vmax.f32 %v4250, %v4251
  %v4253 = vsel %vm2040, %v4204, -inf
  %v4254 = vmax.f32 %v4252, %v4253
  %v4255 = vrot.slane %v4254, 4
  %v4256 = vmax.f32 %v4254, %v4255
  %v4257 = vrot.slane %v4256, 2
  %v4258 = vmax.f32 %v4256, %v4257
  %v4259 = vrot.slane %v4258, 1
  %v4260 = vmax.f32 %v4258, %v4259
  %v4261 = vsel %vm2040, %v4205, -inf
  %v4262 = vsel %vm2040, %v4206, -inf
  %v4263 = vmax.f32 %v4261, %v4262
  %v4264 = vsel %vm2040, %v4207, -inf
  %v4265 = vmax.f32 %v4263, %v4264
  %v4266 = vrot.slane %v4265, 4
  %v4267 = vmax.f32 %v4265, %v4266
  %v4268 = vrot.slane %v4267, 2
  %v4269 = vmax.f32 %v4267, %v4268
  %v4270 = vrot.slane %v4269, 1
  %v4271 = vmax.f32 %v4269, %v4270
  %v4272 = vsel %vm2040, %v4208, -inf
  %v4273 = vsel %vm2040, %v4209, -inf
  %v4274 = vmax.f32 %v4272, %v4273
  %v4275 = vsel %vm2040, %v4210, -inf
  %v4276 = vmax.f32 %v4274, %v4275
  %v4277 = vrot.slane %v4276, 4
  %v4278 = vmax.f32 %v4276, %v4277
  %v4279 = vrot.slane %v4278, 2
  %v4280 = vmax.f32 %v4278, %v4279
  %v4281 = vrot.slane %v4280, 1
  %v4282 = vmax.f32 %v4280, %v4281
  %v4283 = vsel %vm2040, %v4211, -inf
  %v4284 = vsel %vm2040, %v4212, -inf
  %v4285 = vmax.f32 %v4283, %v4284
  %v4286 = vsel %vm2040, %v4213, -inf
  %v4287 = vmax.f32 %v4285, %v4286
  %v4288 = vrot.slane %v4287, 4
  %v4289 = vmax.f32 %v4287, %v4288
  %v4290 = vrot.slane %v4289, 2
  %v4291 = vmax.f32 %v4289, %v4290
  %v4292 = vrot.slane %v4291, 1
  %v4293 = vmax.f32 %v4291, %v4292
  %v4294 = vsel %vm2040, %v4214, -inf
  %v4295 = vsel %vm2040, %v4215, -inf
  %v4296 = vmax.f32 %v4294, %v4295
  %v4297 = vsel %vm2040, %v4216, -inf
  %v4298 = vmax.f32 %v4296, %v4297
  %v4299 = vrot.slane %v4298, 4
  %v4300 = vmax.f32 %v4298, %v4299
  %v4301 = vrot.slane %v4300, 2
  %v4302 = vmax.f32 %v4300, %v4301
  %v4303 = vrot.slane %v4302, 1
  %v4304 = vmax.f32 %v4302, %v4303
  %v4305 = vld [vmem:[%s7] sm:$0xff]
  %v4306 = vld [vmem:[%s7 + $0x8] sm:$0xff]
  %v4307 = vld [vmem:[%s7 + $0x10] sm:$0xff]
  %v4308 = vld [vmem:[%s7 + $0x18] sm:$0xff]
  %v4309 = vld [vmem:[%s7 + $0x20] sm:$0xff]
  %v4310 = vld [vmem:[%s7 + $0x28] sm:$0xff]
  %v4311 = vld [vmem:[%s7 + $0x30] sm:$0xff]
  %v4312 = vld [vmem:[%s7 + $0x38] sm:$0xff]
  %v4313 = vld [vmem:[%s8] sm:$0x3]
  %v4315 = vlaneseq
  %v4316 = vshrl.u32 %v4315, 7
  %v4317 = vsub.s32 0, %v4316
  %v4318 = vrot.slane %v4313, %v4317
  %v4319 = vlaneseq
  %v4320 = vshrl.u32 %v4319, 7
  %v4321 = vsub.s32 1, %v4320
  %v4322 = vrot.slane %v4313, %v4321
  %vm4333 = vcmask 1041409
  %v4334 = vsel %vm4333, %v4238, %v4227
  %vm4335 = vcmask 1042434
  %v4336 = vsel %vm4335, %v4249, %v4334
  %vm4337 = vcmask 1043459
  %v4338 = vsel %vm4337, %v4260, %v4336
  %vm4339 = vcmask 1044484
  %v4340 = vsel %vm4339, %v4271, %v4338
  %vm4341 = vcmask 1045509
  %v4342 = vsel %vm4341, %v4282, %v4340
  %vm4343 = vcmask 1046534
  %v4344 = vsel %vm4343, %v4293, %v4342
  %vm4345 = vcmask 1047559
  %v4346 = vsel %vm4345, %v4304, %v4344
  %v4347 = vsel %vm2040, %v4346, 0
  %4349 = vmatprep.subr.mxu0 %v4306
  %4350 = vmatpush1.msra.mxu0 %v4305
  %4351 = vmatprep.subr.mxu0 %v4308
  %4352 = vmatpush1.msra.mxu0 %v4307
  %4353 = vmatprep.subr.mxu0 %v4310
  %4354 = vmatpush1.msra.mxu0 %v4309
  %4355 = vmatprep.subr.mxu0 %v4312
  %4356 = vmatpush1.msra.mxu0 %v4311
  %4357 = vmatprep.subr.mxu0 0.0
  %4358 = vmatpush1.msra.mxu0 0.0
  %4359 = vmatprep.subr.mxu0 0.0
  %4360 = vmatpush1.msra.mxu0 0.0
  %4361 = vmatprep.subr.mxu0 0.0
  %4362 = vmatpush1.msra.mxu0 0.0
  %4363 = vmatprep.subr.mxu0 0.0
  %4364 = vmatpush1.msra.mxu0 0.0
  %4365 = vmatprep.subr.mxu0 0.0
  %4366 = vmatpush1.msra.mxu0 0.0
  %4367 = vmatprep.subr.mxu0 0.0
  %4368 = vmatpush1.msra.mxu0 0.0
  %4369 = vmatprep.subr.mxu0 0.0
  %4370 = vmatpush1.msra.mxu0 0.0
  %4371 = vmatprep.subr.mxu0 0.0
  %4372 = vmatpush1.msra.mxu0 0.0
  %4373 = vmatprep.subr.mxu0 0.0
  %4374 = vmatpush1.msra.mxu0 0.0
  %4375 = vmatprep.subr.mxu0 0.0
  %4376 = vmatpush1.msra.mxu0 0.0
  %4377 = vmatprep.subr.mxu0 0.0
  %4378 = vmatpush1.msra.mxu0 0.0
  %4379 = vmatprep.subr.mxu0 0.0
  %4380 = vmatpush1.msra.mxu0 0.0
  %4381 = vmatprep.subr.mxu0 0.0
  %4382 = vmatpush1.msra.mxu0 0.0
  %4383 = vmatprep.subr.mxu0 0.0
  %4384 = vmatpush1.msra.mxu0 0.0
  %4385 = vmatprep.subr.mxu0 0.0
  %4386 = vmatpush1.msra.mxu0 0.0
  %4387 = vmatprep.subr.mxu0 0.0
  %4388 = vmatpush1.msra.mxu0 0.0
  %4389 = vmatprep.subr.mxu0 0.0
  %4390 = vmatpush1.msra.mxu0 0.0
  %4391 = vmatprep.subr.mxu0 0.0
  %4392 = vmatpush1.msra.mxu0 0.0
  %4393 = vmatprep.subr.mxu0 0.0
  %4394 = vmatpush1.msra.mxu0 0.0
  %4395 = vmatprep.subr.mxu0 0.0
  %4396 = vmatpush1.msra.mxu0 0.0
  %4397 = vmatprep.subr.mxu0 0.0
  %4398 = vmatpush1.msra.mxu0 0.0
  %4399 = vmatprep.subr.mxu0 0.0
  %4400 = vmatpush1.msra.mxu0 0.0
  %4401 = vmatprep.subr.mxu0 0.0
  %4402 = vmatpush1.msra.mxu0 0.0
  %4403 = vmatprep.subr.mxu0 0.0
  %4404 = vmatpush1.msra.mxu0 0.0
  %4405 = vmatprep.subr.mxu0 0.0
  %4406 = vmatpush1.msra.mxu0 0.0
  %4407 = vmatprep.subr.mxu0 0.0
  %4408 = vmatpush1.msra.mxu0 0.0
  %4409 = vmatprep.subr.mxu0 0.0
  %4410 = vmatpush1.msra.mxu0 0.0
  %4411 = vmatprep.subr.mxu0 0.0
  %4412 = vmatpush1.msra.mxu0 0.0
  %4413 = vmatprep.mubr.f32.mxu0 0.0
  %4414 = vmatmul.mubr.f32.gmra.mrb[0].mxu0 %v4347
  %v4415 = vpop.f32.mrb[0].mxu0
  %v4416 = vadd.f32 %v4318, %v4415
  %v4417 = vpop.f32.mrb[0].mxu0
  %v4418 = vadd.f32 %v4322, %v4417
  %4419 = vdwg.mxu0
  %v4420 = vmax.f32 %v4416, 0.0
  %v4421 = vmax.f32 %v4418, 0.0
  %v4422 = vld [vmem:[%s9] sm:$0xff]
  %v4423 = vld [vmem:[%s9 + $0x8] sm:$0xff]
  %v4424 = vld [vmem:[%s9 + $0x10] sm:$0xff]
  %v4425 = vld [vmem:[%s9 + $0x18] sm:$0xff]
  %v4426 = vld [vmem:[%s9 + $0x20] sm:$0xff]
  %v4427 = vld [vmem:[%s9 + $0x28] sm:$0xff]
  %v4428 = vld [vmem:[%s9 + $0x30] sm:$0xff]
  %v4429 = vld [vmem:[%s9 + $0x38] sm:$0xff]
  %v4430 = vld [vmem:[%s9 + $0x40] sm:$0xff]
  %v4431 = vld [vmem:[%s9 + $0x48] sm:$0xff]
  %v4432 = vld [vmem:[%s9 + $0x50] sm:$0xff]
  %v4433 = vld [vmem:[%s9 + $0x58] sm:$0xff]
  %v4434 = vld [vmem:[%s9 + $0x60] sm:$0xff]
  %v4435 = vld [vmem:[%s9 + $0x68] sm:$0xff]
  %v4436 = vld [vmem:[%s9 + $0x70] sm:$0xff]
  %v4437 = vld [vmem:[%s9 + $0x78] sm:$0xff]
  %v4438 = vld [vmem:[%s9 + $0x80] sm:$0xff]
  %v4439 = vld [vmem:[%s9 + $0x88] sm:$0xff]
  %v4440 = vld [vmem:[%s9 + $0x90] sm:$0xff]
  %v4441 = vld [vmem:[%s9 + $0x98] sm:$0xff]
  %v4442 = vld [vmem:[%s9 + $0xa0] sm:$0xff]
  %v4443 = vld [vmem:[%s9 + $0xa8] sm:$0xff]
  %v4444 = vld [vmem:[%s9 + $0xb0] sm:$0xff]
  %v4445 = vld [vmem:[%s9 + $0xb8] sm:$0xff]
  %v4446 = vld [vmem:[%s9 + $0xc0] sm:$0xff]
  %v4447 = vld [vmem:[%s9 + $0xc8] sm:$0xff]
  %v4448 = vld [vmem:[%s9 + $0xd0] sm:$0xff]
  %v4449 = vld [vmem:[%s9 + $0xd8] sm:$0xff]
  %v4450 = vld [vmem:[%s9 + $0xe0] sm:$0xff]
  %v4451 = vld [vmem:[%s9 + $0xe8] sm:$0xff]
  %v4452 = vld [vmem:[%s9 + $0xf0] sm:$0xff]
  %v4453 = vld [vmem:[%s9 + $0xf8] sm:$0xff]
  %v4454 = vld [vmem:[%s10] sm:$0x1]
  %v4456 = vlaneseq
  %v4457 = vshrl.u32 %v4456, 7
  %v4458 = vsub.s32 0, %v4457
  %v4459 = vrot.slane %v4454, %v4458
  %4461 = vmatprep.subr.mxu0 0.0
  %4462 = vmatpush1.msra.mxu0 %v4422
  %4463 = vmatprep.subr.mxu0 0.0
  %4464 = vmatpush1.msra.mxu0 %v4423
  %4465 = vmatprep.subr.mxu0 0.0
  %4466 = vmatpush1.msra.mxu0 %v4424
  %4467 = vmatprep.subr.mxu0 0.0
  %4468 = vmatpush1.msra.mxu0 %v4425
  %4469 = vmatprep.subr.mxu0 0.0
  %4470 = vmatpush1.msra.mxu0 %v4426
  %4471 = vmatprep.subr.mxu0 0.0
  %4472 = vmatpush1.msra.mxu0 %v4427
  %4473 = vmatprep.subr.mxu0 0.0
  %4474 = vmatpush1.msra.mxu0 %v4428
  %4475 = vmatprep.subr.mxu0 0.0
  %4476 = vmatpush1.msra.mxu0 %v4429
  %4477 = vmatprep.subr.mxu0 0.0
  %4478 = vmatpush1.msra.mxu0 %v4430
  %4479 = vmatprep.subr.mxu0 0.0
  %4480 = vmatpush1.msra.mxu0 %v4431
  %4481 = vmatprep.subr.mxu0 0.0
  %4482 = vmatpush1.msra.mxu0 %v4432
  %4483 = vmatprep.subr.mxu0 0.0
  %4484 = vmatpush1.msra.mxu0 %v4433
  %4485 = vmatprep.subr.mxu0 0.0
  %4486 = vmatpush1.msra.mxu0 %v4434
  %4487 = vmatprep.subr.mxu0 0.0
  %4488 = vmatpush1.msra.mxu0 %v4435
  %4489 = vmatprep.subr.mxu0 0.0
  %4490 = vmatpush1.msra.mxu0 %v4436
  %4491 = vmatprep.subr.mxu0 0.0
  %4492 = vmatpush1.msra.mxu0 %v4437
  %4493 = vmatprep.subr.mxu0 0.0
  %4494 = vmatpush1.msra.mxu0 %v4438
  %4495 = vmatprep.subr.mxu0 0.0
  %4496 = vmatpush1.msra.mxu0 %v4439
  %4497 = vmatprep.subr.mxu0 0.0
  %4498 = vmatpush1.msra.mxu0 %v4440
  %4499 = vmatprep.subr.mxu0 0.0
  %4500 = vmatpush1.msra.mxu0 %v4441
  %4501 = vmatprep.subr.mxu0 0.0
  %4502 = vmatpush1.msra.mxu0 %v4442
  %4503 = vmatprep.subr.mxu0 0.0
  %4504 = vmatpush1.msra.mxu0 %v4443
  %4505 = vmatprep.subr.mxu0 0.0
  %4506 = vmatpush1.msra.mxu0 %v4444
  %4507 = vmatprep.subr.mxu0 0.0
  %4508 = vmatpush1.msra.mxu0 %v4445
  %4509 = vmatprep.subr.mxu0 0.0
  %4510 = vmatpush1.msra.mxu0 %v4446
  %4511 = vmatprep.subr.mxu0 0.0
  %4512 = vmatpush1.msra.mxu0 %v4447
  %4513 = vmatprep.subr.mxu0 0.0
  %4514 = vmatpush1.msra.mxu0 %v4448
  %4515 = vmatprep.subr.mxu0 0.0
  %4516 = vmatpush1.msra.mxu0 %v4449
  %4517 = vmatprep.subr.mxu0 0.0
  %4518 = vmatpush1.msra.mxu0 %v4450
  %4519 = vmatprep.subr.mxu0 0.0
  %4520 = vmatpush1.msra.mxu0 %v4451
  %4521 = vmatprep.subr.mxu0 0.0
  %4522 = vmatpush1.msra.mxu0 %v4452
  %4523 = vmatprep.subr.mxu0 0.0
  %4524 = vmatpush1.msra.mxu0 %v4453
  %4525 = vmatprep.mubr.f32.mxu0 %v4421
  %4526 = vmatmul.mubr.f32.gmra.mrb[0].mxu0 %v4420
  %v4527 = vpop.f32.mrb[0].mxu0
  %v4528 = vadd.f32 %v4459, %v4527
  %v4529 = vpop.f32.mrb[0].mxu0
  %4530 = vdwg.mxu0
  %v4531 = vmax.f32 %v4528, 0.0
  %v4532 = vld [vmem:[%s11] sm:$0xff]
  %v4533 = vld [vmem:[%s11 + $0x8] sm:$0xff]
  %v4534 = vld [vmem:[%s11 + $0x10] sm:$0xff]
  %v4535 = vld [vmem:[%s11 + $0x18] sm:$0xff]
  %v4536 = vld [vmem:[%s11 + $0x20] sm:$0xff]
  %v4537 = vld [vmem:[%s11 + $0x28] sm:$0xff]
  %v4538 = vld [vmem:[%s11 + $0x30] sm:$0xff]
  %v4539 = vld [vmem:[%s11 + $0x38] sm:$0xff]
  %v4540 = vld [vmem:[%s11 + $0x40] sm:$0xff]
  %v4541 = vld [vmem:[%s11 + $0x48] sm:$0xff]
  %v4542 = vld [vmem:[%s11 + $0x50] sm:$0xff]
  %v4543 = vld [vmem:[%s11 + $0x58] sm:$0xff]
  %v4544 = vld [vmem:[%s11 + $0x60] sm:$0xff]
  %v4545 = vld [vmem:[%s11 + $0x68] sm:$0xff]
  %v4546 = vld [vmem:[%s11 + $0x70] sm:$0xff]
  %v4547 = vld [vmem:[%s11 + $0x78] sm:$0xff]
  %v4548 = vld [vmem:[%s12] sm:$0x1]
  %v4550 = vlaneseq
  %v4551 = vshrl.u32 %v4550, 7
  %v4552 = vsub.s32 0, %v4551
  %v4553 = vrot.slane %v4548, %v4552
  %4555 = vmatprep.subr.mxu0 0.0
  %4556 = vmatpush1.msra.mxu0 %v4532
  %4557 = vmatprep.subr.mxu0 0.0
  %4558 = vmatpush1.msra.mxu0 %v4533
  %4559 = vmatprep.subr.mxu0 0.0
  %4560 = vmatpush1.msra.mxu0 %v4534
  %4561 = vmatprep.subr.mxu0 0.0
  %4562 = vmatpush1.msra.mxu0 %v4535
  %4563 = vmatprep.subr.mxu0 0.0
  %4564 = vmatpush1.msra.mxu0 %v4536
  %4565 = vmatprep.subr.mxu0 0.0
  %4566 = vmatpush1.msra.mxu0 %v4537
  %4567 = vmatprep.subr.mxu0 0.0
  %4568 = vmatpush1.msra.mxu0 %v4538
  %4569 = vmatprep.subr.mxu0 0.0
  %4570 = vmatpush1.msra.mxu0 %v4539
  %4571 = vmatprep.subr.mxu0 0.0
  %4572 = vmatpush1.msra.mxu0 %v4540
  %4573 = vmatprep.subr.mxu0 0.0
  %4574 = vmatpush1.msra.mxu0 %v4541
  %4575 = vmatprep.subr.mxu0 0.0
  %4576 = vmatpush1.msra.mxu0 %v4542
  %4577 = vmatprep.subr.mxu0 0.0
  %4578 = vmatpush1.msra.mxu0 %v4543
  %4579 = vmatprep.subr.mxu0 0.0
  %4580 = vmatpush1.msra.mxu0 %v4544
  %4581 = vmatprep.subr.mxu0 0.0
  %4582 = vmatpush1.msra.mxu0 %v4545
  %4583 = vmatprep.subr.mxu0 0.0
  %4584 = vmatpush1.msra.mxu0 %v4546
  %4585 = vmatprep.subr.mxu0 0.0
  %4586 = vmatpush1.msra.mxu0 %v4547
  %4587 = vmatprep.subr.mxu0 0.0
  %4588 = vmatpush1.msra.mxu0 0.0
  %4589 = vmatprep.subr.mxu0 0.0
  %4590 = vmatpush1.msra.mxu0 0.0
  %4591 = vmatprep.subr.mxu0 0.0
  %4592 = vmatpush1.msra.mxu0 0.0
  %4593 = vmatprep.subr.mxu0 0.0
  %4594 = vmatpush1.msra.mxu0 0.0
  %4595 = vmatprep.subr.mxu0 0.0
  %4596 = vmatpush1.msra.mxu0 0.0
  %4597 = vmatprep.subr.mxu0 0.0
  %4598 = vmatpush1.msra.mxu0 0.0
  %4599 = vmatprep.subr.mxu0 0.0
  %4600 = vmatpush1.msra.mxu0 0.0
  %4601 = vmatprep.subr.mxu0 0.0
  %4602 = vmatpush1.msra.mxu0 0.0
  %4603 = vmatprep.subr.mxu0 0.0
  %4604 = vmatpush1.msra.mxu0 0.0
  %4605 = vmatprep.subr.mxu0 0.0
  %4606 = vmatpush1.msra.mxu0 0.0
  %4607 = vmatprep.subr.mxu0 0.0
  %4608 = vmatpush1.msra.mxu0 0.0
  %4609 = vmatprep.subr.mxu0 0.0
  %4610 = vmatpush1.msra.mxu0 0.0
  %4611 = vmatprep.subr.mxu0 0.0
  %4612 = vmatpush1.msra.mxu0 0.0
  %4613 = vmatprep.subr.mxu0 0.0
  %4614 = vmatpush1.msra.mxu0 0.0
  %4615 = vmatprep.subr.mxu0 0.0
  %4616 = vmatpush1.msra.mxu0 0.0
  %4617 = vmatprep.subr.mxu0 0.0
  %4618 = vmatpush1.msra.mxu0 0.0
  %4619 = vmatprep.mubr.f32.mxu0 0.0
  %4620 = vmatmul.mubr.f32.gmra.mrb[0].mxu0 %v4531
  %v4621 = vpop.f32.mrb[0].mxu0
  %v4622 = vadd.f32 %v4553, %v4621
  %v4623 = vpop.f32.mrb[0].mxu0
  %4624 = vdwg.mxu0
  %4625 = vst [vmem:[%s13] sm:$0xff] %v4622
  // Predicated region
  $region54: #{simclr_forward.1} parent=0 // pred_check
    _
  $region55: #{simclr_forward.1} parent=0 // pred_check_branch
    %4627 = sbr.rel (0) target = $region57
  $region56: #{simclr_forward.1} parent=0 // pred_region
    _
  $region57: #{simclr_forward.1} parent=0 // pred_fallthru
    _
  // Predicated region
  $region58: #{simclr_forward.1} parent=0 // pred_check
    _
  $region59: #{simclr_forward.1} parent=0 // pred_check_branch
    %4629 = sbr.rel (0) target = $region61
  $region60: #{simclr_forward.1} parent=0 // pred_region
    _
  $region61: #{simclr_forward.1} parent=0 // pred_fallthru
    _

</llo_original>
